<compile_context>
chip_gen: v6e
topology: v6e:2x2x1
jax: 0.10.0
libtpu: 0.0.40
codegen_flags: <defaults>
</compile_context>

<pallas_src>
import jax
import jax.numpy as jnp
import numpy as np
from jax.experimental import pallas as pl
from jax.experimental.pallas import tpu as pltpu

THRESH = 0.5
EPS = 1e-5


def _round_up(x, m):
    return ((x + m - 1) // m) * m


# ----------------------------- fused Pallas kernel ---------------------------

def _preact_block_kernel_factory(H, W, Cin, Cout, stride, has_sc_conv):
    s = stride
    Hout, Wout = H // s, W // s
    HWo = Hout * Wout
    use_phases = s > 1                      # stride-2 input arrives phase-split
    Wp2 = _round_up(W + 2, 8)               # padded-input scratch width
    Wop2 = _round_up(Wout + 2, 8)           # padded-conv1-out scratch width

    def kernel(*refs):
        f32 = jnp.float32
        # refs = [*inputs, out, *scratch]
        src_ref = refs[0]                   # (4,Hout+1,Wph,Cin) phases, or (H,W,Cin)
        w1_ref, b1_ref, w2_ref, b2_ref = refs[1:5]
        idx = 5
        if has_sc_conv:
            wsc_ref, bsc_ref = refs[idx], refs[idx + 1]
            idx += 2
        o_ref = refs[idx]
        idx += 1
        if not use_phases:
            xp_ref = refs[idx]
            idx += 1
        y1p_ref = refs[idx]

        # ---- stride 1: zero-pad input into VMEM scratch (halo strips only) --
        if not use_phases:
            xp_ref[0:1, :, :] = jnp.zeros((1, Wp2, Cin), f32)
            xp_ref[H + 1:H + 2, :, :] = jnp.zeros((1, Wp2, Cin), f32)
            xp_ref[:, 0:1, :] = jnp.zeros((H + 2, 1, Cin), f32)
            xp_ref[:, W + 1:W + 2, :] = jnp.zeros((H + 2, 1, Cin), f32)
            xp_ref[1:H + 1, 1:W + 1, :] = src_ref[...]

        def conv1_tap(dh, dw):
            if use_phases:
                # ph[2a+b, k, l, :] == xpad[2k+a, 2l+b, :]
                p = 2 * (dh % 2) + (dw % 2)
                da, db = dh // 2, dw // 2
                t = src_ref[p, da:da + Hout, db:db + Wout, :]
            else:
                t = xp_ref[dh:dh + Hout, dw:dw + Wout, :]
            return t.reshape(HWo, Cin)

        # ---- conv1 (3x3, stride s) + folded bn1: 9 accumulated MXU dots -----
        acc1 = None
        for k in range(9):
            dh, dw = divmod(k, 3)
            wk = w1_ref[k]                                     # (Cin, Cout)
            d = jnp.dot(conv1_tap(dh, dw).astype(wk.dtype), wk,
                        preferred_element_type=f32)
            acc1 = d if acc1 is None else acc1 + d
        # TODO(synk): ReLU stands in for the user-supplied spiking neuron.
        y1 = jnp.maximum(acc1 + b1_ref[...], 0.0)              # (HWo, Cout)

        # ---- shortcut: 1x1 conv(stride s) + folded bn, or identity ----------
        if has_sc_conv:
            if use_phases:
                pix = src_ref[3, 0:Hout, 0:Wout, :].reshape(HWo, Cin)  # x[2i,2j]
            else:
                pix = src_ref[...].reshape(HWo, Cin)
            wsc = wsc_ref[...]
            sc = jnp.dot(pix.astype(wsc.dtype), wsc,
                         preferred_element_type=f32) + bsc_ref[...]
        else:
            sc = src_ref[...].reshape(HWo, Cin)                # stride 1, Cin==Cout

        # ---- conv2 (3x3, stride 1) + folded bn2 + relu2 ----------------------
        y1p_ref[0:1, :, :] = jnp.zeros((1, Wop2, Cout), f32)
        y1p_ref[Hout + 1:Hout + 2, :, :] = jnp.zeros((1, Wop2, Cout), f32)
        y1p_ref[:, 0:1, :] = jnp.zeros((Hout + 2, 1, Cout), f32)
        y1p_ref[:, Wout + 1:Wout + 2, :] = jnp.zeros((Hout + 2, 1, Cout), f32)
        y1p_ref[1:Hout + 1, 1:Wout + 1, :] = y1.reshape(Hout, Wout, Cout)

        acc2 = None
        for k in range(9):
            dh, dw = divmod(k, 3)
            wk = w2_ref[k]                                     # (Cout, Cout)
            tap = y1p_ref[dh:dh + Hout, dw:dw + Wout, :].reshape(HWo, Cout)
            d = jnp.dot(tap.astype(wk.dtype), wk, preferred_element_type=f32)
            acc2 = d if acc2 is None else acc2 + d
        y2 = jnp.maximum(acc2 + b2_ref[...], 0.0)              # (HWo, Cout)

        # ---- residual add; NHWC-flat store (channels on lanes, no transpose)
        o_ref[...] = y2 + sc

    return kernel


# ----------------------------- wrapper ----------------------------------------

def _fold_bn_into_conv(w_oihw, b, bn, compute_dtype):
    """Fold inference-mode BN (applied after the conv) into conv weight/bias.

    Returns weights as (kh*kw, cin, cout) for per-tap MXU dots and bias (1, cout).
    """
    gamma, beta, mean, var = bn
    scale = gamma / jnp.sqrt(var + EPS)
    shift = beta - mean * scale
    cout, cin, kh, kw = w_oihw.shape
    wf = jnp.transpose(w_oihw, (2, 3, 1, 0)).reshape(kh * kw, cin, cout)
    wf = wf * scale[None, None, :]
    bf = (b * scale + shift).reshape(1, cout)
    return wf.astype(compute_dtype), bf.astype(jnp.float32)


def preact_block_forward(x_nchw, p, stride, in_channels, out_channels,
                         compute_dtype=jnp.float32):
    """Pallas-backed PreActBlock forward.  (N, Cin, H, W) -> (N, Cout, H/s, W/s)."""
    N, Cin, H, W = x_nchw.shape
    assert Cin == in_channels
    assert stride in (1, 2), "PreActBlock uses stride 1 or 2"
    assert H % stride == 0 and W % stride == 0
    Cout = out_channels
    s = stride
    Hout, Wout = H // s, W // s
    HWo = Hout * Wout
    has_sc_conv = (s != 1) or (in_channels != out_channels)

    # Module boundary is NCHW; kernel works channels-last (channels on lanes).
    x = jnp.transpose(x_nchw, (0, 2, 3, 1)).astype(jnp.float32)       # (N,H,W,Cin)

    w1f, b1f = _fold_bn_into_conv(p["w1_oihw"], p["b1"], p["bn1"], compute_dtype)
    w2f, b2f = _fold_bn_into_conv(p["w2_oihw"], p["b2"], p["bn2"], compute_dtype)

    if s > 1:
        # Phase-split the zero-padded input (layout plumbing only) so every
        # stride-2 tap inside the kernel is a plain static ref slice:
        #   ph[n, 2a+b, k, l, c] == xpad[n, 2k+a, 2l+b, c]
        Wph = _round_up(Wout + 1, 8)
        xpad = jnp.pad(x, ((0, 0), (1, 1), (1, 1), (0, 0)))
        ph = xpad.reshape(N, Hout + 1, 2, Wout + 1, 2, Cin)
        ph = jnp.transpose(ph, (0, 2, 4, 1, 3, 5)).reshape(
            N, 4, Hout + 1, Wout + 1, Cin)
        ph = jnp.pad(ph, ((0, 0), (0, 0), (0, 0), (0, Wph - (Wout + 1)), (0, 0)))
        src = ph
        src_spec = pl.BlockSpec((None, 4, Hout + 1, Wph, Cin),
                                lambda n: (n, 0, 0, 0, 0))
    else:
        src = x
        src_spec = pl.BlockSpec((None, H, W, Cin), lambda n: (n, 0, 0, 0))

    args = [src, w1f, b1f, w2f, b2f]
    in_specs = [
        src_spec,
        pl.BlockSpec((9, Cin, Cout), lambda n: (0, 0, 0)),
        pl.BlockSpec((1, Cout), lambda n: (0, 0)),
        pl.BlockSpec((9, Cout, Cout), lambda n: (0, 0, 0)),
        pl.BlockSpec((1, Cout), lambda n: (0, 0)),
    ]
    if has_sc_conv:
        wscf, bscf = _fold_bn_into_conv(p["wsc_oihw"], p["bsc"], p["bnsc"],
                                        compute_dtype)
        args += [wscf.reshape(Cin, Cout), bscf]
        in_specs += [pl.BlockSpec((Cin, Cout), lambda n: (0, 0)),
                     pl.BlockSpec((1, Cout), lambda n: (0, 0))]

    scratch = []
    if s == 1:
        scratch.append(pltpu.VMEM((H + 2, _round_up(W + 2, 8), Cin), jnp.float32))
    scratch.append(pltpu.VMEM((Hout + 2, _round_up(Wout + 2, 8), Cout), jnp.float32))

    kernel = _preact_block_kernel_factory(H, W, Cin, Cout, s, has_sc_conv)
    out = pl.pallas_call(
        kernel,
        out_shape=jax.ShapeDtypeStruct((N, HWo, Cout), jnp.float32),
        grid=(N,),
        in_specs=in_specs,
        out_specs=pl.BlockSpec((None, HWo, Cout), lambda n: (n, 0, 0)),
        scratch_shapes=scratch,
        compiler_params=pltpu.CompilerParams(
            dimension_semantics=("parallel",),
            vmem_limit_bytes=48 * 1024 * 1024),
    )(*args)

    # NHWC-flat kernel output -> NCHW module output (wrapper-side plumbing).
    return jnp.transpose(out.reshape(N, Hout, Wout, Cout), (0, 3, 1, 2))


# ----------------------------- plain-JAX reference ----------------------------

def _ref_conv_nchw(x, w, b, stride, pad):
    y = jax.lax.conv_general_dilated(
        x, w, window_strides=(stride, stride),
        padding=((pad, pad), (pad, pad)),
        dimension_numbers=("NCHW", "OIHW", "NCHW"))
    return y + b[None, :, None, None]


def _ref_bn_nchw(x, gamma, beta, mean, var):
    g = gamma[None, :, None, None]
    bt = beta[None, :, None, None]
    m = mean[None, :, None, None]
    v = var[None, :, None, None]
    return (x - m) / jnp.sqrt(v + EPS) * g + bt


def ref_forward(x, p, stride, in_channels, out_channels):
    out = _ref_conv_nchw(x, p["w1_oihw"], p["b1"], stride, 1)
    out = jnp.maximum(_ref_bn_nchw(out, *p["bn1"]), 0.0)
    out = _ref_conv_nchw(out, p["w2_oihw"], p["b2"], 1, 1)
    out = jnp.maximum(_ref_bn_nchw(out, *p["bn2"]), 0.0)
    if stride != 1 or in_channels != out_channels:
        sc = _ref_bn_nchw(_ref_conv_nchw(x, p["wsc_oihw"], p["bsc"], stride, 0),
                          *p["bnsc"])
    else:
        sc = x
    return out + sc


# ----------------------------- main --------------------------------------------

if __name__ == "__main__":
    def run_case(in_channels, out_channels, stride, key):
        N, H, W = 2, 16, 16
        ks = jax.random.split(key, 8)
        w1 = jax.random.normal(ks[0], (out_channels, in_channels, 3, 3), jnp.float32) * 0.1
        b1 = jax.random.normal(ks[1], (out_channels,), jnp.float32) * 0.1
        w2 = jax.random.normal(ks[2], (out_channels, out_channels, 3, 3), jnp.float32) * 0.1
        b2 = jax.random.normal(ks[3], (out_channels,), jnp.float32) * 0.1
        wsc = jax.random.normal(ks[4], (out_channels, in_channels, 1, 1), jnp.float32) * 0.1
        bsc = jax.random.normal(ks[5], (out_channels,), jnp.float32) * 0.1
        x = jax.random.normal(ks[6], (N, in_channels, H, W), jnp.float32)

        ones = jnp.ones((out_channels,), jnp.float32)
        zeros = jnp.zeros((out_channels,), jnp.float32)

        good = True
        # (a) faithful module init (bn2 gamma = 0 -> conv2 branch vanishes),
        # (b) non-degenerate bn2 to exercise the conv2 path numerically.
        for bn2_gamma in (0.0, THRESH):
            p = dict(w1_oihw=w1, b1=b1, w2_oihw=w2, b2=b2, wsc_oihw=wsc, bsc=bsc,
                     bn1=(THRESH * ones, zeros, zeros, ones),
                     bn2=(bn2_gamma * ones, zeros, zeros, ones),
                     bnsc=(THRESH * ones, zeros, zeros, ones))
            out = jax.block_until_ready(
                preact_block_forward(x, p, stride, in_channels, out_channels))
            ref = jax.block_until_ready(
                ref_forward(x, p, stride, in_channels, out_channels))
            good = good and bool(np.allclose(np.asarray(out), np.asarray(ref),
                                             rtol=1e-4, atol=1e-4))
            good = good and (out.shape == (N, out_channels, H // stride, W // stride))
        return good

    key = jax.random.PRNGKey(0)
    k1, k2 = jax.random.split(key)
    ok = True
    ok = ok and run_case(4, 8, 2, k1)   # projection shortcut (1x1 conv + BN), stride 2
    ok = ok and run_case(8, 8, 1, k2)   # identity shortcut, stride 1

    print("KERNEL_OK" if ok else "KERNEL_MISMATCH")
</pallas_src>

<mosaic_0001>
module attributes {stable_mosaic.version = 11 : i64} {
  func.func @kernel(%arg0: i32, %arg1: memref<1x4x9x16x4xf32, #tpu.memory_space<vmem>>, %arg2: memref<9x4x8xf32, #tpu.memory_space<vmem>>, %arg3: memref<1x8xf32, #tpu.memory_space<vmem>>, %arg4: memref<9x8x8xf32, #tpu.memory_space<vmem>>, %arg5: memref<1x8xf32, #tpu.memory_space<vmem>>, %arg6: memref<4x8xf32, #tpu.memory_space<vmem>>, %arg7: memref<1x8xf32, #tpu.memory_space<vmem>>, %arg8: memref<1x64x8xf32, #tpu.memory_space<vmem>>, %arg9: memref<10x16x8xf32, #tpu.memory_space<vmem>>) attributes {dimension_semantics = [#tpu.dimension_semantics<parallel>], iteration_bounds = array<i64: 2>, scalar_prefetch = 0 : i64, scratch_operands = 1 : i64, tpu.core_type = #tpu.core_type<tc>, window_params = [{transform_indices = @transform_0, window_bounds = array<i64: 1, 4, 9, 16, 4>}, {pipeline_mode = #tpu.pipeline_mode<synchronous>, transform_indices = @transform_1, window_bounds = array<i64: 9, 4, 8>}, {pipeline_mode = #tpu.pipeline_mode<synchronous>, transform_indices = @transform_2, window_bounds = array<i64: 1, 8>}, {pipeline_mode = #tpu.pipeline_mode<synchronous>, transform_indices = @transform_3, window_bounds = array<i64: 9, 8, 8>}, {pipeline_mode = #tpu.pipeline_mode<synchronous>, transform_indices = @transform_4, window_bounds = array<i64: 1, 8>}, {pipeline_mode = #tpu.pipeline_mode<synchronous>, transform_indices = @transform_5, window_bounds = array<i64: 4, 8>}, {pipeline_mode = #tpu.pipeline_mode<synchronous>, transform_indices = @transform_6, window_bounds = array<i64: 1, 8>}, {transform_indices = @transform_7, window_bounds = array<i64: 1, 64, 8>}]} {
    %c0 = arith.constant 0 : index
    %c0_0 = arith.constant 0 : index
    %c0_1 = arith.constant 0 : index
    %0 = vector.load %arg2[%c0, %c0_0, %c0_1] : memref<9x4x8xf32, #tpu.memory_space<vmem>>, vector<1x4x8xf32>
    %1 = vector.shape_cast %0 : vector<1x4x8xf32> to vector<4x8xf32>
    %c0_2 = arith.constant 0 : index
    %c0_3 = arith.constant 0 : index
    %c0_4 = arith.constant 0 : index
    %c0_5 = arith.constant 0 : index
    %c0_6 = arith.constant 0 : index
    %2 = vector.load %arg1[%c0_2, %c0_3, %c0_4, %c0_5, %c0_6] : memref<1x4x9x16x4xf32, #tpu.memory_space<vmem>>, vector<1x1x8x8x4xf32>
    %3 = vector.shape_cast %2 : vector<1x1x8x8x4xf32> to vector<8x8x4xf32>
    %4 = vector.shape_cast %3 : vector<8x8x4xf32> to vector<64x4xf32>
    %cst = arith.constant dense<0.000000e+00> : vector<64x8xf32>
    %5 = tpu.matmul %4, %1, %cst {dimension_numbers = #tpu.dot_dimension_numbers<[1], [0], [0], [1], [0, 0, 1, 1], [], []>} : vector<64x4xf32>, vector<4x8xf32>, vector<64x8xf32> -> vector<64x8xf32>
    %c1 = arith.constant 1 : index
    %c0_7 = arith.constant 0 : index
    %c0_8 = arith.constant 0 : index
    %6 = vector.load %arg2[%c1, %c0_7, %c0_8] : memref<9x4x8xf32, #tpu.memory_space<vmem>>, vector<1x4x8xf32>
    %7 = vector.shape_cast %6 : vector<1x4x8xf32> to vector<4x8xf32>
    %c0_9 = arith.constant 0 : index
    %c1_10 = arith.constant 1 : index
    %c0_11 = arith.constant 0 : index
    %c0_12 = arith.constant 0 : index
    %c0_13 = arith.constant 0 : index
    %8 = vector.load %arg1[%c0_9, %c1_10, %c0_11, %c0_12, %c0_13] : memref<1x4x9x16x4xf32, #tpu.memory_space<vmem>>, vector<1x1x8x8x4xf32>
    %9 = vector.shape_cast %8 : vector<1x1x8x8x4xf32> to vector<8x8x4xf32>
    %10 = vector.shape_cast %9 : vector<8x8x4xf32> to vector<64x4xf32>
    %cst_14 = arith.constant dense<0.000000e+00> : vector<64x8xf32>
    %11 = tpu.matmul %10, %7, %cst_14 {dimension_numbers = #tpu.dot_dimension_numbers<[1], [0], [0], [1], [0, 0, 1, 1], [], []>} : vector<64x4xf32>, vector<4x8xf32>, vector<64x8xf32> -> vector<64x8xf32>
    %12 = arith.addf %5, %11 : vector<64x8xf32>
    %c2 = arith.constant 2 : index
    %c0_15 = arith.constant 0 : index
    %c0_16 = arith.constant 0 : index
    %13 = vector.load %arg2[%c2, %c0_15, %c0_16] : memref<9x4x8xf32, #tpu.memory_space<vmem>>, vector<1x4x8xf32>
    %14 = vector.shape_cast %13 : vector<1x4x8xf32> to vector<4x8xf32>
    %c0_17 = arith.constant 0 : index
    %c0_18 = arith.constant 0 : index
    %c0_19 = arith.constant 0 : index
    %c1_20 = arith.constant 1 : index
    %c0_21 = arith.constant 0 : index
    %15 = vector.load %arg1[%c0_17, %c0_18, %c0_19, %c1_20, %c0_21] : memref<1x4x9x16x4xf32, #tpu.memory_space<vmem>>, vector<1x1x8x8x4xf32>
    %16 = vector.shape_cast %15 : vector<1x1x8x8x4xf32> to vector<8x8x4xf32>
    %17 = vector.shape_cast %16 : vector<8x8x4xf32> to vector<64x4xf32>
    %cst_22 = arith.constant dense<0.000000e+00> : vector<64x8xf32>
    %18 = tpu.matmul %17, %14, %cst_22 {dimension_numbers = #tpu.dot_dimension_numbers<[1], [0], [0], [1], [0, 0, 1, 1], [], []>} : vector<64x4xf32>, vector<4x8xf32>, vector<64x8xf32> -> vector<64x8xf32>
    %19 = arith.addf %12, %18 : vector<64x8xf32>
    %c3 = arith.constant 3 : index
    %c0_23 = arith.constant 0 : index
    %c0_24 = arith.constant 0 : index
    %20 = vector.load %arg2[%c3, %c0_23, %c0_24] : memref<9x4x8xf32, #tpu.memory_space<vmem>>, vector<1x4x8xf32>
    %21 = vector.shape_cast %20 : vector<1x4x8xf32> to vector<4x8xf32>
    %c0_25 = arith.constant 0 : index
    %c2_26 = arith.constant 2 : index
    %c0_27 = arith.constant 0 : index
    %c0_28 = arith.constant 0 : index
    %c0_29 = arith.constant 0 : index
    %22 = vector.load %arg1[%c0_25, %c2_26, %c0_27, %c0_28, %c0_29] : memref<1x4x9x16x4xf32, #tpu.memory_space<vmem>>, vector<1x1x8x8x4xf32>
    %23 = vector.shape_cast %22 : vector<1x1x8x8x4xf32> to vector<8x8x4xf32>
    %24 = vector.shape_cast %23 : vector<8x8x4xf32> to vector<64x4xf32>
    %cst_30 = arith.constant dense<0.000000e+00> : vector<64x8xf32>
    %25 = tpu.matmul %24, %21, %cst_30 {dimension_numbers = #tpu.dot_dimension_numbers<[1], [0], [0], [1], [0, 0, 1, 1], [], []>} : vector<64x4xf32>, vector<4x8xf32>, vector<64x8xf32> -> vector<64x8xf32>
    %26 = arith.addf %19, %25 : vector<64x8xf32>
    %c4 = arith.constant 4 : index
    %c0_31 = arith.constant 0 : index
    %c0_32 = arith.constant 0 : index
    %27 = vector.load %arg2[%c4, %c0_31, %c0_32] : memref<9x4x8xf32, #tpu.memory_space<vmem>>, vector<1x4x8xf32>
    %28 = vector.shape_cast %27 : vector<1x4x8xf32> to vector<4x8xf32>
    %c0_33 = arith.constant 0 : index
    %c3_34 = arith.constant 3 : index
    %c0_35 = arith.constant 0 : index
    %c0_36 = arith.constant 0 : index
    %c0_37 = arith.constant 0 : index
    %29 = vector.load %arg1[%c0_33, %c3_34, %c0_35, %c0_36, %c0_37] : memref<1x4x9x16x4xf32, #tpu.memory_space<vmem>>, vector<1x1x8x8x4xf32>
    %30 = vector.shape_cast %29 : vector<1x1x8x8x4xf32> to vector<8x8x4xf32>
    %31 = vector.shape_cast %30 : vector<8x8x4xf32> to vector<64x4xf32>
    %cst_38 = arith.constant dense<0.000000e+00> : vector<64x8xf32>
    %32 = tpu.matmul %31, %28, %cst_38 {dimension_numbers = #tpu.dot_dimension_numbers<[1], [0], [0], [1], [0, 0, 1, 1], [], []>} : vector<64x4xf32>, vector<4x8xf32>, vector<64x8xf32> -> vector<64x8xf32>
    %33 = arith.addf %26, %32 : vector<64x8xf32>
    %c5 = arith.constant 5 : index
    %c0_39 = arith.constant 0 : index
    %c0_40 = arith.constant 0 : index
    %34 = vector.load %arg2[%c5, %c0_39, %c0_40] : memref<9x4x8xf32, #tpu.memory_space<vmem>>, vector<1x4x8xf32>
    %35 = vector.shape_cast %34 : vector<1x4x8xf32> to vector<4x8xf32>
    %c0_41 = arith.constant 0 : index
    %c2_42 = arith.constant 2 : index
    %c0_43 = arith.constant 0 : index
    %c1_44 = arith.constant 1 : index
    %c0_45 = arith.constant 0 : index
    %36 = vector.load %arg1[%c0_41, %c2_42, %c0_43, %c1_44, %c0_45] : memref<1x4x9x16x4xf32, #tpu.memory_space<vmem>>, vector<1x1x8x8x4xf32>
    %37 = vector.shape_cast %36 : vector<1x1x8x8x4xf32> to vector<8x8x4xf32>
    %38 = vector.shape_cast %37 : vector<8x8x4xf32> to vector<64x4xf32>
    %cst_46 = arith.constant dense<0.000000e+00> : vector<64x8xf32>
    %39 = tpu.matmul %38, %35, %cst_46 {dimension_numbers = #tpu.dot_dimension_numbers<[1], [0], [0], [1], [0, 0, 1, 1], [], []>} : vector<64x4xf32>, vector<4x8xf32>, vector<64x8xf32> -> vector<64x8xf32>
    %40 = arith.addf %33, %39 : vector<64x8xf32>
    %c6 = arith.constant 6 : index
    %c0_47 = arith.constant 0 : index
    %c0_48 = arith.constant 0 : index
    %41 = vector.load %arg2[%c6, %c0_47, %c0_48] : memref<9x4x8xf32, #tpu.memory_space<vmem>>, vector<1x4x8xf32>
    %42 = vector.shape_cast %41 : vector<1x4x8xf32> to vector<4x8xf32>
    %c0_49 = arith.constant 0 : index
    %c0_50 = arith.constant 0 : index
    %c1_51 = arith.constant 1 : index
    %c0_52 = arith.constant 0 : index
    %c0_53 = arith.constant 0 : index
    %43 = vector.load %arg1[%c0_49, %c0_50, %c1_51, %c0_52, %c0_53] : memref<1x4x9x16x4xf32, #tpu.memory_space<vmem>>, vector<1x1x8x8x4xf32>
    %44 = vector.shape_cast %43 : vector<1x1x8x8x4xf32> to vector<8x8x4xf32>
    %45 = vector.shape_cast %44 : vector<8x8x4xf32> to vector<64x4xf32>
    %cst_54 = arith.constant dense<0.000000e+00> : vector<64x8xf32>
    %46 = tpu.matmul %45, %42, %cst_54 {dimension_numbers = #tpu.dot_dimension_numbers<[1], [0], [0], [1], [0, 0, 1, 1], [], []>} : vector<64x4xf32>, vector<4x8xf32>, vector<64x8xf32> -> vector<64x8xf32>
    %47 = arith.addf %40, %46 : vector<64x8xf32>
    %c7 = arith.constant 7 : index
    %c0_55 = arith.constant 0 : index
    %c0_56 = arith.constant 0 : index
    %48 = vector.load %arg2[%c7, %c0_55, %c0_56] : memref<9x4x8xf32, #tpu.memory_space<vmem>>, vector<1x4x8xf32>
    %49 = vector.shape_cast %48 : vector<1x4x8xf32> to vector<4x8xf32>
    %c0_57 = arith.constant 0 : index
    %c1_58 = arith.constant 1 : index
    %c1_59 = arith.constant 1 : index
    %c0_60 = arith.constant 0 : index
    %c0_61 = arith.constant 0 : index
    %50 = vector.load %arg1[%c0_57, %c1_58, %c1_59, %c0_60, %c0_61] : memref<1x4x9x16x4xf32, #tpu.memory_space<vmem>>, vector<1x1x8x8x4xf32>
    %51 = vector.shape_cast %50 : vector<1x1x8x8x4xf32> to vector<8x8x4xf32>
    %52 = vector.shape_cast %51 : vector<8x8x4xf32> to vector<64x4xf32>
    %cst_62 = arith.constant dense<0.000000e+00> : vector<64x8xf32>
    %53 = tpu.matmul %52, %49, %cst_62 {dimension_numbers = #tpu.dot_dimension_numbers<[1], [0], [0], [1], [0, 0, 1, 1], [], []>} : vector<64x4xf32>, vector<4x8xf32>, vector<64x8xf32> -> vector<64x8xf32>
    %54 = arith.addf %47, %53 : vector<64x8xf32>
    %c8 = arith.constant 8 : index
    %c0_63 = arith.constant 0 : index
    %c0_64 = arith.constant 0 : index
    %55 = vector.load %arg2[%c8, %c0_63, %c0_64] : memref<9x4x8xf32, #tpu.memory_space<vmem>>, vector<1x4x8xf32>
    %56 = vector.shape_cast %55 : vector<1x4x8xf32> to vector<4x8xf32>
    %c0_65 = arith.constant 0 : index
    %c0_66 = arith.constant 0 : index
    %c1_67 = arith.constant 1 : index
    %c1_68 = arith.constant 1 : index
    %c0_69 = arith.constant 0 : index
    %57 = vector.load %arg1[%c0_65, %c0_66, %c1_67, %c1_68, %c0_69] : memref<1x4x9x16x4xf32, #tpu.memory_space<vmem>>, vector<1x1x8x8x4xf32>
    %58 = vector.shape_cast %57 : vector<1x1x8x8x4xf32> to vector<8x8x4xf32>
    %59 = vector.shape_cast %58 : vector<8x8x4xf32> to vector<64x4xf32>
    %cst_70 = arith.constant dense<0.000000e+00> : vector<64x8xf32>
    %60 = tpu.matmul %59, %56, %cst_70 {dimension_numbers = #tpu.dot_dimension_numbers<[1], [0], [0], [1], [0, 0, 1, 1], [], []>} : vector<64x4xf32>, vector<4x8xf32>, vector<64x8xf32> -> vector<64x8xf32>
    %61 = arith.addf %54, %60 : vector<64x8xf32>
    %c0_71 = arith.constant 0 : index
    %c0_72 = arith.constant 0 : index
    %62 = vector.load %arg3[%c0_71, %c0_72] : memref<1x8xf32, #tpu.memory_space<vmem>>, vector<1x8xf32>
    %63 = vector.broadcast %62 : vector<1x8xf32> to vector<64x8xf32>
    %64 = arith.addf %61, %63 : vector<64x8xf32>
    %cst_73 = arith.constant 0.000000e+00 : f32
    %65 = vector.broadcast %cst_73 : f32 to vector<64x8xf32>
    %66 = arith.maximumf %64, %65 : vector<64x8xf32>
    %c0_74 = arith.constant 0 : index
    %c3_75 = arith.constant 3 : index
    %c0_76 = arith.constant 0 : index
    %c0_77 = arith.constant 0 : index
    %c0_78 = arith.constant 0 : index
    %67 = vector.load %arg1[%c0_74, %c3_75, %c0_76, %c0_77, %c0_78] : memref<1x4x9x16x4xf32, #tpu.memory_space<vmem>>, vector<1x1x8x8x4xf32>
    %68 = vector.shape_cast %67 : vector<1x1x8x8x4xf32> to vector<8x8x4xf32>
    %69 = vector.shape_cast %68 : vector<8x8x4xf32> to vector<64x4xf32>
    %c0_79 = arith.constant 0 : index
    %c0_80 = arith.constant 0 : index
    %70 = vector.load %arg6[%c0_79, %c0_80] : memref<4x8xf32, #tpu.memory_space<vmem>>, vector<4x8xf32>
    %cst_81 = arith.constant dense<0.000000e+00> : vector<64x8xf32>
    %71 = tpu.matmul %69, %70, %cst_81 {dimension_numbers = #tpu.dot_dimension_numbers<[1], [0], [0], [1], [0, 0, 1, 1], [], []>} : vector<64x4xf32>, vector<4x8xf32>, vector<64x8xf32> -> vector<64x8xf32>
    %c0_82 = arith.constant 0 : index
    %c0_83 = arith.constant 0 : index
    %72 = vector.load %arg7[%c0_82, %c0_83] : memref<1x8xf32, #tpu.memory_space<vmem>>, vector<1x8xf32>
    %73 = vector.broadcast %72 : vector<1x8xf32> to vector<64x8xf32>
    %74 = arith.addf %71, %73 : vector<64x8xf32>
    %cst_84 = arith.constant 0.000000e+00 : f32
    %75 = vector.broadcast %cst_84 : f32 to vector<1x16x8xf32>
    %c0_85 = arith.constant 0 : index
    %c0_86 = arith.constant 0 : index
    %c0_87 = arith.constant 0 : index
    %76 = vector.load %arg9[%c0_85, %c0_86, %c0_87] : memref<10x16x8xf32, #tpu.memory_space<vmem>>, vector<1x16x8xf32>
    tpu.vector_store %arg9[%c0_85, %c0_86, %c0_87], %75 {strides = array<i32>} : memref<10x16x8xf32, #tpu.memory_space<vmem>>, vector<1x16x8xf32>,
    %cst_88 = arith.constant 0.000000e+00 : f32
    %77 = vector.broadcast %cst_88 : f32 to vector<1x16x8xf32>
    %c9 = arith.constant 9 : index
    %c0_89 = arith.constant 0 : index
    %c0_90 = arith.constant 0 : index
    %78 = vector.load %arg9[%c9, %c0_89, %c0_90] : memref<10x16x8xf32, #tpu.memory_space<vmem>>, vector<1x16x8xf32>
    tpu.vector_store %arg9[%c9, %c0_89, %c0_90], %77 {strides = array<i32>} : memref<10x16x8xf32, #tpu.memory_space<vmem>>, vector<1x16x8xf32>,
    %cst_91 = arith.constant 0.000000e+00 : f32
    %79 = vector.broadcast %cst_91 : f32 to vector<10x1x8xf32>
    %c0_92 = arith.constant 0 : index
    %c0_93 = arith.constant 0 : index
    %c0_94 = arith.constant 0 : index
    %80 = vector.load %arg9[%c0_92, %c0_93, %c0_94] : memref<10x16x8xf32, #tpu.memory_space<vmem>>, vector<10x1x8xf32>
    tpu.vector_store %arg9[%c0_92, %c0_93, %c0_94], %79 {strides = array<i32>} : memref<10x16x8xf32, #tpu.memory_space<vmem>>, vector<10x1x8xf32>,
    %cst_95 = arith.constant 0.000000e+00 : f32
    %81 = vector.broadcast %cst_95 : f32 to vector<10x1x8xf32>
    %c0_96 = arith.constant 0 : index
    %c9_97 = arith.constant 9 : index
    %c0_98 = arith.constant 0 : index
    %82 = vector.load %arg9[%c0_96, %c9_97, %c0_98] : memref<10x16x8xf32, #tpu.memory_space<vmem>>, vector<10x1x8xf32>
    tpu.vector_store %arg9[%c0_96, %c9_97, %c0_98], %81 {strides = array<i32>} : memref<10x16x8xf32, #tpu.memory_space<vmem>>, vector<10x1x8xf32>,
    %83 = vector.shape_cast %66 : vector<64x8xf32> to vector<8x8x8xf32>
    %c1_99 = arith.constant 1 : index
    %c1_100 = arith.constant 1 : index
    %c0_101 = arith.constant 0 : index
    %84 = vector.load %arg9[%c1_99, %c1_100, %c0_101] : memref<10x16x8xf32, #tpu.memory_space<vmem>>, vector<8x8x8xf32>
    tpu.vector_store %arg9[%c1_99, %c1_100, %c0_101], %83 {strides = array<i32>} : memref<10x16x8xf32, #tpu.memory_space<vmem>>, vector<8x8x8xf32>,
    %c0_102 = arith.constant 0 : index
    %c0_103 = arith.constant 0 : index
    %c0_104 = arith.constant 0 : index
    %85 = vector.load %arg4[%c0_102, %c0_103, %c0_104] : memref<9x8x8xf32, #tpu.memory_space<vmem>>, vector<1x8x8xf32>
    %86 = vector.shape_cast %85 : vector<1x8x8xf32> to vector<8x8xf32>
    %c0_105 = arith.constant 0 : index
    %c0_106 = arith.constant 0 : index
    %c0_107 = arith.constant 0 : index
    %87 = vector.load %arg9[%c0_105, %c0_106, %c0_107] : memref<10x16x8xf32, #tpu.memory_space<vmem>>, vector<8x8x8xf32>
    %88 = vector.shape_cast %87 : vector<8x8x8xf32> to vector<64x8xf32>
    %cst_108 = arith.constant dense<0.000000e+00> : vector<64x8xf32>
    %89 = tpu.matmul %88, %86, %cst_108 {dimension_numbers = #tpu.dot_dimension_numbers<[1], [0], [0], [1], [0, 0, 1, 1], [], []>} : vector<64x8xf32>, vector<8x8xf32>, vector<64x8xf32> -> vector<64x8xf32>
    %c1_109 = arith.constant 1 : index
    %c0_110 = arith.constant 0 : index
    %c0_111 = arith.constant 0 : index
    %90 = vector.load %arg4[%c1_109, %c0_110, %c0_111] : memref<9x8x8xf32, #tpu.memory_space<vmem>>, vector<1x8x8xf32>
    %91 = vector.shape_cast %90 : vector<1x8x8xf32> to vector<8x8xf32>
    %c0_112 = arith.constant 0 : index
    %c1_113 = arith.constant 1 : index
    %c0_114 = arith.constant 0 : index
    %92 = vector.load %arg9[%c0_112, %c1_113, %c0_114] : memref<10x16x8xf32, #tpu.memory_space<vmem>>, vector<8x8x8xf32>
    %93 = vector.shape_cast %92 : vector<8x8x8xf32> to vector<64x8xf32>
    %cst_115 = arith.constant dense<0.000000e+00> : vector<64x8xf32>
    %94 = tpu.matmul %93, %91, %cst_115 {dimension_numbers = #tpu.dot_dimension_numbers<[1], [0], [0], [1], [0, 0, 1, 1], [], []>} : vector<64x8xf32>, vector<8x8xf32>, vector<64x8xf32> -> vector<64x8xf32>
    %95 = arith.addf %89, %94 : vector<64x8xf32>
    %c2_116 = arith.constant 2 : index
    %c0_117 = arith.constant 0 : index
    %c0_118 = arith.constant 0 : index
    %96 = vector.load %arg4[%c2_116, %c0_117, %c0_118] : memref<9x8x8xf32, #tpu.memory_space<vmem>>, vector<1x8x8xf32>
    %97 = vector.shape_cast %96 : vector<1x8x8xf32> to vector<8x8xf32>
    %c0_119 = arith.constant 0 : index
    %c2_120 = arith.constant 2 : index
    %c0_121 = arith.constant 0 : index
    %98 = vector.load %arg9[%c0_119, %c2_120, %c0_121] : memref<10x16x8xf32, #tpu.memory_space<vmem>>, vector<8x8x8xf32>
    %99 = vector.shape_cast %98 : vector<8x8x8xf32> to vector<64x8xf32>
    %cst_122 = arith.constant dense<0.000000e+00> : vector<64x8xf32>
    %100 = tpu.matmul %99, %97, %cst_122 {dimension_numbers = #tpu.dot_dimension_numbers<[1], [0], [0], [1], [0, 0, 1, 1], [], []>} : vector<64x8xf32>, vector<8x8xf32>, vector<64x8xf32> -> vector<64x8xf32>
    %101 = arith.addf %95, %100 : vector<64x8xf32>
    %c3_123 = arith.constant 3 : index
    %c0_124 = arith.constant 0 : index
    %c0_125 = arith.constant 0 : index
    %102 = vector.load %arg4[%c3_123, %c0_124, %c0_125] : memref<9x8x8xf32, #tpu.memory_space<vmem>>, vector<1x8x8xf32>
    %103 = vector.shape_cast %102 : vector<1x8x8xf32> to vector<8x8xf32>
    %c1_126 = arith.constant 1 : index
    %c0_127 = arith.constant 0 : index
    %c0_128 = arith.constant 0 : index
    %104 = vector.load %arg9[%c1_126, %c0_127, %c0_128] : memref<10x16x8xf32, #tpu.memory_space<vmem>>, vector<8x8x8xf32>
    %105 = vector.shape_cast %104 : vector<8x8x8xf32> to vector<64x8xf32>
    %cst_129 = arith.constant dense<0.000000e+00> : vector<64x8xf32>
    %106 = tpu.matmul %105, %103, %cst_129 {dimension_numbers = #tpu.dot_dimension_numbers<[1], [0], [0], [1], [0, 0, 1, 1], [], []>} : vector<64x8xf32>, vector<8x8xf32>, vector<64x8xf32> -> vector<64x8xf32>
    %107 = arith.addf %101, %106 : vector<64x8xf32>
    %c4_130 = arith.constant 4 : index
    %c0_131 = arith.constant 0 : index
    %c0_132 = arith.constant 0 : index
    %108 = vector.load %arg4[%c4_130, %c0_131, %c0_132] : memref<9x8x8xf32, #tpu.memory_space<vmem>>, vector<1x8x8xf32>
    %109 = vector.shape_cast %108 : vector<1x8x8xf32> to vector<8x8xf32>
    %c1_133 = arith.constant 1 : index
    %c1_134 = arith.constant 1 : index
    %c0_135 = arith.constant 0 : index
    %110 = vector.load %arg9[%c1_133, %c1_134, %c0_135] : memref<10x16x8xf32, #tpu.memory_space<vmem>>, vector<8x8x8xf32>
    %111 = vector.shape_cast %110 : vector<8x8x8xf32> to vector<64x8xf32>
    %cst_136 = arith.constant dense<0.000000e+00> : vector<64x8xf32>
    %112 = tpu.matmul %111, %109, %cst_136 {dimension_numbers = #tpu.dot_dimension_numbers<[1], [0], [0], [1], [0, 0, 1, 1], [], []>} : vector<64x8xf32>, vector<8x8xf32>, vector<64x8xf32> -> vector<64x8xf32>
    %113 = arith.addf %107, %112 : vector<64x8xf32>
    %c5_137 = arith.constant 5 : index
    %c0_138 = arith.constant 0 : index
    %c0_139 = arith.constant 0 : index
    %114 = vector.load %arg4[%c5_137, %c0_138, %c0_139] : memref<9x8x8xf32, #tpu.memory_space<vmem>>, vector<1x8x8xf32>
    %115 = vector.shape_cast %114 : vector<1x8x8xf32> to vector<8x8xf32>
    %c1_140 = arith.constant 1 : index
    %c2_141 = arith.constant 2 : index
    %c0_142 = arith.constant 0 : index
    %116 = vector.load %arg9[%c1_140, %c2_141, %c0_142] : memref<10x16x8xf32, #tpu.memory_space<vmem>>, vector<8x8x8xf32>
    %117 = vector.shape_cast %116 : vector<8x8x8xf32> to vector<64x8xf32>
    %cst_143 = arith.constant dense<0.000000e+00> : vector<64x8xf32>
    %118 = tpu.matmul %117, %115, %cst_143 {dimension_numbers = #tpu.dot_dimension_numbers<[1], [0], [0], [1], [0, 0, 1, 1], [], []>} : vector<64x8xf32>, vector<8x8xf32>, vector<64x8xf32> -> vector<64x8xf32>
    %119 = arith.addf %113, %118 : vector<64x8xf32>
    %c6_144 = arith.constant 6 : index
    %c0_145 = arith.constant 0 : index
    %c0_146 = arith.constant 0 : index
    %120 = vector.load %arg4[%c6_144, %c0_145, %c0_146] : memref<9x8x8xf32, #tpu.memory_space<vmem>>, vector<1x8x8xf32>
    %121 = vector.shape_cast %120 : vector<1x8x8xf32> to vector<8x8xf32>
    %c2_147 = arith.constant 2 : index
    %c0_148 = arith.constant 0 : index
    %c0_149 = arith.constant 0 : index
    %122 = vector.load %arg9[%c2_147, %c0_148, %c0_149] : memref<10x16x8xf32, #tpu.memory_space<vmem>>, vector<8x8x8xf32>
    %123 = vector.shape_cast %122 : vector<8x8x8xf32> to vector<64x8xf32>
    %cst_150 = arith.constant dense<0.000000e+00> : vector<64x8xf32>
    %124 = tpu.matmul %123, %121, %cst_150 {dimension_numbers = #tpu.dot_dimension_numbers<[1], [0], [0], [1], [0, 0, 1, 1], [], []>} : vector<64x8xf32>, vector<8x8xf32>, vector<64x8xf32> -> vector<64x8xf32>
    %125 = arith.addf %119, %124 : vector<64x8xf32>
    %c7_151 = arith.constant 7 : index
    %c0_152 = arith.constant 0 : index
    %c0_153 = arith.constant 0 : index
    %126 = vector.load %arg4[%c7_151, %c0_152, %c0_153] : memref<9x8x8xf32, #tpu.memory_space<vmem>>, vector<1x8x8xf32>
    %127 = vector.shape_cast %126 : vector<1x8x8xf32> to vector<8x8xf32>
    %c2_154 = arith.constant 2 : index
    %c1_155 = arith.constant 1 : index
    %c0_156 = arith.constant 0 : index
    %128 = vector.load %arg9[%c2_154, %c1_155, %c0_156] : memref<10x16x8xf32, #tpu.memory_space<vmem>>, vector<8x8x8xf32>
    %129 = vector.shape_cast %128 : vector<8x8x8xf32> to vector<64x8xf32>
    %cst_157 = arith.constant dense<0.000000e+00> : vector<64x8xf32>
    %130 = tpu.matmul %129, %127, %cst_157 {dimension_numbers = #tpu.dot_dimension_numbers<[1], [0], [0], [1], [0, 0, 1, 1], [], []>} : vector<64x8xf32>, vector<8x8xf32>, vector<64x8xf32> -> vector<64x8xf32>
    %131 = arith.addf %125, %130 : vector<64x8xf32>
    %c8_158 = arith.constant 8 : index
    %c0_159 = arith.constant 0 : index
    %c0_160 = arith.constant 0 : index
    %132 = vector.load %arg4[%c8_158, %c0_159, %c0_160] : memref<9x8x8xf32, #tpu.memory_space<vmem>>, vector<1x8x8xf32>
    %133 = vector.shape_cast %132 : vector<1x8x8xf32> to vector<8x8xf32>
    %c2_161 = arith.constant 2 : index
    %c2_162 = arith.constant 2 : index
    %c0_163 = arith.constant 0 : index
    %134 = vector.load %arg9[%c2_161, %c2_162, %c0_163] : memref<10x16x8xf32, #tpu.memory_space<vmem>>, vector<8x8x8xf32>
    %135 = vector.shape_cast %134 : vector<8x8x8xf32> to vector<64x8xf32>
    %cst_164 = arith.constant dense<0.000000e+00> : vector<64x8xf32>
    %136 = tpu.matmul %135, %133, %cst_164 {dimension_numbers = #tpu.dot_dimension_numbers<[1], [0], [0], [1], [0, 0, 1, 1], [], []>} : vector<64x8xf32>, vector<8x8xf32>, vector<64x8xf32> -> vector<64x8xf32>
    %137 = arith.addf %131, %136 : vector<64x8xf32>
    %c0_165 = arith.constant 0 : index
    %c0_166 = arith.constant 0 : index
    %138 = vector.load %arg5[%c0_165, %c0_166] : memref<1x8xf32, #tpu.memory_space<vmem>>, vector<1x8xf32>
    %139 = vector.broadcast %138 : vector<1x8xf32> to vector<64x8xf32>
    %140 = arith.addf %137, %139 : vector<64x8xf32>
    %cst_167 = arith.constant 0.000000e+00 : f32
    %141 = vector.broadcast %cst_167 : f32 to vector<64x8xf32>
    %142 = arith.maximumf %140, %141 : vector<64x8xf32>
    %143 = arith.addf %142, %74 : vector<64x8xf32>
    %c0_168 = arith.constant 0 : index
    %c0_169 = arith.constant 0 : index
    %c0_170 = arith.constant 0 : index
    %144 = vector.load %arg8[%c0_168, %c0_169, %c0_170] : memref<1x64x8xf32, #tpu.memory_space<vmem>>, vector<1x64x8xf32>
    %145 = vector.shape_cast %144 : vector<1x64x8xf32> to vector<64x8xf32>
    %146 = vector.shape_cast %143 : vector<64x8xf32> to vector<1x64x8xf32>
    tpu.vector_store %arg8[%c0_168, %c0_169, %c0_170], %146 {strides = array<i32>} : memref<1x64x8xf32, #tpu.memory_space<vmem>>, vector<1x64x8xf32>,
    return
  }
  func.func @transform_0(%arg0: i32) -> (i32, i32, i32, i32, i32) {
    %c0_i32 = arith.constant 0 : i32
    %c0_i32_0 = arith.constant 0 : i32
    %c0_i32_1 = arith.constant 0 : i32
    %c0_i32_2 = arith.constant 0 : i32
    %c0_i32_3 = arith.constant 0 : i32
    return %arg0, %c0_i32, %c0_i32_0, %c0_i32_1, %c0_i32_2 : i32, i32, i32, i32, i32
  }
  func.func @transform_1(%arg0: i32) -> (i32, i32, i32) {
    %c0_i32 = arith.constant 0 : i32
    %c0_i32_0 = arith.constant 0 : i32
    %c0_i32_1 = arith.constant 0 : i32
    %c0_i32_2 = arith.constant 0 : i32
    return %c0_i32, %c0_i32_0, %c0_i32_1 : i32, i32, i32
  }
  func.func @transform_2(%arg0: i32) -> (i32, i32) {
    %c0_i32 = arith.constant 0 : i32
    %c0_i32_0 = arith.constant 0 : i32
    %c0_i32_1 = arith.constant 0 : i32
    return %c0_i32, %c0_i32_0 : i32, i32
  }
  func.func @transform_3(%arg0: i32) -> (i32, i32, i32) {
    %c0_i32 = arith.constant 0 : i32
    %c0_i32_0 = arith.constant 0 : i32
    %c0_i32_1 = arith.constant 0 : i32
    %c0_i32_2 = arith.constant 0 : i32
    return %c0_i32, %c0_i32_0, %c0_i32_1 : i32, i32, i32
  }
  func.func @transform_4(%arg0: i32) -> (i32, i32) {
    %c0_i32 = arith.constant 0 : i32
    %c0_i32_0 = arith.constant 0 : i32
    %c0_i32_1 = arith.constant 0 : i32
    return %c0_i32, %c0_i32_0 : i32, i32
  }
  func.func @transform_5(%arg0: i32) -> (i32, i32) {
    %c0_i32 = arith.constant 0 : i32
    %c0_i32_0 = arith.constant 0 : i32
    %c0_i32_1 = arith.constant 0 : i32
    return %c0_i32, %c0_i32_0 : i32, i32
  }
  func.func @transform_6(%arg0: i32) -> (i32, i32) {
    %c0_i32 = arith.constant 0 : i32
    %c0_i32_0 = arith.constant 0 : i32
    %c0_i32_1 = arith.constant 0 : i32
    return %c0_i32, %c0_i32_0 : i32, i32
  }
  func.func @transform_7(%arg0: i32) -> (i32, i32, i32) {
    %c0_i32 = arith.constant 0 : i32
    %c0_i32_0 = arith.constant 0 : i32
    %c0_i32_1 = arith.constant 0 : i32
    return %arg0, %c0_i32, %c0_i32_0 : i32, i32, i32
  }
}

</mosaic_0001>

<llo_original>
// kernel: tpu_custom_call.1
$region0: #{tpu_custom_call.1}
  #allocation0 [shape = 'u32[]', space=smem, size = 0x4, offset = 0x4, fixed_abs, tag = 'smem constant byte address 0x4 - core index']
  #allocation1 [shape = 'u32[144,128]{1,0:T(1,128)}', space=vmem, size = 0x12000, scoped, tag = 'internal scratch']
  #allocation2 [shape = 'f32[10,16,8]{2,1,0:T(8,128)}', space=vmem, size = 0x14000, scoped, tag = 'scratch operand']
  %s0 = inlined_call_operand.vmem [shape: f32[2,4,9,16,4], index: 0, kind: input, shape index: {}]
  %s1 = inlined_call_operand.vmem [shape: f32[9,4,8], index: 1, kind: input, shape index: {}]
  %s2 = inlined_call_operand.vmem [shape: f32[1,8], index: 2, kind: input, shape index: {}]
  %s3 = inlined_call_operand.vmem [shape: f32[9,8,8], index: 3, kind: input, shape index: {}]
  %s4 = inlined_call_operand.vmem [shape: f32[1,8], index: 4, kind: input, shape index: {}]
  %s5 = inlined_call_operand.vmem [shape: f32[4,8], index: 5, kind: input, shape index: {}]
  %s6 = inlined_call_operand.vmem [shape: f32[1,8], index: 6, kind: input, shape index: {}]
  %s7 = inlined_call_operand.vmem [shape: f32[2,64,8], index: 7, kind: output, shape index: {}]
  %s8 = sld [smem:[#allocation0]]
  $region61: #{tpu_custom_call.1} parent=0
    _
  %s10 = ssub.s32 1, %s8
  %s11 = scalar_select 0, %s10, %s8
  loop: start=0, step=1, limit=4
  $region2: #{tpu_custom_call.1} parent=0 // loop_pre_header
    _
  $region3: #{tpu_custom_call.1} parent=0 // loop_header
    %s13 = sphi 0, %s17
    %p14 = scmp.ge.s32.totalorder %s13, 4
    %s23 = sphi 0, %s25
    %s26 = sphi 0, %s23
    %s27 = sphi 0, %s26
    %s43 = sphi 0, %s27
    %s47 = sphi 0, %s47
    %s49 = sphi 0, %s47
    %s50 = sphi 0, %s49
    %s64 = sphi 0, %s50
    %s68 = sphi 0, %s68
    %s70 = sphi 0, %s68
    %s71 = sphi 0, %s70
    %s85 = sphi 0, %s71
    %s89 = sphi 0, %s89
    %s91 = sphi 0, %s89
    %s92 = sphi 0, %s91
    %s106 = sphi 0, %s92
    %s110 = sphi 0, %s110
    %s112 = sphi 0, %s110
    %s113 = sphi 0, %s112
    %s127 = sphi 0, %s113
    %s131 = sphi 0, %s131
    %s133 = sphi 0, %s131
    %s134 = sphi 0, %s133
    %s148 = sphi 0, %s134
    %s152 = sphi 0, %s152
    %s154 = sphi 0, %s152
    %s155 = sphi 0, %s154
    %s169 = sphi 0, %s155
    %s175 = sphi 0, %s177
    %s178 = sphi 0, %s175
    %s179 = sphi 0, %s178
    %s195 = sphi 0, %s179
  $region4: #{tpu_custom_call.1} parent=0 // loop_header_branch
    %16 = sbr.rel (%p14) target = $region8
  $region5: #{tpu_custom_call.1} parent=0 // loop_body
    %s18 = ssub.s32 %s13, 1
    %s19 = ssub.s32 %s13, 2
    %s20 = sadd.s32 %s13, 1
    %s21 = ssub.s32 %s13, %s20
    %p22 = scmp.eq.s32.totalorder %s21, 0
    %s24 = sadd.s32 %s23, 1
    %s25 = scalar_select %p22, %s23, %s24
    %p28 = pneg %p22
    %p29 = scmp.eq.s32.totalorder %s13, 1
    %p30 = por %p28, %p29
    %p31 = scmp.ne.s32.totalorder %s23, %s26
    %p32 = scmp.eq.s32.totalorder %s13, 0
    %p33 = por %p31, %p32
    %p34 = scmp.ne.s32.totalorder %s23, %s26
    %p35 = scmp.eq.s32.totalorder %s18, 1
    %p36 = por %p34, %p35
    %p37 = scmp.ne.s32.totalorder %s26, %s27
    %p38 = scmp.eq.s32.totalorder %s18, 0
    %p39 = por %p37, %p38
    %p40 = scmp.ne.s32.totalorder %s26, %s27
    %p41 = scmp.eq.s32.totalorder %s19, 1
    %p42 = por %p40, %p41
    %p44 = scmp.ne.s32.totalorder %s27, %s43
    %p45 = scmp.eq.s32.totalorder %s19, 0
    %p46 = por %p44, %p45
    %s48 = sadd.s32 %s47, 1
    %p51 = scmp.eq.s32.totalorder %s13, 1
    %p52 = scmp.ne.s32.totalorder %s47, %s49
    %p53 = scmp.eq.s32.totalorder %s13, 0
    %p54 = por %p52, %p53
    %p55 = scmp.ne.s32.totalorder %s47, %s49
    %p56 = scmp.eq.s32.totalorder %s18, 1
    %p57 = por %p55, %p56
    %p58 = scmp.ne.s32.totalorder %s49, %s50
    %p59 = scmp.eq.s32.totalorder %s18, 0
    %p60 = por %p58, %p59
    %p61 = scmp.ne.s32.totalorder %s49, %s50
    %p62 = scmp.eq.s32.totalorder %s19, 1
    %p63 = por %p61, %p62
    %p65 = scmp.ne.s32.totalorder %s50, %s64
    %p66 = scmp.eq.s32.totalorder %s19, 0
    %p67 = por %p65, %p66
    %s69 = sadd.s32 %s68, 1
    %p72 = scmp.eq.s32.totalorder %s13, 1
    %p73 = scmp.ne.s32.totalorder %s68, %s70
    %p74 = scmp.eq.s32.totalorder %s13, 0
    %p75 = por %p73, %p74
    %p76 = scmp.ne.s32.totalorder %s68, %s70
    %p77 = scmp.eq.s32.totalorder %s18, 1
    %p78 = por %p76, %p77
    %p79 = scmp.ne.s32.totalorder %s70, %s71
    %p80 = scmp.eq.s32.totalorder %s18, 0
    %p81 = por %p79, %p80
    %p82 = scmp.ne.s32.totalorder %s70, %s71
    %p83 = scmp.eq.s32.totalorder %s19, 1
    %p84 = por %p82, %p83
    %p86 = scmp.ne.s32.totalorder %s71, %s85
    %p87 = scmp.eq.s32.totalorder %s19, 0
    %p88 = por %p86, %p87
    %s90 = sadd.s32 %s89, 1
    %p93 = scmp.eq.s32.totalorder %s13, 1
    %p94 = scmp.ne.s32.totalorder %s89, %s91
    %p95 = scmp.eq.s32.totalorder %s13, 0
    %p96 = por %p94, %p95
    %p97 = scmp.ne.s32.totalorder %s89, %s91
    %p98 = scmp.eq.s32.totalorder %s18, 1
    %p99 = por %p97, %p98
    %p100 = scmp.ne.s32.totalorder %s91, %s92
    %p101 = scmp.eq.s32.totalorder %s18, 0
    %p102 = por %p100, %p101
    %p103 = scmp.ne.s32.totalorder %s91, %s92
    %p104 = scmp.eq.s32.totalorder %s19, 1
    %p105 = por %p103, %p104
    %p107 = scmp.ne.s32.totalorder %s92, %s106
    %p108 = scmp.eq.s32.totalorder %s19, 0
    %p109 = por %p107, %p108
    %s111 = sadd.s32 %s110, 1
    %p114 = scmp.eq.s32.totalorder %s13, 1
    %p115 = scmp.ne.s32.totalorder %s110, %s112
    %p116 = scmp.eq.s32.totalorder %s13, 0
    %p117 = por %p115, %p116
    %p118 = scmp.ne.s32.totalorder %s110, %s112
    %p119 = scmp.eq.s32.totalorder %s18, 1
    %p120 = por %p118, %p119
    %p121 = scmp.ne.s32.totalorder %s112, %s113
    %p122 = scmp.eq.s32.totalorder %s18, 0
    %p123 = por %p121, %p122
    %p124 = scmp.ne.s32.totalorder %s112, %s113
    %p125 = scmp.eq.s32.totalorder %s19, 1
    %p126 = por %p124, %p125
    %p128 = scmp.ne.s32.totalorder %s113, %s127
    %p129 = scmp.eq.s32.totalorder %s19, 0
    %p130 = por %p128, %p129
    %s132 = sadd.s32 %s131, 1
    %p135 = scmp.eq.s32.totalorder %s13, 1
    %p136 = scmp.ne.s32.totalorder %s131, %s133
    %p137 = scmp.eq.s32.totalorder %s13, 0
    %p138 = por %p136, %p137
    %p139 = scmp.ne.s32.totalorder %s131, %s133
    %p140 = scmp.eq.s32.totalorder %s18, 1
    %p141 = por %p139, %p140
    %p142 = scmp.ne.s32.totalorder %s133, %s134
    %p143 = scmp.eq.s32.totalorder %s18, 0
    %p144 = por %p142, %p143
    %p145 = scmp.ne.s32.totalorder %s133, %s134
    %p146 = scmp.eq.s32.totalorder %s19, 1
    %p147 = por %p145, %p146
    %p149 = scmp.ne.s32.totalorder %s134, %s148
    %p150 = scmp.eq.s32.totalorder %s19, 0
    %p151 = por %p149, %p150
    %s153 = sadd.s32 %s152, 1
    %p156 = scmp.eq.s32.totalorder %s13, 1
    %p157 = scmp.ne.s32.totalorder %s152, %s154
    %p158 = scmp.eq.s32.totalorder %s13, 0
    %p159 = por %p157, %p158
    %p160 = scmp.ne.s32.totalorder %s152, %s154
    %p161 = scmp.eq.s32.totalorder %s18, 1
    %p162 = por %p160, %p161
    %p163 = scmp.ne.s32.totalorder %s154, %s155
    %p164 = scmp.eq.s32.totalorder %s18, 0
    %p165 = por %p163, %p164
    %p166 = scmp.ne.s32.totalorder %s154, %s155
    %p167 = scmp.eq.s32.totalorder %s19, 1
    %p168 = por %p166, %p167
    %p170 = scmp.ne.s32.totalorder %s155, %s169
    %p171 = scmp.eq.s32.totalorder %s19, 0
    %p172 = por %p170, %p171
    %s173 = ssub.s32 %s13, %s20
    %p174 = scmp.eq.s32.totalorder %s173, 0
    %s176 = sadd.s32 %s175, 1
    %s177 = scalar_select %p174, %s175, %s176
    %p180 = pneg %p174
    %p181 = scmp.eq.s32.totalorder %s13, 1
    %p182 = por %p180, %p181
    %p183 = scmp.ne.s32.totalorder %s175, %s178
    %p184 = scmp.eq.s32.totalorder %s13, 0
    %p185 = por %p183, %p184
    %p186 = scmp.ne.s32.totalorder %s175, %s178
    %p187 = scmp.eq.s32.totalorder %s18, 1
    %p188 = por %p186, %p187
    %p189 = scmp.ne.s32.totalorder %s178, %s179
    %p190 = scmp.eq.s32.totalorder %s18, 0
    %p191 = por %p189, %p190
    %p192 = scmp.ne.s32.totalorder %s178, %s179
    %p193 = scmp.eq.s32.totalorder %s19, 1
    %p194 = por %p192, %p193
    %p196 = scmp.ne.s32.totalorder %s179, %s195
    %p197 = scmp.eq.s32.totalorder %s19, 0
    %p198 = por %p196, %p197
    %p199 = scmp.le.s32.totalorder 1, %s13
    %p200 = scmp.lt.s32.totalorder %s13, 3
    %p201 = pnand %p199, %p200
    %p202 = pneg %p201
    // Predicated region
    $region9: #{tpu_custom_call.1} parent=5 // pred_check
      _
    $region10: #{tpu_custom_call.1} parent=5 // pred_check_branch
      %204 = sbr.rel (%p201) target = $region12
    $region11: #{tpu_custom_call.1} parent=5 // pred_region
      %s205 = ssub.s32 %s13, 1
      // Predicated region
      $region13: #{tpu_custom_call.1} parent=11 // pred_check
        %p206 = pneg %p60
      $region14: #{tpu_custom_call.1} parent=11 // pred_check_branch
        %208 = sbr.rel (%p206) target = $region16
      $region15: #{tpu_custom_call.1} parent=11 // pred_region
        _
      $region16: #{tpu_custom_call.1} parent=11 // pred_fallthru
        _
      // Predicated region
      $region17: #{tpu_custom_call.1} parent=11 // pred_check
        %p209 = pneg %p81
      $region18: #{tpu_custom_call.1} parent=11 // pred_check_branch
        %211 = sbr.rel (%p209) target = $region20
      $region19: #{tpu_custom_call.1} parent=11 // pred_region
        _
      $region20: #{tpu_custom_call.1} parent=11 // pred_fallthru
        _
      // Predicated region
      $region21: #{tpu_custom_call.1} parent=11 // pred_check
        %p212 = pneg %p102
      $region22: #{tpu_custom_call.1} parent=11 // pred_check_branch
        %214 = sbr.rel (%p212) target = $region24
      $region23: #{tpu_custom_call.1} parent=11 // pred_region
        _
      $region24: #{tpu_custom_call.1} parent=11 // pred_fallthru
        _
      // Predicated region
      $region25: #{tpu_custom_call.1} parent=11 // pred_check
        %p215 = pneg %p123
      $region26: #{tpu_custom_call.1} parent=11 // pred_check_branch
        %217 = sbr.rel (%p215) target = $region28
      $region27: #{tpu_custom_call.1} parent=11 // pred_region
        _
      $region28: #{tpu_custom_call.1} parent=11 // pred_fallthru
        _
      // Predicated region
      $region29: #{tpu_custom_call.1} parent=11 // pred_check
        %p218 = pneg %p144
      $region30: #{tpu_custom_call.1} parent=11 // pred_check_branch
        %220 = sbr.rel (%p218) target = $region32
      $region31: #{tpu_custom_call.1} parent=11 // pred_region
        _
      $region32: #{tpu_custom_call.1} parent=11 // pred_fallthru
        _
      // Predicated region
      $region33: #{tpu_custom_call.1} parent=11 // pred_check
        %p221 = pneg %p165
      $region34: #{tpu_custom_call.1} parent=11 // pred_check_branch
        %223 = sbr.rel (%p221) target = $region36
      $region35: #{tpu_custom_call.1} parent=11 // pred_region
        _
      $region36: #{tpu_custom_call.1} parent=11 // pred_fallthru
        _
    $region12: #{tpu_custom_call.1} parent=5 // pred_fallthru
      _
    %p224 = scmp.lt.s32.totalorder %s13, 2
    // Predicated region
    $region37: #{tpu_custom_call.1} parent=5 // pred_check
      %p225 = pneg %p224
    $region38: #{tpu_custom_call.1} parent=5 // pred_check_branch
      %227 = sbr.rel (%p225) target = $region40
    $region39: #{tpu_custom_call.1} parent=5 // pred_region
      // Predicated region
      $region41: #{tpu_custom_call.1} parent=39 // pred_check
        %p228 = pneg %p33
      $region42: #{tpu_custom_call.1} parent=39 // pred_check_branch
        %230 = sbr.rel (%p228) target = $region44
      $region43: #{tpu_custom_call.1} parent=39 // pred_region
        %p231 = scmp.lt.s32.totalorder %s13, 1
        %s232 = scalar_select %p231, %s13, 1
        %s233 = smul.addr %s232, 72
        %s234 = smul.addr %s233, 8
        %s235 = scalar_lea.vmem %s0, %s234
      $region44: #{tpu_custom_call.1} parent=39 // pred_fallthru
        _
    $region40: #{tpu_custom_call.1} parent=5 // pred_fallthru
      _
    %p236 = scmp.le.s32.totalorder 1, %s13
    %p237 = scmp.lt.s32.totalorder %s13, 3
    %p238 = pnand %p236, %p237
    %p239 = pneg %p238
    // Predicated region
    $region45: #{tpu_custom_call.1} parent=5 // pred_check
      _
    $region46: #{tpu_custom_call.1} parent=5 // pred_check_branch
      %241 = sbr.rel (%p238) target = $region48
    $region47: #{tpu_custom_call.1} parent=5 // pred_region
      %s242 = ssub.s32 %s13, 1
      %p243 = scmp.lt.s32.totalorder %s18, 1
      %s244 = scalar_select %p243, %s18, 1
      %s245 = smul.addr %s244, 72
      %s246 = smul.addr %s245, 8
      %s247 = scalar_lea.vmem %s0, %s246
      %p248 = pneg %p39
      %p249 = pneg %p36
      %p250 = pneg %p60
      %p251 = pneg %p57
      %p252 = pneg %p81
      %p253 = pneg %p78
      %p254 = pneg %p102
      %p255 = pneg %p99
      %p256 = pneg %p123
      %p257 = pneg %p120
      %p258 = pneg %p144
      %p259 = pneg %p141
      %p260 = pneg %p165
      %p261 = pneg %p162
      %p262 = pneg %p191
      %p263 = pneg %p188
      %p264 = scmp.lt.s32.totalorder %s18, 1
      %s265 = scalar_select %p264, %s18, 1
      %s266 = smul.addr %s265, 8
      %s267 = smul.addr %s266, 8
      %s268 = scalar_lea.vmem %s7, %s267
      %p269 = scmp.lt.s32.totalorder %s18, 1
      %s270 = scalar_select %p269, %s18, 1
      %s271 = smul.addr %s270, 72
      %s272 = smul.addr %s271, 8
      %s273 = scalar_lea.vmem %s0, %s272
      %p274 = scmp.lt.s32.totalorder %s18, 1
      %s275 = scalar_select %p274, %s18, 1
      %s276 = smul.addr %s275, 8
      %s277 = smul.addr %s276, 8
      %s278 = scalar_lea.vmem %s7, %s277
      %v279 = vld [vmem:[%s1] sm:$0xf]
      %v280 = vld [vmem:[%s273] sm:$0xff]
      %v281 = vld [vmem:[%s273 + $0x10] sm:$0xff]
      %v282 = vld [vmem:[%s273 + $0x20] sm:$0xff]
      %v283 = vld [vmem:[%s273 + $0x30] sm:$0xff]
      %v284 = vld [vmem:[%s273 + $0x40] sm:$0xff]
      %v285 = vld [vmem:[%s273 + $0x50] sm:$0xff]
      %v286 = vld [vmem:[%s273 + $0x60] sm:$0xff]
      %v287 = vld [vmem:[%s273 + $0x70] sm:$0xff]
      %s288 = scalar_lea.vmem %s1, 4
      %v289 = vld [vmem:[%s288] sm:$0xf]
      %s290 = scalar_lea.vmem %s273, 144
      %v291 = vld [vmem:[%s290] sm:$0xff]
      %v292 = vld [vmem:[%s290 + $0x10] sm:$0xff]
      %v293 = vld [vmem:[%s290 + $0x20] sm:$0xff]
      %v294 = vld [vmem:[%s290 + $0x30] sm:$0xff]
      %v295 = vld [vmem:[%s290 + $0x40] sm:$0xff]
      %v296 = vld [vmem:[%s290 + $0x50] sm:$0xff]
      %v297 = vld [vmem:[%s290 + $0x60] sm:$0xff]
      %v298 = vld [vmem:[%s290 + $0x70] sm:$0xff]
      %vm299 = vcmask 31744
      %v301 = vsel %vm299, %v291, 0
      %v304 = vsel %vm299, %v292, 0
      %v307 = vsel %vm299, %v293, 0
      %v310 = vsel %vm299, %v294, 0
      %v313 = vsel %vm299, %v295, 0
      %v316 = vsel %vm299, %v296, 0
      %v319 = vsel %vm299, %v297, 0
      %v322 = vsel %vm299, %v298, 0
      %vm324 = vcmask 1043456
      %v326 = vsel %vm324, %v289, 0
      %328 = vmatprep.subr.mxu0 0.0
      %329 = vmatpush1.msra.mxu0 0.0
      %330 = vmatprep.subr.mxu0 0.0
      %331 = vmatpush1.msra.mxu0 0.0
      %332 = vmatprep.subr.mxu0 0.0
      %333 = vmatpush1.msra.mxu0 0.0
      %334 = vmatprep.subr.mxu0 0.0
      %335 = vmatpush1.msra.mxu0 0.0
      %336 = vmatprep.subr.mxu0 0.0
      %337 = vmatpush1.msra.mxu0 0.0
      %338 = vmatprep.subr.mxu0 0.0
      %339 = vmatpush1.msra.mxu0 0.0
      %340 = vmatprep.subr.mxu0 0.0
      %341 = vmatpush1.msra.mxu0 0.0
      %342 = vmatprep.subr.mxu0 0.0
      %343 = vmatpush1.msra.mxu0 0.0
      %344 = vmatprep.subr.mxu0 0.0
      %345 = vmatpush1.msra.mxu0 0.0
      %346 = vmatprep.subr.mxu0 0.0
      %347 = vmatpush1.msra.mxu0 0.0
      %348 = vmatprep.subr.mxu0 0.0
      %349 = vmatpush1.msra.mxu0 0.0
      %350 = vmatprep.subr.mxu0 0.0
      %351 = vmatpush1.msra.mxu0 0.0
      %352 = vmatprep.subr.mxu0 0.0
      %353 = vmatpush1.msra.mxu0 0.0
      %354 = vmatprep.subr.mxu0 0.0
      %355 = vmatpush1.msra.mxu0 0.0
      %356 = vmatprep.subr.mxu0 0.0
      %357 = vmatpush1.msra.mxu0 0.0
      %358 = vmatprep.subr.mxu0 0.0
      %359 = vmatpush1.msra.mxu0 %v326
      %360 = vmatprep.subr.mxu0 0.0
      %361 = vmatpush2.msra.mxu0 0.0
      %362 = vmatprep.subr.mxu0 0.0
      %363 = vmatpush2.msra.mxu0 0.0
      %364 = vmatprep.subr.mxu0 0.0
      %365 = vmatpush2.msra.mxu0 0.0
      %366 = vmatprep.subr.mxu0 0.0
      %367 = vmatpush2.msra.mxu0 0.0
      %368 = vmatprep.subr.mxu0 0.0
      %369 = vmatpush2.msra.mxu0 0.0
      %370 = vmatprep.subr.mxu0 0.0
      %371 = vmatpush2.msra.mxu0 0.0
      %372 = vmatprep.subr.mxu0 0.0
      %373 = vmatpush2.msra.mxu0 0.0
      %374 = vmatprep.subr.mxu0 0.0
      %375 = vmatpush2.msra.mxu0 0.0
      %376 = vmatprep.subr.mxu0 0.0
      %377 = vmatpush2.msra.mxu0 0.0
      %378 = vmatprep.subr.mxu0 0.0
      %379 = vmatpush2.msra.mxu0 0.0
      %380 = vmatprep.subr.mxu0 0.0
      %381 = vmatpush2.msra.mxu0 0.0
      %382 = vmatprep.subr.mxu0 0.0
      %383 = vmatpush2.msra.mxu0 0.0
      %384 = vmatprep.subr.mxu0 0.0
      %385 = vmatpush2.msra.mxu0 0.0
      %386 = vmatprep.subr.mxu0 0.0
      %387 = vmatpush2.msra.mxu0 0.0
      %388 = vmatprep.subr.mxu0 0.0
      %389 = vmatpush2.msra.mxu0 0.0
      %390 = vmatprep.subr.mxu0 0.0
      %391 = vmatpush2.msra.mxu0 0.0
      %392 = vmatprep.mubr.f32.mxu0 0.0
      %393 = vmatmul.mubr.f32.gmra.mxu0 %v301
      %v394 = vpop.f32.mrf.mxu0
      %v395 = vadd.f32 0.0, %v394
      %v396 = vpop.f32.mrf.mxu0
      %397 = vmatprep.mubr.f32.mxu0 0.0
      %398 = vmatmul.mubr.f32.gmra.mxu0 %v304
      %v399 = vpop.f32.mrf.mxu0
      %v400 = vadd.f32 0.0, %v399
      %v401 = vpop.f32.mrf.mxu0
      %402 = vmatprep.mubr.f32.mxu0 0.0
      %403 = vmatmul.mubr.f32.gmra.mxu0 %v307
      %v404 = vpop.f32.mrf.mxu0
      %v405 = vadd.f32 0.0, %v404
      %v406 = vpop.f32.mrf.mxu0
      %407 = vmatprep.mubr.f32.mxu0 0.0
      %408 = vmatmul.mubr.f32.gmra.mxu0 %v310
      %v409 = vpop.f32.mrf.mxu0
      %v410 = vadd.f32 0.0, %v409
      %v411 = vpop.f32.mrf.mxu0
      %412 = vmatprep.mubr.f32.mxu0 0.0
      %413 = vmatmul.mubr.f32.gmra.mxu0 %v313
      %v414 = vpop.f32.mrf.mxu0
      %v415 = vadd.f32 0.0, %v414
      %v416 = vpop.f32.mrf.mxu0
      %417 = vmatprep.mubr.f32.mxu0 0.0
      %418 = vmatmul.mubr.f32.gmra.mxu0 %v316
      %v419 = vpop.f32.mrf.mxu0
      %v420 = vadd.f32 0.0, %v419
      %v421 = vpop.f32.mrf.mxu0
      %422 = vmatprep.mubr.f32.mxu0 0.0
      %423 = vmatmul.mubr.f32.gmra.mxu0 %v319
      %v424 = vpop.f32.mrf.mxu0
      %v425 = vadd.f32 0.0, %v424
      %v426 = vpop.f32.mrf.mxu0
      %427 = vmatprep.mubr.f32.mxu0 0.0
      %428 = vmatmul.mubr.f32.gmra.mxu0 %v322
      %v429 = vpop.f32.mrf.mxu0
      %v430 = vadd.f32 0.0, %v429
      %v431 = vpop.f32.mrf.mxu0
      %432 = vdwg.mxu0
      %v434 = vsel %vm299, %v280, 0
      %v437 = vsel %vm299, %v281, 0
      %v440 = vsel %vm299, %v282, 0
      %v443 = vsel %vm299, %v283, 0
      %v446 = vsel %vm299, %v284, 0
      %v449 = vsel %vm299, %v285, 0
      %v452 = vsel %vm299, %v286, 0
      %v455 = vsel %vm299, %v287, 0
      %v458 = vsel %vm324, %v279, 0
      %460 = vmatprep.subr.mxu0 0.0
      %461 = vmatpush1.msra.mxu0 0.0
      %462 = vmatprep.subr.mxu0 0.0
      %463 = vmatpush1.msra.mxu0 0.0
      %464 = vmatprep.subr.mxu0 0.0
      %465 = vmatpush1.msra.mxu0 0.0
      %466 = vmatprep.subr.mxu0 0.0
      %467 = vmatpush1.msra.mxu0 0.0
      %468 = vmatprep.subr.mxu0 0.0
      %469 = vmatpush1.msra.mxu0 0.0
      %470 = vmatprep.subr.mxu0 0.0
      %471 = vmatpush1.msra.mxu0 0.0
      %472 = vmatprep.subr.mxu0 0.0
      %473 = vmatpush1.msra.mxu0 0.0
      %474 = vmatprep.subr.mxu0 0.0
      %475 = vmatpush1.msra.mxu0 0.0
      %476 = vmatprep.subr.mxu0 0.0
      %477 = vmatpush1.msra.mxu0 0.0
      %478 = vmatprep.subr.mxu0 0.0
      %479 = vmatpush1.msra.mxu0 0.0
      %480 = vmatprep.subr.mxu0 0.0
      %481 = vmatpush1.msra.mxu0 0.0
      %482 = vmatprep.subr.mxu0 0.0
      %483 = vmatpush1.msra.mxu0 0.0
      %484 = vmatprep.subr.mxu0 0.0
      %485 = vmatpush1.msra.mxu0 0.0
      %486 = vmatprep.subr.mxu0 0.0
      %487 = vmatpush1.msra.mxu0 0.0
      %488 = vmatprep.subr.mxu0 0.0
      %489 = vmatpush1.msra.mxu0 0.0
      %490 = vmatprep.subr.mxu0 0.0
      %491 = vmatpush1.msra.mxu0 %v458
      %492 = vmatprep.subr.mxu0 0.0
      %493 = vmatpush2.msra.mxu0 0.0
      %494 = vmatprep.subr.mxu0 0.0
      %495 = vmatpush2.msra.mxu0 0.0
      %496 = vmatprep.subr.mxu0 0.0
      %497 = vmatpush2.msra.mxu0 0.0
      %498 = vmatprep.subr.mxu0 0.0
      %499 = vmatpush2.msra.mxu0 0.0
      %500 = vmatprep.subr.mxu0 0.0
      %501 = vmatpush2.msra.mxu0 0.0
      %502 = vmatprep.subr.mxu0 0.0
      %503 = vmatpush2.msra.mxu0 0.0
      %504 = vmatprep.subr.mxu0 0.0
      %505 = vmatpush2.msra.mxu0 0.0
      %506 = vmatprep.subr.mxu0 0.0
      %507 = vmatpush2.msra.mxu0 0.0
      %508 = vmatprep.subr.mxu0 0.0
      %509 = vmatpush2.msra.mxu0 0.0
      %510 = vmatprep.subr.mxu0 0.0
      %511 = vmatpush2.msra.mxu0 0.0
      %512 = vmatprep.subr.mxu0 0.0
      %513 = vmatpush2.msra.mxu0 0.0
      %514 = vmatprep.subr.mxu0 0.0
      %515 = vmatpush2.msra.mxu0 0.0
      %516 = vmatprep.subr.mxu0 0.0
      %517 = vmatpush2.msra.mxu0 0.0
      %518 = vmatprep.subr.mxu0 0.0
      %519 = vmatpush2.msra.mxu0 0.0
      %520 = vmatprep.subr.mxu0 0.0
      %521 = vmatpush2.msra.mxu0 0.0
      %522 = vmatprep.subr.mxu0 0.0
      %523 = vmatpush2.msra.mxu0 0.0
      %524 = vmatprep.mubr.f32.mxu0 0.0
      %525 = vmatmul.mubr.f32.gmra.mxu0 %v434
      %v526 = vpop.f32.mrf.mxu0
      %v527 = vadd.f32 %v395, %v526
      %v528 = vpop.f32.mrf.mxu0
      %529 = vmatprep.mubr.f32.mxu0 0.0
      %530 = vmatmul.mubr.f32.gmra.mxu0 %v437
      %v531 = vpop.f32.mrf.mxu0
      %v532 = vadd.f32 %v400, %v531
      %v533 = vpop.f32.mrf.mxu0
      %534 = vmatprep.mubr.f32.mxu0 0.0
      %535 = vmatmul.mubr.f32.gmra.mxu0 %v440
      %v536 = vpop.f32.mrf.mxu0
      %v537 = vadd.f32 %v405, %v536
      %v538 = vpop.f32.mrf.mxu0
      %539 = vmatprep.mubr.f32.mxu0 0.0
      %540 = vmatmul.mubr.f32.gmra.mxu0 %v443
      %v541 = vpop.f32.mrf.mxu0
      %v542 = vadd.f32 %v410, %v541
      %v543 = vpop.f32.mrf.mxu0
      %544 = vmatprep.mubr.f32.mxu0 0.0
      %545 = vmatmul.mubr.f32.gmra.mxu0 %v446
      %v546 = vpop.f32.mrf.mxu0
      %v547 = vadd.f32 %v415, %v546
      %v548 = vpop.f32.mrf.mxu0
      %549 = vmatprep.mubr.f32.mxu0 0.0
      %550 = vmatmul.mubr.f32.gmra.mxu0 %v449
      %v551 = vpop.f32.mrf.mxu0
      %v552 = vadd.f32 %v420, %v551
      %v553 = vpop.f32.mrf.mxu0
      %554 = vmatprep.mubr.f32.mxu0 0.0
      %555 = vmatmul.mubr.f32.gmra.mxu0 %v452
      %v556 = vpop.f32.mrf.mxu0
      %v557 = vadd.f32 %v425, %v556
      %v558 = vpop.f32.mrf.mxu0
      %559 = vmatprep.mubr.f32.mxu0 0.0
      %560 = vmatmul.mubr.f32.gmra.mxu0 %v455
      %v561 = vpop.f32.mrf.mxu0
      %v562 = vadd.f32 %v430, %v561
      %v563 = vpop.f32.mrf.mxu0
      %564 = vdwg.mxu0
      %s565 = scalar_lea.vmem %s1, 8
      %v566 = vld [vmem:[%s565] sm:$0xf]
      %v567 = vld [vmem:[%s273 + $0x1] sm:$0xff]
      %v568 = vld [vmem:[%s273 + $0x11] sm:$0xff]
      %v569 = vld [vmem:[%s273 + $0x21] sm:$0xff]
      %v570 = vld [vmem:[%s273 + $0x31] sm:$0xff]
      %v571 = vld [vmem:[%s273 + $0x41] sm:$0xff]
      %v572 = vld [vmem:[%s273 + $0x51] sm:$0xff]
      %v573 = vld [vmem:[%s273 + $0x61] sm:$0xff]
      %v574 = vld [vmem:[%s273 + $0x71] sm:$0xff]
      %v576 = vsel %vm299, %v567, 0
      %v579 = vsel %vm299, %v568, 0
      %v582 = vsel %vm299, %v569, 0
      %v585 = vsel %vm299, %v570, 0
      %v588 = vsel %vm299, %v571, 0
      %v591 = vsel %vm299, %v572, 0
      %v594 = vsel %vm299, %v573, 0
      %v597 = vsel %vm299, %v574, 0
      %v600 = vsel %vm324, %v566, 0
      %602 = vmatprep.subr.mxu0 0.0
      %603 = vmatpush1.msra.mxu0 0.0
      %604 = vmatprep.subr.mxu0 0.0
      %605 = vmatpush1.msra.mxu0 0.0
      %606 = vmatprep.subr.mxu0 0.0
      %607 = vmatpush1.msra.mxu0 0.0
      %608 = vmatprep.subr.mxu0 0.0
      %609 = vmatpush1.msra.mxu0 0.0
      %610 = vmatprep.subr.mxu0 0.0
      %611 = vmatpush1.msra.mxu0 0.0
      %612 = vmatprep.subr.mxu0 0.0
      %613 = vmatpush1.msra.mxu0 0.0
      %614 = vmatprep.subr.mxu0 0.0
      %615 = vmatpush1.msra.mxu0 0.0
      %616 = vmatprep.subr.mxu0 0.0
      %617 = vmatpush1.msra.mxu0 0.0
      %618 = vmatprep.subr.mxu0 0.0
      %619 = vmatpush1.msra.mxu0 0.0
      %620 = vmatprep.subr.mxu0 0.0
      %621 = vmatpush1.msra.mxu0 0.0
      %622 = vmatprep.subr.mxu0 0.0
      %623 = vmatpush1.msra.mxu0 0.0
      %624 = vmatprep.subr.mxu0 0.0
      %625 = vmatpush1.msra.mxu0 0.0
      %626 = vmatprep.subr.mxu0 0.0
      %627 = vmatpush1.msra.mxu0 0.0
      %628 = vmatprep.subr.mxu0 0.0
      %629 = vmatpush1.msra.mxu0 0.0
      %630 = vmatprep.subr.mxu0 0.0
      %631 = vmatpush1.msra.mxu0 0.0
      %632 = vmatprep.subr.mxu0 0.0
      %633 = vmatpush1.msra.mxu0 %v600
      %634 = vmatprep.subr.mxu0 0.0
      %635 = vmatpush2.msra.mxu0 0.0
      %636 = vmatprep.subr.mxu0 0.0
      %637 = vmatpush2.msra.mxu0 0.0
      %638 = vmatprep.subr.mxu0 0.0
      %639 = vmatpush2.msra.mxu0 0.0
      %640 = vmatprep.subr.mxu0 0.0
      %641 = vmatpush2.msra.mxu0 0.0
      %642 = vmatprep.subr.mxu0 0.0
      %643 = vmatpush2.msra.mxu0 0.0
      %644 = vmatprep.subr.mxu0 0.0
      %645 = vmatpush2.msra.mxu0 0.0
      %646 = vmatprep.subr.mxu0 0.0
      %647 = vmatpush2.msra.mxu0 0.0
      %648 = vmatprep.subr.mxu0 0.0
      %649 = vmatpush2.msra.mxu0 0.0
      %650 = vmatprep.subr.mxu0 0.0
      %651 = vmatpush2.msra.mxu0 0.0
      %652 = vmatprep.subr.mxu0 0.0
      %653 = vmatpush2.msra.mxu0 0.0
      %654 = vmatprep.subr.mxu0 0.0
      %655 = vmatpush2.msra.mxu0 0.0
      %656 = vmatprep.subr.mxu0 0.0
      %657 = vmatpush2.msra.mxu0 0.0
      %658 = vmatprep.subr.mxu0 0.0
      %659 = vmatpush2.msra.mxu0 0.0
      %660 = vmatprep.subr.mxu0 0.0
      %661 = vmatpush2.msra.mxu0 0.0
      %662 = vmatprep.subr.mxu0 0.0
      %663 = vmatpush2.msra.mxu0 0.0
      %664 = vmatprep.subr.mxu0 0.0
      %665 = vmatpush2.msra.mxu0 0.0
      %666 = vmatprep.mubr.f32.mxu0 0.0
      %667 = vmatmul.mubr.f32.gmra.mxu0 %v576
      %v668 = vpop.f32.mrf.mxu0
      %v669 = vadd.f32 0.0, %v668
      %v670 = vpop.f32.mrf.mxu0
      %671 = vmatprep.mubr.f32.mxu0 0.0
      %672 = vmatmul.mubr.f32.gmra.mxu0 %v579
      %v673 = vpop.f32.mrf.mxu0
      %v674 = vadd.f32 0.0, %v673
      %v675 = vpop.f32.mrf.mxu0
      %676 = vmatprep.mubr.f32.mxu0 0.0
      %677 = vmatmul.mubr.f32.gmra.mxu0 %v582
      %v678 = vpop.f32.mrf.mxu0
      %v679 = vadd.f32 0.0, %v678
      %v680 = vpop.f32.mrf.mxu0
      %681 = vmatprep.mubr.f32.mxu0 0.0
      %682 = vmatmul.mubr.f32.gmra.mxu0 %v585
      %v683 = vpop.f32.mrf.mxu0
      %v684 = vadd.f32 0.0, %v683
      %v685 = vpop.f32.mrf.mxu0
      %686 = vmatprep.mubr.f32.mxu0 0.0
      %687 = vmatmul.mubr.f32.gmra.mxu0 %v588
      %v688 = vpop.f32.mrf.mxu0
      %v689 = vadd.f32 0.0, %v688
      %v690 = vpop.f32.mrf.mxu0
      %691 = vmatprep.mubr.f32.mxu0 0.0
      %692 = vmatmul.mubr.f32.gmra.mxu0 %v591
      %v693 = vpop.f32.mrf.mxu0
      %v694 = vadd.f32 0.0, %v693
      %v695 = vpop.f32.mrf.mxu0
      %696 = vmatprep.mubr.f32.mxu0 0.0
      %697 = vmatmul.mubr.f32.gmra.mxu0 %v594
      %v698 = vpop.f32.mrf.mxu0
      %v699 = vadd.f32 0.0, %v698
      %v700 = vpop.f32.mrf.mxu0
      %701 = vmatprep.mubr.f32.mxu0 0.0
      %702 = vmatmul.mubr.f32.gmra.mxu0 %v597
      %v703 = vpop.f32.mrf.mxu0
      %v704 = vadd.f32 0.0, %v703
      %v705 = vpop.f32.mrf.mxu0
      %706 = vdwg.mxu0
      %v707 = vadd.f32 %v527, %v669
      %v708 = vadd.f32 %v532, %v674
      %v709 = vadd.f32 %v537, %v679
      %v710 = vadd.f32 %v542, %v684
      %v711 = vadd.f32 %v547, %v689
      %v712 = vadd.f32 %v552, %v694
      %v713 = vadd.f32 %v557, %v699
      %v714 = vadd.f32 %v562, %v704
      %s715 = scalar_lea.vmem %s1, 12
      %v716 = vld [vmem:[%s715] sm:$0xf]
      %s717 = scalar_lea.vmem %s273, 288
      %v718 = vld [vmem:[%s717] sm:$0xff]
      %v719 = vld [vmem:[%s717 + $0x10] sm:$0xff]
      %v720 = vld [vmem:[%s717 + $0x20] sm:$0xff]
      %v721 = vld [vmem:[%s717 + $0x30] sm:$0xff]
      %v722 = vld [vmem:[%s717 + $0x40] sm:$0xff]
      %v723 = vld [vmem:[%s717 + $0x50] sm:$0xff]
      %v724 = vld [vmem:[%s717 + $0x60] sm:$0xff]
      %v725 = vld [vmem:[%s717 + $0x70] sm:$0xff]
      %v727 = vsel %vm299, %v718, 0
      %v730 = vsel %vm299, %v719, 0
      %v733 = vsel %vm299, %v720, 0
      %v736 = vsel %vm299, %v721, 0
      %v739 = vsel %vm299, %v722, 0
      %v742 = vsel %vm299, %v723, 0
      %v745 = vsel %vm299, %v724, 0
      %v748 = vsel %vm299, %v725, 0
      %v751 = vsel %vm324, %v716, 0
      %753 = vmatprep.subr.mxu0 0.0
      %754 = vmatpush1.msra.mxu0 0.0
      %755 = vmatprep.subr.mxu0 0.0
      %756 = vmatpush1.msra.mxu0 0.0
      %757 = vmatprep.subr.mxu0 0.0
      %758 = vmatpush1.msra.mxu0 0.0
      %759 = vmatprep.subr.mxu0 0.0
      %760 = vmatpush1.msra.mxu0 0.0
      %761 = vmatprep.subr.mxu0 0.0
      %762 = vmatpush1.msra.mxu0 0.0
      %763 = vmatprep.subr.mxu0 0.0
      %764 = vmatpush1.msra.mxu0 0.0
      %765 = vmatprep.subr.mxu0 0.0
      %766 = vmatpush1.msra.mxu0 0.0
      %767 = vmatprep.subr.mxu0 0.0
      %768 = vmatpush1.msra.mxu0 0.0
      %769 = vmatprep.subr.mxu0 0.0
      %770 = vmatpush1.msra.mxu0 0.0
      %771 = vmatprep.subr.mxu0 0.0
      %772 = vmatpush1.msra.mxu0 0.0
      %773 = vmatprep.subr.mxu0 0.0
      %774 = vmatpush1.msra.mxu0 0.0
      %775 = vmatprep.subr.mxu0 0.0
      %776 = vmatpush1.msra.mxu0 0.0
      %777 = vmatprep.subr.mxu0 0.0
      %778 = vmatpush1.msra.mxu0 0.0
      %779 = vmatprep.subr.mxu0 0.0
      %780 = vmatpush1.msra.mxu0 0.0
      %781 = vmatprep.subr.mxu0 0.0
      %782 = vmatpush1.msra.mxu0 0.0
      %783 = vmatprep.subr.mxu0 0.0
      %784 = vmatpush1.msra.mxu0 %v751
      %785 = vmatprep.subr.mxu0 0.0
      %786 = vmatpush2.msra.mxu0 0.0
      %787 = vmatprep.subr.mxu0 0.0
      %788 = vmatpush2.msra.mxu0 0.0
      %789 = vmatprep.subr.mxu0 0.0
      %790 = vmatpush2.msra.mxu0 0.0
      %791 = vmatprep.subr.mxu0 0.0
      %792 = vmatpush2.msra.mxu0 0.0
      %793 = vmatprep.subr.mxu0 0.0
      %794 = vmatpush2.msra.mxu0 0.0
      %795 = vmatprep.subr.mxu0 0.0
      %796 = vmatpush2.msra.mxu0 0.0
      %797 = vmatprep.subr.mxu0 0.0
      %798 = vmatpush2.msra.mxu0 0.0
      %799 = vmatprep.subr.mxu0 0.0
      %800 = vmatpush2.msra.mxu0 0.0
      %801 = vmatprep.subr.mxu0 0.0
      %802 = vmatpush2.msra.mxu0 0.0
      %803 = vmatprep.subr.mxu0 0.0
      %804 = vmatpush2.msra.mxu0 0.0
      %805 = vmatprep.subr.mxu0 0.0
      %806 = vmatpush2.msra.mxu0 0.0
      %807 = vmatprep.subr.mxu0 0.0
      %808 = vmatpush2.msra.mxu0 0.0
      %809 = vmatprep.subr.mxu0 0.0
      %810 = vmatpush2.msra.mxu0 0.0
      %811 = vmatprep.subr.mxu0 0.0
      %812 = vmatpush2.msra.mxu0 0.0
      %813 = vmatprep.subr.mxu0 0.0
      %814 = vmatpush2.msra.mxu0 0.0
      %815 = vmatprep.subr.mxu0 0.0
      %816 = vmatpush2.msra.mxu0 0.0
      %817 = vmatprep.mubr.f32.mxu0 0.0
      %818 = vmatmul.mubr.f32.gmra.mxu0 %v727
      %v819 = vpop.f32.mrf.mxu0
      %v820 = vadd.f32 0.0, %v819
      %v821 = vpop.f32.mrf.mxu0
      %822 = vmatprep.mubr.f32.mxu0 0.0
      %823 = vmatmul.mubr.f32.gmra.mxu0 %v730
      %v824 = vpop.f32.mrf.mxu0
      %v825 = vadd.f32 0.0, %v824
      %v826 = vpop.f32.mrf.mxu0
      %827 = vmatprep.mubr.f32.mxu0 0.0
      %828 = vmatmul.mubr.f32.gmra.mxu0 %v733
      %v829 = vpop.f32.mrf.mxu0
      %v830 = vadd.f32 0.0, %v829
      %v831 = vpop.f32.mrf.mxu0
      %832 = vmatprep.mubr.f32.mxu0 0.0
      %833 = vmatmul.mubr.f32.gmra.mxu0 %v736
      %v834 = vpop.f32.mrf.mxu0
      %v835 = vadd.f32 0.0, %v834
      %v836 = vpop.f32.mrf.mxu0
      %837 = vmatprep.mubr.f32.mxu0 0.0
      %838 = vmatmul.mubr.f32.gmra.mxu0 %v739
      %v839 = vpop.f32.mrf.mxu0
      %v840 = vadd.f32 0.0, %v839
      %v841 = vpop.f32.mrf.mxu0
      %842 = vmatprep.mubr.f32.mxu0 0.0
      %843 = vmatmul.mubr.f32.gmra.mxu0 %v742
      %v844 = vpop.f32.mrf.mxu0
      %v845 = vadd.f32 0.0, %v844
      %v846 = vpop.f32.mrf.mxu0
      %847 = vmatprep.mubr.f32.mxu0 0.0
      %848 = vmatmul.mubr.f32.gmra.mxu0 %v745
      %v849 = vpop.f32.mrf.mxu0
      %v850 = vadd.f32 0.0, %v849
      %v851 = vpop.f32.mrf.mxu0
      %852 = vmatprep.mubr.f32.mxu0 0.0
      %853 = vmatmul.mubr.f32.gmra.mxu0 %v748
      %v854 = vpop.f32.mrf.mxu0
      %v855 = vadd.f32 0.0, %v854
      %v856 = vpop.f32.mrf.mxu0
      %857 = vdwg.mxu0
      %v858 = vadd.f32 %v707, %v820
      %v859 = vadd.f32 %v708, %v825
      %v860 = vadd.f32 %v709, %v830
      %v861 = vadd.f32 %v710, %v835
      %v862 = vadd.f32 %v711, %v840
      %v863 = vadd.f32 %v712, %v845
      %v864 = vadd.f32 %v713, %v850
      %v865 = vadd.f32 %v714, %v855
      %s866 = scalar_lea.vmem %s1, 16
      %v867 = vld [vmem:[%s866] sm:$0xf]
      %s868 = scalar_lea.vmem %s273, 432
      %v869 = vld [vmem:[%s868] sm:$0xff]
      %v870 = vld [vmem:[%s868 + $0x10] sm:$0xff]
      %v871 = vld [vmem:[%s868 + $0x20] sm:$0xff]
      %v872 = vld [vmem:[%s868 + $0x30] sm:$0xff]
      %v873 = vld [vmem:[%s868 + $0x40] sm:$0xff]
      %v874 = vld [vmem:[%s868 + $0x50] sm:$0xff]
      %v875 = vld [vmem:[%s868 + $0x60] sm:$0xff]
      %v876 = vld [vmem:[%s868 + $0x70] sm:$0xff]
      %v878 = vsel %vm299, %v869, 0
      %v881 = vsel %vm299, %v870, 0
      %v884 = vsel %vm299, %v871, 0
      %v887 = vsel %vm299, %v872, 0
      %v890 = vsel %vm299, %v873, 0
      %v893 = vsel %vm299, %v874, 0
      %v896 = vsel %vm299, %v875, 0
      %v899 = vsel %vm299, %v876, 0
      %v902 = vsel %vm324, %v867, 0
      %904 = vmatprep.subr.mxu0 0.0
      %905 = vmatpush1.msra.mxu0 0.0
      %906 = vmatprep.subr.mxu0 0.0
      %907 = vmatpush1.msra.mxu0 0.0
      %908 = vmatprep.subr.mxu0 0.0
      %909 = vmatpush1.msra.mxu0 0.0
      %910 = vmatprep.subr.mxu0 0.0
      %911 = vmatpush1.msra.mxu0 0.0
      %912 = vmatprep.subr.mxu0 0.0
      %913 = vmatpush1.msra.mxu0 0.0
      %914 = vmatprep.subr.mxu0 0.0
      %915 = vmatpush1.msra.mxu0 0.0
      %916 = vmatprep.subr.mxu0 0.0
      %917 = vmatpush1.msra.mxu0 0.0
      %918 = vmatprep.subr.mxu0 0.0
      %919 = vmatpush1.msra.mxu0 0.0
      %920 = vmatprep.subr.mxu0 0.0
      %921 = vmatpush1.msra.mxu0 0.0
      %922 = vmatprep.subr.mxu0 0.0
      %923 = vmatpush1.msra.mxu0 0.0
      %924 = vmatprep.subr.mxu0 0.0
      %925 = vmatpush1.msra.mxu0 0.0
      %926 = vmatprep.subr.mxu0 0.0
      %927 = vmatpush1.msra.mxu0 0.0
      %928 = vmatprep.subr.mxu0 0.0
      %929 = vmatpush1.msra.mxu0 0.0
      %930 = vmatprep.subr.mxu0 0.0
      %931 = vmatpush1.msra.mxu0 0.0
      %932 = vmatprep.subr.mxu0 0.0
      %933 = vmatpush1.msra.mxu0 0.0
      %934 = vmatprep.subr.mxu0 0.0
      %935 = vmatpush1.msra.mxu0 %v902
      %936 = vmatprep.subr.mxu0 0.0
      %937 = vmatpush2.msra.mxu0 0.0
      %938 = vmatprep.subr.mxu0 0.0
      %939 = vmatpush2.msra.mxu0 0.0
      %940 = vmatprep.subr.mxu0 0.0
      %941 = vmatpush2.msra.mxu0 0.0
      %942 = vmatprep.subr.mxu0 0.0
      %943 = vmatpush2.msra.mxu0 0.0
      %944 = vmatprep.subr.mxu0 0.0
      %945 = vmatpush2.msra.mxu0 0.0
      %946 = vmatprep.subr.mxu0 0.0
      %947 = vmatpush2.msra.mxu0 0.0
      %948 = vmatprep.subr.mxu0 0.0
      %949 = vmatpush2.msra.mxu0 0.0
      %950 = vmatprep.subr.mxu0 0.0
      %951 = vmatpush2.msra.mxu0 0.0
      %952 = vmatprep.subr.mxu0 0.0
      %953 = vmatpush2.msra.mxu0 0.0
      %954 = vmatprep.subr.mxu0 0.0
      %955 = vmatpush2.msra.mxu0 0.0
      %956 = vmatprep.subr.mxu0 0.0
      %957 = vmatpush2.msra.mxu0 0.0
      %958 = vmatprep.subr.mxu0 0.0
      %959 = vmatpush2.msra.mxu0 0.0
      %960 = vmatprep.subr.mxu0 0.0
      %961 = vmatpush2.msra.mxu0 0.0
      %962 = vmatprep.subr.mxu0 0.0
      %963 = vmatpush2.msra.mxu0 0.0
      %964 = vmatprep.subr.mxu0 0.0
      %965 = vmatpush2.msra.mxu0 0.0
      %966 = vmatprep.subr.mxu0 0.0
      %967 = vmatpush2.msra.mxu0 0.0
      %968 = vmatprep.mubr.f32.mxu0 0.0
      %969 = vmatmul.mubr.f32.gmra.mxu0 %v878
      %v970 = vpop.f32.mrf.mxu0
      %v971 = vadd.f32 0.0, %v970
      %v972 = vpop.f32.mrf.mxu0
      %973 = vmatprep.mubr.f32.mxu0 0.0
      %974 = vmatmul.mubr.f32.gmra.mxu0 %v881
      %v975 = vpop.f32.mrf.mxu0
      %v976 = vadd.f32 0.0, %v975
      %v977 = vpop.f32.mrf.mxu0
      %978 = vmatprep.mubr.f32.mxu0 0.0
      %979 = vmatmul.mubr.f32.gmra.mxu0 %v884
      %v980 = vpop.f32.mrf.mxu0
      %v981 = vadd.f32 0.0, %v980
      %v982 = vpop.f32.mrf.mxu0
      %983 = vmatprep.mubr.f32.mxu0 0.0
      %984 = vmatmul.mubr.f32.gmra.mxu0 %v887
      %v985 = vpop.f32.mrf.mxu0
      %v986 = vadd.f32 0.0, %v985
      %v987 = vpop.f32.mrf.mxu0
      %988 = vmatprep.mubr.f32.mxu0 0.0
      %989 = vmatmul.mubr.f32.gmra.mxu0 %v890
      %v990 = vpop.f32.mrf.mxu0
      %v991 = vadd.f32 0.0, %v990
      %v992 = vpop.f32.mrf.mxu0
      %993 = vmatprep.mubr.f32.mxu0 0.0
      %994 = vmatmul.mubr.f32.gmra.mxu0 %v893
      %v995 = vpop.f32.mrf.mxu0
      %v996 = vadd.f32 0.0, %v995
      %v997 = vpop.f32.mrf.mxu0
      %998 = vmatprep.mubr.f32.mxu0 0.0
      %999 = vmatmul.mubr.f32.gmra.mxu0 %v896
      %v1000 = vpop.f32.mrf.mxu0
      %v1001 = vadd.f32 0.0, %v1000
      %v1002 = vpop.f32.mrf.mxu0
      %1003 = vmatprep.mubr.f32.mxu0 0.0
      %1004 = vmatmul.mubr.f32.gmra.mxu0 %v899
      %v1005 = vpop.f32.mrf.mxu0
      %v1006 = vadd.f32 0.0, %v1005
      %v1007 = vpop.f32.mrf.mxu0
      %1008 = vdwg.mxu0
      %v1009 = vadd.f32 %v858, %v971
      %v1010 = vadd.f32 %v859, %v976
      %v1011 = vadd.f32 %v860, %v981
      %v1012 = vadd.f32 %v861, %v986
      %v1013 = vadd.f32 %v862, %v991
      %v1014 = vadd.f32 %v863, %v996
      %v1015 = vadd.f32 %v864, %v1001
      %v1016 = vadd.f32 %v865, %v1006
      %s1017 = scalar_lea.vmem %s1, 20
      %v1018 = vld [vmem:[%s1017] sm:$0xf]
      %v1019 = vld [vmem:[%s717 + $0x1] sm:$0xff]
      %v1020 = vld [vmem:[%s717 + $0x11] sm:$0xff]
      %v1021 = vld [vmem:[%s717 + $0x21] sm:$0xff]
      %v1022 = vld [vmem:[%s717 + $0x31] sm:$0xff]
      %v1023 = vld [vmem:[%s717 + $0x41] sm:$0xff]
      %v1024 = vld [vmem:[%s717 + $0x51] sm:$0xff]
      %v1025 = vld [vmem:[%s717 + $0x61] sm:$0xff]
      %v1026 = vld [vmem:[%s717 + $0x71] sm:$0xff]
      %v1028 = vsel %vm299, %v1019, 0
      %v1031 = vsel %vm299, %v1020, 0
      %v1034 = vsel %vm299, %v1021, 0
      %v1037 = vsel %vm299, %v1022, 0
      %v1040 = vsel %vm299, %v1023, 0
      %v1043 = vsel %vm299, %v1024, 0
      %v1046 = vsel %vm299, %v1025, 0
      %v1049 = vsel %vm299, %v1026, 0
      %v1052 = vsel %vm324, %v1018, 0
      %1054 = vmatprep.subr.mxu0 0.0
      %1055 = vmatpush1.msra.mxu0 0.0
      %1056 = vmatprep.subr.mxu0 0.0
      %1057 = vmatpush1.msra.mxu0 0.0
      %1058 = vmatprep.subr.mxu0 0.0
      %1059 = vmatpush1.msra.mxu0 0.0
      %1060 = vmatprep.subr.mxu0 0.0
      %1061 = vmatpush1.msra.mxu0 0.0
      %1062 = vmatprep.subr.mxu0 0.0
      %1063 = vmatpush1.msra.mxu0 0.0
      %1064 = vmatprep.subr.mxu0 0.0
      %1065 = vmatpush1.msra.mxu0 0.0
      %1066 = vmatprep.subr.mxu0 0.0
      %1067 = vmatpush1.msra.mxu0 0.0
      %1068 = vmatprep.subr.mxu0 0.0
      %1069 = vmatpush1.msra.mxu0 0.0
      %1070 = vmatprep.subr.mxu0 0.0
      %1071 = vmatpush1.msra.mxu0 0.0
      %1072 = vmatprep.subr.mxu0 0.0
      %1073 = vmatpush1.msra.mxu0 0.0
      %1074 = vmatprep.subr.mxu0 0.0
      %1075 = vmatpush1.msra.mxu0 0.0
      %1076 = vmatprep.subr.mxu0 0.0
      %1077 = vmatpush1.msra.mxu0 0.0
      %1078 = vmatprep.subr.mxu0 0.0
      %1079 = vmatpush1.msra.mxu0 0.0
      %1080 = vmatprep.subr.mxu0 0.0
      %1081 = vmatpush1.msra.mxu0 0.0
      %1082 = vmatprep.subr.mxu0 0.0
      %1083 = vmatpush1.msra.mxu0 0.0
      %1084 = vmatprep.subr.mxu0 0.0
      %1085 = vmatpush1.msra.mxu0 %v1052
      %1086 = vmatprep.subr.mxu0 0.0
      %1087 = vmatpush2.msra.mxu0 0.0
      %1088 = vmatprep.subr.mxu0 0.0
      %1089 = vmatpush2.msra.mxu0 0.0
      %1090 = vmatprep.subr.mxu0 0.0
      %1091 = vmatpush2.msra.mxu0 0.0
      %1092 = vmatprep.subr.mxu0 0.0
      %1093 = vmatpush2.msra.mxu0 0.0
      %1094 = vmatprep.subr.mxu0 0.0
      %1095 = vmatpush2.msra.mxu0 0.0
      %1096 = vmatprep.subr.mxu0 0.0
      %1097 = vmatpush2.msra.mxu0 0.0
      %1098 = vmatprep.subr.mxu0 0.0
      %1099 = vmatpush2.msra.mxu0 0.0
      %1100 = vmatprep.subr.mxu0 0.0
      %1101 = vmatpush2.msra.mxu0 0.0
      %1102 = vmatprep.subr.mxu0 0.0
      %1103 = vmatpush2.msra.mxu0 0.0
      %1104 = vmatprep.subr.mxu0 0.0
      %1105 = vmatpush2.msra.mxu0 0.0
      %1106 = vmatprep.subr.mxu0 0.0
      %1107 = vmatpush2.msra.mxu0 0.0
      %1108 = vmatprep.subr.mxu0 0.0
      %1109 = vmatpush2.msra.mxu0 0.0
      %1110 = vmatprep.subr.mxu0 0.0
      %1111 = vmatpush2.msra.mxu0 0.0
      %1112 = vmatprep.subr.mxu0 0.0
      %1113 = vmatpush2.msra.mxu0 0.0
      %1114 = vmatprep.subr.mxu0 0.0
      %1115 = vmatpush2.msra.mxu0 0.0
      %1116 = vmatprep.subr.mxu0 0.0
      %1117 = vmatpush2.msra.mxu0 0.0
      %1118 = vmatprep.mubr.f32.mxu0 0.0
      %1119 = vmatmul.mubr.f32.gmra.mxu0 %v1028
      %v1120 = vpop.f32.mrf.mxu0
      %v1121 = vadd.f32 0.0, %v1120
      %v1122 = vpop.f32.mrf.mxu0
      %1123 = vmatprep.mubr.f32.mxu0 0.0
      %1124 = vmatmul.mubr.f32.gmra.mxu0 %v1031
      %v1125 = vpop.f32.mrf.mxu0
      %v1126 = vadd.f32 0.0, %v1125
      %v1127 = vpop.f32.mrf.mxu0
      %1128 = vmatprep.mubr.f32.mxu0 0.0
      %1129 = vmatmul.mubr.f32.gmra.mxu0 %v1034
      %v1130 = vpop.f32.mrf.mxu0
      %v1131 = vadd.f32 0.0, %v1130
      %v1132 = vpop.f32.mrf.mxu0
      %1133 = vmatprep.mubr.f32.mxu0 0.0
      %1134 = vmatmul.mubr.f32.gmra.mxu0 %v1037
      %v1135 = vpop.f32.mrf.mxu0
      %v1136 = vadd.f32 0.0, %v1135
      %v1137 = vpop.f32.mrf.mxu0
      %1138 = vmatprep.mubr.f32.mxu0 0.0
      %1139 = vmatmul.mubr.f32.gmra.mxu0 %v1040
      %v1140 = vpop.f32.mrf.mxu0
      %v1141 = vadd.f32 0.0, %v1140
      %v1142 = vpop.f32.mrf.mxu0
      %1143 = vmatprep.mubr.f32.mxu0 0.0
      %1144 = vmatmul.mubr.f32.gmra.mxu0 %v1043
      %v1145 = vpop.f32.mrf.mxu0
      %v1146 = vadd.f32 0.0, %v1145
      %v1147 = vpop.f32.mrf.mxu0
      %1148 = vmatprep.mubr.f32.mxu0 0.0
      %1149 = vmatmul.mubr.f32.gmra.mxu0 %v1046
      %v1150 = vpop.f32.mrf.mxu0
      %v1151 = vadd.f32 0.0, %v1150
      %v1152 = vpop.f32.mrf.mxu0
      %1153 = vmatprep.mubr.f32.mxu0 0.0
      %1154 = vmatmul.mubr.f32.gmra.mxu0 %v1049
      %v1155 = vpop.f32.mrf.mxu0
      %v1156 = vadd.f32 0.0, %v1155
      %v1157 = vpop.f32.mrf.mxu0
      %1158 = vdwg.mxu0
      %v1159 = vadd.f32 %v1009, %v1121
      %v1160 = vadd.f32 %v1010, %v1126
      %v1161 = vadd.f32 %v1011, %v1131
      %v1162 = vadd.f32 %v1012, %v1136
      %v1163 = vadd.f32 %v1013, %v1141
      %v1164 = vadd.f32 %v1014, %v1146
      %v1165 = vadd.f32 %v1015, %v1151
      %v1166 = vadd.f32 %v1016, %v1156
      %s1167 = scalar_lea.vmem %s1, 24
      %v1168 = vld [vmem:[%s1167] sm:$0xf]
      %s1169 = scalar_lea.vmem %s273, 16
      %v1170 = vld [vmem:[%s1169] sm:$0xff]
      %v1171 = vld [vmem:[%s1169 + $0x10] sm:$0xff]
      %v1172 = vld [vmem:[%s1169 + $0x20] sm:$0xff]
      %v1173 = vld [vmem:[%s1169 + $0x30] sm:$0xff]
      %v1174 = vld [vmem:[%s1169 + $0x40] sm:$0xff]
      %v1175 = vld [vmem:[%s1169 + $0x50] sm:$0xff]
      %v1176 = vld [vmem:[%s1169 + $0x60] sm:$0xff]
      %v1177 = vld [vmem:[%s1169 + $0x70] sm:$0xff]
      %v1179 = vsel %vm299, %v1170, 0
      %v1182 = vsel %vm299, %v1171, 0
      %v1185 = vsel %vm299, %v1172, 0
      %v1188 = vsel %vm299, %v1173, 0
      %v1191 = vsel %vm299, %v1174, 0
      %v1194 = vsel %vm299, %v1175, 0
      %v1197 = vsel %vm299, %v1176, 0
      %v1200 = vsel %vm299, %v1177, 0
      %v1203 = vsel %vm324, %v1168, 0
      %1205 = vmatprep.subr.mxu0 0.0
      %1206 = vmatpush1.msra.mxu0 0.0
      %1207 = vmatprep.subr.mxu0 0.0
      %1208 = vmatpush1.msra.mxu0 0.0
      %1209 = vmatprep.subr.mxu0 0.0
      %1210 = vmatpush1.msra.mxu0 0.0
      %1211 = vmatprep.subr.mxu0 0.0
      %1212 = vmatpush1.msra.mxu0 0.0
      %1213 = vmatprep.subr.mxu0 0.0
      %1214 = vmatpush1.msra.mxu0 0.0
      %1215 = vmatprep.subr.mxu0 0.0
      %1216 = vmatpush1.msra.mxu0 0.0
      %1217 = vmatprep.subr.mxu0 0.0
      %1218 = vmatpush1.msra.mxu0 0.0
      %1219 = vmatprep.subr.mxu0 0.0
      %1220 = vmatpush1.msra.mxu0 0.0
      %1221 = vmatprep.subr.mxu0 0.0
      %1222 = vmatpush1.msra.mxu0 0.0
      %1223 = vmatprep.subr.mxu0 0.0
      %1224 = vmatpush1.msra.mxu0 0.0
      %1225 = vmatprep.subr.mxu0 0.0
      %1226 = vmatpush1.msra.mxu0 0.0
      %1227 = vmatprep.subr.mxu0 0.0
      %1228 = vmatpush1.msra.mxu0 0.0
      %1229 = vmatprep.subr.mxu0 0.0
      %1230 = vmatpush1.msra.mxu0 0.0
      %1231 = vmatprep.subr.mxu0 0.0
      %1232 = vmatpush1.msra.mxu0 0.0
      %1233 = vmatprep.subr.mxu0 0.0
      %1234 = vmatpush1.msra.mxu0 0.0
      %1235 = vmatprep.subr.mxu0 0.0
      %1236 = vmatpush1.msra.mxu0 %v1203
      %1237 = vmatprep.subr.mxu0 0.0
      %1238 = vmatpush2.msra.mxu0 0.0
      %1239 = vmatprep.subr.mxu0 0.0
      %1240 = vmatpush2.msra.mxu0 0.0
      %1241 = vmatprep.subr.mxu0 0.0
      %1242 = vmatpush2.msra.mxu0 0.0
      %1243 = vmatprep.subr.mxu0 0.0
      %1244 = vmatpush2.msra.mxu0 0.0
      %1245 = vmatprep.subr.mxu0 0.0
      %1246 = vmatpush2.msra.mxu0 0.0
      %1247 = vmatprep.subr.mxu0 0.0
      %1248 = vmatpush2.msra.mxu0 0.0
      %1249 = vmatprep.subr.mxu0 0.0
      %1250 = vmatpush2.msra.mxu0 0.0
      %1251 = vmatprep.subr.mxu0 0.0
      %1252 = vmatpush2.msra.mxu0 0.0
      %1253 = vmatprep.subr.mxu0 0.0
      %1254 = vmatpush2.msra.mxu0 0.0
      %1255 = vmatprep.subr.mxu0 0.0
      %1256 = vmatpush2.msra.mxu0 0.0
      %1257 = vmatprep.subr.mxu0 0.0
      %1258 = vmatpush2.msra.mxu0 0.0
      %1259 = vmatprep.subr.mxu0 0.0
      %1260 = vmatpush2.msra.mxu0 0.0
      %1261 = vmatprep.subr.mxu0 0.0
      %1262 = vmatpush2.msra.mxu0 0.0
      %1263 = vmatprep.subr.mxu0 0.0
      %1264 = vmatpush2.msra.mxu0 0.0
      %1265 = vmatprep.subr.mxu0 0.0
      %1266 = vmatpush2.msra.mxu0 0.0
      %1267 = vmatprep.subr.mxu0 0.0
      %1268 = vmatpush2.msra.mxu0 0.0
      %1269 = vmatprep.mubr.f32.mxu0 0.0
      %1270 = vmatmul.mubr.f32.gmra.mxu0 %v1179
      %v1271 = vpop.f32.mrf.mxu0
      %v1272 = vadd.f32 0.0, %v1271
      %v1273 = vpop.f32.mrf.mxu0
      %1274 = vmatprep.mubr.f32.mxu0 0.0
      %1275 = vmatmul.mubr.f32.gmra.mxu0 %v1182
      %v1276 = vpop.f32.mrf.mxu0
      %v1277 = vadd.f32 0.0, %v1276
      %v1278 = vpop.f32.mrf.mxu0
      %1279 = vmatprep.mubr.f32.mxu0 0.0
      %1280 = vmatmul.mubr.f32.gmra.mxu0 %v1185
      %v1281 = vpop.f32.mrf.mxu0
      %v1282 = vadd.f32 0.0, %v1281
      %v1283 = vpop.f32.mrf.mxu0
      %1284 = vmatprep.mubr.f32.mxu0 0.0
      %1285 = vmatmul.mubr.f32.gmra.mxu0 %v1188
      %v1286 = vpop.f32.mrf.mxu0
      %v1287 = vadd.f32 0.0, %v1286
      %v1288 = vpop.f32.mrf.mxu0
      %1289 = vmatprep.mubr.f32.mxu0 0.0
      %1290 = vmatmul.mubr.f32.gmra.mxu0 %v1191
      %v1291 = vpop.f32.mrf.mxu0
      %v1292 = vadd.f32 0.0, %v1291
      %v1293 = vpop.f32.mrf.mxu0
      %1294 = vmatprep.mubr.f32.mxu0 0.0
      %1295 = vmatmul.mubr.f32.gmra.mxu0 %v1194
      %v1296 = vpop.f32.mrf.mxu0
      %v1297 = vadd.f32 0.0, %v1296
      %v1298 = vpop.f32.mrf.mxu0
      %1299 = vmatprep.mubr.f32.mxu0 0.0
      %1300 = vmatmul.mubr.f32.gmra.mxu0 %v1197
      %v1301 = vpop.f32.mrf.mxu0
      %v1302 = vadd.f32 0.0, %v1301
      %v1303 = vpop.f32.mrf.mxu0
      %1304 = vmatprep.mubr.f32.mxu0 0.0
      %1305 = vmatmul.mubr.f32.gmra.mxu0 %v1200
      %v1306 = vpop.f32.mrf.mxu0
      %v1307 = vadd.f32 0.0, %v1306
      %v1308 = vpop.f32.mrf.mxu0
      %1309 = vdwg.mxu0
      %v1310 = vadd.f32 %v1159, %v1272
      %v1311 = vadd.f32 %v1160, %v1277
      %v1312 = vadd.f32 %v1161, %v1282
      %v1313 = vadd.f32 %v1162, %v1287
      %v1314 = vadd.f32 %v1163, %v1292
      %v1315 = vadd.f32 %v1164, %v1297
      %v1316 = vadd.f32 %v1165, %v1302
      %v1317 = vadd.f32 %v1166, %v1307
      %s1318 = scalar_lea.vmem %s1, 28
      %v1319 = vld [vmem:[%s1318] sm:$0xf]
      %s1320 = scalar_lea.vmem %s273, 160
      %v1321 = vld [vmem:[%s1320] sm:$0xff]
      %v1322 = vld [vmem:[%s1320 + $0x10] sm:$0xff]
      %v1323 = vld [vmem:[%s1320 + $0x20] sm:$0xff]
      %v1324 = vld [vmem:[%s1320 + $0x30] sm:$0xff]
      %v1325 = vld [vmem:[%s1320 + $0x40] sm:$0xff]
      %v1326 = vld [vmem:[%s1320 + $0x50] sm:$0xff]
      %v1327 = vld [vmem:[%s1320 + $0x60] sm:$0xff]
      %v1328 = vld [vmem:[%s1320 + $0x70] sm:$0xff]
      %v1330 = vsel %vm299, %v1321, 0
      %v1333 = vsel %vm299, %v1322, 0
      %v1336 = vsel %vm299, %v1323, 0
      %v1339 = vsel %vm299, %v1324, 0
      %v1342 = vsel %vm299, %v1325, 0
      %v1345 = vsel %vm299, %v1326, 0
      %v1348 = vsel %vm299, %v1327, 0
      %v1351 = vsel %vm299, %v1328, 0
      %v1354 = vsel %vm324, %v1319, 0
      %1356 = vmatprep.subr.mxu0 0.0
      %1357 = vmatpush1.msra.mxu0 0.0
      %1358 = vmatprep.subr.mxu0 0.0
      %1359 = vmatpush1.msra.mxu0 0.0
      %1360 = vmatprep.subr.mxu0 0.0
      %1361 = vmatpush1.msra.mxu0 0.0
      %1362 = vmatprep.subr.mxu0 0.0
      %1363 = vmatpush1.msra.mxu0 0.0
      %1364 = vmatprep.subr.mxu0 0.0
      %1365 = vmatpush1.msra.mxu0 0.0
      %1366 = vmatprep.subr.mxu0 0.0
      %1367 = vmatpush1.msra.mxu0 0.0
      %1368 = vmatprep.subr.mxu0 0.0
      %1369 = vmatpush1.msra.mxu0 0.0
      %1370 = vmatprep.subr.mxu0 0.0
      %1371 = vmatpush1.msra.mxu0 0.0
      %1372 = vmatprep.subr.mxu0 0.0
      %1373 = vmatpush1.msra.mxu0 0.0
      %1374 = vmatprep.subr.mxu0 0.0
      %1375 = vmatpush1.msra.mxu0 0.0
      %1376 = vmatprep.subr.mxu0 0.0
      %1377 = vmatpush1.msra.mxu0 0.0
      %1378 = vmatprep.subr.mxu0 0.0
      %1379 = vmatpush1.msra.mxu0 0.0
      %1380 = vmatprep.subr.mxu0 0.0
      %1381 = vmatpush1.msra.mxu0 0.0
      %1382 = vmatprep.subr.mxu0 0.0
      %1383 = vmatpush1.msra.mxu0 0.0
      %1384 = vmatprep.subr.mxu0 0.0
      %1385 = vmatpush1.msra.mxu0 0.0
      %1386 = vmatprep.subr.mxu0 0.0
      %1387 = vmatpush1.msra.mxu0 %v1354
      %1388 = vmatprep.subr.mxu0 0.0
      %1389 = vmatpush2.msra.mxu0 0.0
      %1390 = vmatprep.subr.mxu0 0.0
      %1391 = vmatpush2.msra.mxu0 0.0
      %1392 = vmatprep.subr.mxu0 0.0
      %1393 = vmatpush2.msra.mxu0 0.0
      %1394 = vmatprep.subr.mxu0 0.0
      %1395 = vmatpush2.msra.mxu0 0.0
      %1396 = vmatprep.subr.mxu0 0.0
      %1397 = vmatpush2.msra.mxu0 0.0
      %1398 = vmatprep.subr.mxu0 0.0
      %1399 = vmatpush2.msra.mxu0 0.0
      %1400 = vmatprep.subr.mxu0 0.0
      %1401 = vmatpush2.msra.mxu0 0.0
      %1402 = vmatprep.subr.mxu0 0.0
      %1403 = vmatpush2.msra.mxu0 0.0
      %1404 = vmatprep.subr.mxu0 0.0
      %1405 = vmatpush2.msra.mxu0 0.0
      %1406 = vmatprep.subr.mxu0 0.0
      %1407 = vmatpush2.msra.mxu0 0.0
      %1408 = vmatprep.subr.mxu0 0.0
      %1409 = vmatpush2.msra.mxu0 0.0
      %1410 = vmatprep.subr.mxu0 0.0
      %1411 = vmatpush2.msra.mxu0 0.0
      %1412 = vmatprep.subr.mxu0 0.0
      %1413 = vmatpush2.msra.mxu0 0.0
      %1414 = vmatprep.subr.mxu0 0.0
      %1415 = vmatpush2.msra.mxu0 0.0
      %1416 = vmatprep.subr.mxu0 0.0
      %1417 = vmatpush2.msra.mxu0 0.0
      %1418 = vmatprep.subr.mxu0 0.0
      %1419 = vmatpush2.msra.mxu0 0.0
      %1420 = vmatprep.mubr.f32.mxu0 0.0
      %1421 = vmatmul.mubr.f32.gmra.mxu0 %v1330
      %v1422 = vpop.f32.mrf.mxu0
      %v1423 = vadd.f32 0.0, %v1422
      %v1424 = vpop.f32.mrf.mxu0
      %1425 = vmatprep.mubr.f32.mxu0 0.0
      %1426 = vmatmul.mubr.f32.gmra.mxu0 %v1333
      %v1427 = vpop.f32.mrf.mxu0
      %v1428 = vadd.f32 0.0, %v1427
      %v1429 = vpop.f32.mrf.mxu0
      %1430 = vmatprep.mubr.f32.mxu0 0.0
      %1431 = vmatmul.mubr.f32.gmra.mxu0 %v1336
      %v1432 = vpop.f32.mrf.mxu0
      %v1433 = vadd.f32 0.0, %v1432
      %v1434 = vpop.f32.mrf.mxu0
      %1435 = vmatprep.mubr.f32.mxu0 0.0
      %1436 = vmatmul.mubr.f32.gmra.mxu0 %v1339
      %v1437 = vpop.f32.mrf.mxu0
      %v1438 = vadd.f32 0.0, %v1437
      %v1439 = vpop.f32.mrf.mxu0
      %1440 = vmatprep.mubr.f32.mxu0 0.0
      %1441 = vmatmul.mubr.f32.gmra.mxu0 %v1342
      %v1442 = vpop.f32.mrf.mxu0
      %v1443 = vadd.f32 0.0, %v1442
      %v1444 = vpop.f32.mrf.mxu0
      %1445 = vmatprep.mubr.f32.mxu0 0.0
      %1446 = vmatmul.mubr.f32.gmra.mxu0 %v1345
      %v1447 = vpop.f32.mrf.mxu0
      %v1448 = vadd.f32 0.0, %v1447
      %v1449 = vpop.f32.mrf.mxu0
      %1450 = vmatprep.mubr.f32.mxu0 0.0
      %1451 = vmatmul.mubr.f32.gmra.mxu0 %v1348
      %v1452 = vpop.f32.mrf.mxu0
      %v1453 = vadd.f32 0.0, %v1452
      %v1454 = vpop.f32.mrf.mxu0
      %1455 = vmatprep.mubr.f32.mxu0 0.0
      %1456 = vmatmul.mubr.f32.gmra.mxu0 %v1351
      %v1457 = vpop.f32.mrf.mxu0
      %v1458 = vadd.f32 0.0, %v1457
      %v1459 = vpop.f32.mrf.mxu0
      %1460 = vdwg.mxu0
      %v1461 = vadd.f32 %v1310, %v1423
      %v1462 = vadd.f32 %v1311, %v1428
      %v1463 = vadd.f32 %v1312, %v1433
      %v1464 = vadd.f32 %v1313, %v1438
      %v1465 = vadd.f32 %v1314, %v1443
      %v1466 = vadd.f32 %v1315, %v1448
      %v1467 = vadd.f32 %v1316, %v1453
      %v1468 = vadd.f32 %v1317, %v1458
      %s1469 = scalar_lea.vmem %s1, 32
      %v1470 = vld [vmem:[%s1469] sm:$0xf]
      %v1471 = vld [vmem:[%s1169 + $0x1] sm:$0xff]
      %v1472 = vld [vmem:[%s1169 + $0x11] sm:$0xff]
      %v1473 = vld [vmem:[%s1169 + $0x21] sm:$0xff]
      %v1474 = vld [vmem:[%s1169 + $0x31] sm:$0xff]
      %v1475 = vld [vmem:[%s1169 + $0x41] sm:$0xff]
      %v1476 = vld [vmem:[%s1169 + $0x51] sm:$0xff]
      %v1477 = vld [vmem:[%s1169 + $0x61] sm:$0xff]
      %v1478 = vld [vmem:[%s1169 + $0x71] sm:$0xff]
      %v1480 = vsel %vm299, %v1471, 0
      %v1483 = vsel %vm299, %v1472, 0
      %v1486 = vsel %vm299, %v1473, 0
      %v1489 = vsel %vm299, %v1474, 0
      %v1492 = vsel %vm299, %v1475, 0
      %v1495 = vsel %vm299, %v1476, 0
      %v1498 = vsel %vm299, %v1477, 0
      %v1501 = vsel %vm299, %v1478, 0
      %v1504 = vsel %vm324, %v1470, 0
      %1506 = vmatprep.subr.mxu0 0.0
      %1507 = vmatpush1.msra.mxu0 0.0
      %1508 = vmatprep.subr.mxu0 0.0
      %1509 = vmatpush1.msra.mxu0 0.0
      %1510 = vmatprep.subr.mxu0 0.0
      %1511 = vmatpush1.msra.mxu0 0.0
      %1512 = vmatprep.subr.mxu0 0.0
      %1513 = vmatpush1.msra.mxu0 0.0
      %1514 = vmatprep.subr.mxu0 0.0
      %1515 = vmatpush1.msra.mxu0 0.0
      %1516 = vmatprep.subr.mxu0 0.0
      %1517 = vmatpush1.msra.mxu0 0.0
      %1518 = vmatprep.subr.mxu0 0.0
      %1519 = vmatpush1.msra.mxu0 0.0
      %1520 = vmatprep.subr.mxu0 0.0
      %1521 = vmatpush1.msra.mxu0 0.0
      %1522 = vmatprep.subr.mxu0 0.0
      %1523 = vmatpush1.msra.mxu0 0.0
      %1524 = vmatprep.subr.mxu0 0.0
      %1525 = vmatpush1.msra.mxu0 0.0
      %1526 = vmatprep.subr.mxu0 0.0
      %1527 = vmatpush1.msra.mxu0 0.0
      %1528 = vmatprep.subr.mxu0 0.0
      %1529 = vmatpush1.msra.mxu0 0.0
      %1530 = vmatprep.subr.mxu0 0.0
      %1531 = vmatpush1.msra.mxu0 0.0
      %1532 = vmatprep.subr.mxu0 0.0
      %1533 = vmatpush1.msra.mxu0 0.0
      %1534 = vmatprep.subr.mxu0 0.0
      %1535 = vmatpush1.msra.mxu0 0.0
      %1536 = vmatprep.subr.mxu0 0.0
      %1537 = vmatpush1.msra.mxu0 %v1504
      %1538 = vmatprep.subr.mxu0 0.0
      %1539 = vmatpush2.msra.mxu0 0.0
      %1540 = vmatprep.subr.mxu0 0.0
      %1541 = vmatpush2.msra.mxu0 0.0
      %1542 = vmatprep.subr.mxu0 0.0
      %1543 = vmatpush2.msra.mxu0 0.0
      %1544 = vmatprep.subr.mxu0 0.0
      %1545 = vmatpush2.msra.mxu0 0.0
      %1546 = vmatprep.subr.mxu0 0.0
      %1547 = vmatpush2.msra.mxu0 0.0
      %1548 = vmatprep.subr.mxu0 0.0
      %1549 = vmatpush2.msra.mxu0 0.0
      %1550 = vmatprep.subr.mxu0 0.0
      %1551 = vmatpush2.msra.mxu0 0.0
      %1552 = vmatprep.subr.mxu0 0.0
      %1553 = vmatpush2.msra.mxu0 0.0
      %1554 = vmatprep.subr.mxu0 0.0
      %1555 = vmatpush2.msra.mxu0 0.0
      %1556 = vmatprep.subr.mxu0 0.0
      %1557 = vmatpush2.msra.mxu0 0.0
      %1558 = vmatprep.subr.mxu0 0.0
      %1559 = vmatpush2.msra.mxu0 0.0
      %1560 = vmatprep.subr.mxu0 0.0
      %1561 = vmatpush2.msra.mxu0 0.0
      %1562 = vmatprep.subr.mxu0 0.0
      %1563 = vmatpush2.msra.mxu0 0.0
      %1564 = vmatprep.subr.mxu0 0.0
      %1565 = vmatpush2.msra.mxu0 0.0
      %1566 = vmatprep.subr.mxu0 0.0
      %1567 = vmatpush2.msra.mxu0 0.0
      %1568 = vmatprep.subr.mxu0 0.0
      %1569 = vmatpush2.msra.mxu0 0.0
      %1570 = vmatprep.mubr.f32.mxu0 0.0
      %1571 = vmatmul.mubr.f32.gmra.mxu0 %v1480
      %v1572 = vpop.f32.mrf.mxu0
      %v1573 = vadd.f32 0.0, %v1572
      %v1574 = vpop.f32.mrf.mxu0
      %1575 = vmatprep.mubr.f32.mxu0 0.0
      %1576 = vmatmul.mubr.f32.gmra.mxu0 %v1483
      %v1577 = vpop.f32.mrf.mxu0
      %v1578 = vadd.f32 0.0, %v1577
      %v1579 = vpop.f32.mrf.mxu0
      %1580 = vmatprep.mubr.f32.mxu0 0.0
      %1581 = vmatmul.mubr.f32.gmra.mxu0 %v1486
      %v1582 = vpop.f32.mrf.mxu0
      %v1583 = vadd.f32 0.0, %v1582
      %v1584 = vpop.f32.mrf.mxu0
      %1585 = vmatprep.mubr.f32.mxu0 0.0
      %1586 = vmatmul.mubr.f32.gmra.mxu0 %v1489
      %v1587 = vpop.f32.mrf.mxu0
      %v1588 = vadd.f32 0.0, %v1587
      %v1589 = vpop.f32.mrf.mxu0
      %1590 = vmatprep.mubr.f32.mxu0 0.0
      %1591 = vmatmul.mubr.f32.gmra.mxu0 %v1492
      %v1592 = vpop.f32.mrf.mxu0
      %v1593 = vadd.f32 0.0, %v1592
      %v1594 = vpop.f32.mrf.mxu0
      %1595 = vmatprep.mubr.f32.mxu0 0.0
      %1596 = vmatmul.mubr.f32.gmra.mxu0 %v1495
      %v1597 = vpop.f32.mrf.mxu0
      %v1598 = vadd.f32 0.0, %v1597
      %v1599 = vpop.f32.mrf.mxu0
      %1600 = vmatprep.mubr.f32.mxu0 0.0
      %1601 = vmatmul.mubr.f32.gmra.mxu0 %v1498
      %v1602 = vpop.f32.mrf.mxu0
      %v1603 = vadd.f32 0.0, %v1602
      %v1604 = vpop.f32.mrf.mxu0
      %1605 = vmatprep.mubr.f32.mxu0 0.0
      %1606 = vmatmul.mubr.f32.gmra.mxu0 %v1501
      %v1607 = vpop.f32.mrf.mxu0
      %v1608 = vadd.f32 0.0, %v1607
      %v1609 = vpop.f32.mrf.mxu0
      %1610 = vdwg.mxu0
      %v1611 = vadd.f32 %v1461, %v1573
      %v1612 = vadd.f32 %v1462, %v1578
      %v1613 = vadd.f32 %v1463, %v1583
      %v1614 = vadd.f32 %v1464, %v1588
      %v1615 = vadd.f32 %v1465, %v1593
      %v1616 = vadd.f32 %v1466, %v1598
      %v1617 = vadd.f32 %v1467, %v1603
      %v1618 = vadd.f32 %v1468, %v1608
      %v1619 = vld [vmem:[%s2] sm:$0x1]
      %v1621 = vlaneseq
      %v1622 = vshrl.u32 %v1621, 7
      %v1623 = vsub.s32 0, %v1622
      %v1624 = vrot.slane %v1619, %v1623
      %v1626 = vadd.f32 %v1611, %v1624
      %v1627 = vadd.f32 %v1612, %v1624
      %v1628 = vadd.f32 %v1613, %v1624
      %v1629 = vadd.f32 %v1614, %v1624
      %v1630 = vadd.f32 %v1615, %v1624
      %v1631 = vadd.f32 %v1616, %v1624
      %v1632 = vadd.f32 %v1617, %v1624
      %v1633 = vadd.f32 %v1618, %v1624
      %v1634 = vmax.f32 %v1626, 0.0
      %v1635 = vmax.f32 %v1627, 0.0
      %v1636 = vmax.f32 %v1628, 0.0
      %v1637 = vmax.f32 %v1629, 0.0
      %v1638 = vmax.f32 %v1630, 0.0
      %v1639 = vmax.f32 %v1631, 0.0
      %v1640 = vmax.f32 %v1632, 0.0
      %v1641 = vmax.f32 %v1633, 0.0
      %v1642 = vld [vmem:[%s5] sm:$0xf]
      %v1643 = vld [vmem:[%s6] sm:$0x1]
      %v1645 = vlaneseq
      %v1646 = vshrl.u32 %v1645, 7
      %v1647 = vsub.s32 0, %v1646
      %v1648 = vrot.slane %v1643, %v1647
      %v1651 = vsel %vm324, %v1642, 0
      %1653 = vmatprep.subr.mxu0 0.0
      %1654 = vmatpush1.msra.mxu0 0.0
      %1655 = vmatprep.subr.mxu0 0.0
      %1656 = vmatpush1.msra.mxu0 0.0
      %1657 = vmatprep.subr.mxu0 0.0
      %1658 = vmatpush1.msra.mxu0 0.0
      %1659 = vmatprep.subr.mxu0 0.0
      %1660 = vmatpush1.msra.mxu0 0.0
      %1661 = vmatprep.subr.mxu0 0.0
      %1662 = vmatpush1.msra.mxu0 0.0
      %1663 = vmatprep.subr.mxu0 0.0
      %1664 = vmatpush1.msra.mxu0 0.0
      %1665 = vmatprep.subr.mxu0 0.0
      %1666 = vmatpush1.msra.mxu0 0.0
      %1667 = vmatprep.subr.mxu0 0.0
      %1668 = vmatpush1.msra.mxu0 0.0
      %1669 = vmatprep.subr.mxu0 0.0
      %1670 = vmatpush1.msra.mxu0 0.0
      %1671 = vmatprep.subr.mxu0 0.0
      %1672 = vmatpush1.msra.mxu0 0.0
      %1673 = vmatprep.subr.mxu0 0.0
      %1674 = vmatpush1.msra.mxu0 0.0
      %1675 = vmatprep.subr.mxu0 0.0
      %1676 = vmatpush1.msra.mxu0 0.0
      %1677 = vmatprep.subr.mxu0 0.0
      %1678 = vmatpush1.msra.mxu0 0.0
      %1679 = vmatprep.subr.mxu0 0.0
      %1680 = vmatpush1.msra.mxu0 0.0
      %1681 = vmatprep.subr.mxu0 0.0
      %1682 = vmatpush1.msra.mxu0 0.0
      %1683 = vmatprep.subr.mxu0 0.0
      %1684 = vmatpush1.msra.mxu0 %v1651
      %1685 = vmatprep.subr.mxu0 0.0
      %1686 = vmatpush2.msra.mxu0 0.0
      %1687 = vmatprep.subr.mxu0 0.0
      %1688 = vmatpush2.msra.mxu0 0.0
      %1689 = vmatprep.subr.mxu0 0.0
      %1690 = vmatpush2.msra.mxu0 0.0
      %1691 = vmatprep.subr.mxu0 0.0
      %1692 = vmatpush2.msra.mxu0 0.0
      %1693 = vmatprep.subr.mxu0 0.0
      %1694 = vmatpush2.msra.mxu0 0.0
      %1695 = vmatprep.subr.mxu0 0.0
      %1696 = vmatpush2.msra.mxu0 0.0
      %1697 = vmatprep.subr.mxu0 0.0
      %1698 = vmatpush2.msra.mxu0 0.0
      %1699 = vmatprep.subr.mxu0 0.0
      %1700 = vmatpush2.msra.mxu0 0.0
      %1701 = vmatprep.subr.mxu0 0.0
      %1702 = vmatpush2.msra.mxu0 0.0
      %1703 = vmatprep.subr.mxu0 0.0
      %1704 = vmatpush2.msra.mxu0 0.0
      %1705 = vmatprep.subr.mxu0 0.0
      %1706 = vmatpush2.msra.mxu0 0.0
      %1707 = vmatprep.subr.mxu0 0.0
      %1708 = vmatpush2.msra.mxu0 0.0
      %1709 = vmatprep.subr.mxu0 0.0
      %1710 = vmatpush2.msra.mxu0 0.0
      %1711 = vmatprep.subr.mxu0 0.0
      %1712 = vmatpush2.msra.mxu0 0.0
      %1713 = vmatprep.subr.mxu0 0.0
      %1714 = vmatpush2.msra.mxu0 0.0
      %1715 = vmatprep.subr.mxu0 0.0
      %1716 = vmatpush2.msra.mxu0 0.0
      %1717 = vmatprep.mubr.f32.mxu0 0.0
      %1718 = vmatmul.mubr.f32.gmra.mxu0 %v878
      %v1719 = vpop.f32.mrf.mxu0
      %v1720 = vadd.f32 %v1648, %v1719
      %v1721 = vpop.f32.mrf.mxu0
      %1722 = vmatprep.mubr.f32.mxu0 0.0
      %1723 = vmatmul.mubr.f32.gmra.mxu0 %v881
      %v1724 = vpop.f32.mrf.mxu0
      %v1725 = vadd.f32 %v1648, %v1724
      %v1726 = vpop.f32.mrf.mxu0
      %1727 = vmatprep.mubr.f32.mxu0 0.0
      %1728 = vmatmul.mubr.f32.gmra.mxu0 %v884
      %v1729 = vpop.f32.mrf.mxu0
      %v1730 = vadd.f32 %v1648, %v1729
      %v1731 = vpop.f32.mrf.mxu0
      %1732 = vmatprep.mubr.f32.mxu0 0.0
      %1733 = vmatmul.mubr.f32.gmra.mxu0 %v887
      %v1734 = vpop.f32.mrf.mxu0
      %v1735 = vadd.f32 %v1648, %v1734
      %v1736 = vpop.f32.mrf.mxu0
      %1737 = vmatprep.mubr.f32.mxu0 0.0
      %1738 = vmatmul.mubr.f32.gmra.mxu0 %v890
      %v1739 = vpop.f32.mrf.mxu0
      %v1740 = vadd.f32 %v1648, %v1739
      %v1741 = vpop.f32.mrf.mxu0
      %1742 = vmatprep.mubr.f32.mxu0 0.0
      %1743 = vmatmul.mubr.f32.gmra.mxu0 %v893
      %v1744 = vpop.f32.mrf.mxu0
      %v1745 = vadd.f32 %v1648, %v1744
      %v1746 = vpop.f32.mrf.mxu0
      %1747 = vmatprep.mubr.f32.mxu0 0.0
      %1748 = vmatmul.mubr.f32.gmra.mxu0 %v896
      %v1749 = vpop.f32.mrf.mxu0
      %v1750 = vadd.f32 %v1648, %v1749
      %v1751 = vpop.f32.mrf.mxu0
      %1752 = vmatprep.mubr.f32.mxu0 0.0
      %1753 = vmatmul.mubr.f32.gmra.mxu0 %v899
      %v1754 = vpop.f32.mrf.mxu0
      %v1755 = vadd.f32 %v1648, %v1754
      %v1756 = vpop.f32.mrf.mxu0
      %1757 = vdwg.mxu0
      %vm1758 = vcmask 64512
      %1759 = vst.msk [vmem:[#allocation2] sm:$0xff] %vm1758, 0.0
      %1760 = vst.msk [vmem:[#allocation2 + $0x8] sm:$0xff] %vm1758, 0.0
      %s1761 = scalar_lea.vmem [#allocation2], 144
      %1762 = vst.msk [vmem:[%s1761] sm:$0xff] %vm1758, 0.0
      %1763 = vst.msk [vmem:[%s1761 + $0x8] sm:$0xff] %vm1758, 0.0
      %vm1764 = vcmask 57344
      %1765 = vst.msk [vmem:[#allocation2] sm:$0x1] %vm1764, 0.0
      %1766 = vst.msk [vmem:[#allocation2 + $0x10] sm:$0x1] %vm1764, 0.0
      %1767 = vst.msk [vmem:[#allocation2 + $0x20] sm:$0x1] %vm1764, 0.0
      %1768 = vst.msk [vmem:[#allocation2 + $0x30] sm:$0x1] %vm1764, 0.0
      %1769 = vst.msk [vmem:[#allocation2 + $0x40] sm:$0x1] %vm1764, 0.0
      %1770 = vst.msk [vmem:[#allocation2 + $0x50] sm:$0x1] %vm1764, 0.0
      %1771 = vst.msk [vmem:[#allocation2 + $0x60] sm:$0x1] %vm1764, 0.0
      %1772 = vst.msk [vmem:[#allocation2 + $0x70] sm:$0x1] %vm1764, 0.0
      %1773 = vst.msk [vmem:[#allocation2 + $0x80] sm:$0x1] %vm1764, 0.0
      %1774 = vst.msk [vmem:[#allocation2 + $0x90] sm:$0x1] %vm1764, 0.0
      %1775 = vst.msk [vmem:[#allocation2 + $0x9] sm:$0x1] %vm1764, 0.0
      %1776 = vst.msk [vmem:[#allocation2 + $0x19] sm:$0x1] %vm1764, 0.0
      %1777 = vst.msk [vmem:[#allocation2 + $0x29] sm:$0x1] %vm1764, 0.0
      %1778 = vst.msk [vmem:[#allocation2 + $0x39] sm:$0x1] %vm1764, 0.0
      %1779 = vst.msk [vmem:[#allocation2 + $0x49] sm:$0x1] %vm1764, 0.0
      %1780 = vst.msk [vmem:[#allocation2 + $0x59] sm:$0x1] %vm1764, 0.0
      %1781 = vst.msk [vmem:[#allocation2 + $0x69] sm:$0x1] %vm1764, 0.0
      %1782 = vst.msk [vmem:[#allocation2 + $0x79] sm:$0x1] %vm1764, 0.0
      %1783 = vst.msk [vmem:[#allocation2 + $0x89] sm:$0x1] %vm1764, 0.0
      %1784 = vst.msk [vmem:[#allocation2 + $0x99] sm:$0x1] %vm1764, 0.0
      %s1785 = scalar_lea.vmem [#allocation2], 16
      %1786 = vst.msk [vmem:[%s1785 + $0x1] sm:$0xff] %vm1758, %v1634
      %1787 = vst.msk [vmem:[%s1785 + $0x11] sm:$0xff] %vm1758, %v1635
      %1788 = vst.msk [vmem:[%s1785 + $0x21] sm:$0xff] %vm1758, %v1636
      %1789 = vst.msk [vmem:[%s1785 + $0x31] sm:$0xff] %vm1758, %v1637
      %1790 = vst.msk [vmem:[%s1785 + $0x41] sm:$0xff] %vm1758, %v1638
      %1791 = vst.msk [vmem:[%s1785 + $0x51] sm:$0xff] %vm1758, %v1639
      %1792 = vst.msk [vmem:[%s1785 + $0x61] sm:$0xff] %vm1758, %v1640
      %1793 = vst.msk [vmem:[%s1785 + $0x71] sm:$0xff] %vm1758, %v1641
      %v1794 = vld [vmem:[%s3] sm:$0xff]
      %v1795 = vld [vmem:[#allocation2] sm:$0xff]
      %v1796 = vld [vmem:[#allocation2 + $0x10] sm:$0xff]
      %v1797 = vld [vmem:[#allocation2 + $0x20] sm:$0xff]
      %v1798 = vld [vmem:[#allocation2 + $0x30] sm:$0xff]
      %v1799 = vld [vmem:[#allocation2 + $0x40] sm:$0xff]
      %v1800 = vld [vmem:[#allocation2 + $0x50] sm:$0xff]
      %v1801 = vld [vmem:[#allocation2 + $0x60] sm:$0xff]
      %v1802 = vld [vmem:[#allocation2 + $0x70] sm:$0xff]
      %s1803 = scalar_lea.vmem %s3, 8
      %v1804 = vld [vmem:[%s1803] sm:$0xff]
      %v1805 = vld [vmem:[#allocation2 + $0x1] sm:$0xff]
      %v1806 = vld [vmem:[#allocation2 + $0x11] sm:$0xff]
      %v1807 = vld [vmem:[#allocation2 + $0x21] sm:$0xff]
      %v1808 = vld [vmem:[#allocation2 + $0x31] sm:$0xff]
      %v1809 = vld [vmem:[#allocation2 + $0x41] sm:$0xff]
      %v1810 = vld [vmem:[#allocation2 + $0x51] sm:$0xff]
      %v1811 = vld [vmem:[#allocation2 + $0x61] sm:$0xff]
      %v1812 = vld [vmem:[#allocation2 + $0x71] sm:$0xff]
      %v1814 = vsel %vm1758, %v1805, 0
      %v1817 = vsel %vm1758, %v1806, 0
      %v1820 = vsel %vm1758, %v1807, 0
      %v1823 = vsel %vm1758, %v1808, 0
      %v1826 = vsel %vm1758, %v1809, 0
      %v1829 = vsel %vm1758, %v1810, 0
      %v1832 = vsel %vm1758, %v1811, 0
      %v1835 = vsel %vm1758, %v1812, 0
      %1837 = vmatprep.subr.mxu0 0.0
      %1838 = vmatpush1.msra.mxu0 0.0
      %1839 = vmatprep.subr.mxu0 0.0
      %1840 = vmatpush1.msra.mxu0 0.0
      %1841 = vmatprep.subr.mxu0 0.0
      %1842 = vmatpush1.msra.mxu0 0.0
      %1843 = vmatprep.subr.mxu0 0.0
      %1844 = vmatpush1.msra.mxu0 0.0
      %1845 = vmatprep.subr.mxu0 0.0
      %1846 = vmatpush1.msra.mxu0 0.0
      %1847 = vmatprep.subr.mxu0 0.0
      %1848 = vmatpush1.msra.mxu0 0.0
      %1849 = vmatprep.subr.mxu0 0.0
      %1850 = vmatpush1.msra.mxu0 0.0
      %1851 = vmatprep.subr.mxu0 0.0
      %1852 = vmatpush1.msra.mxu0 0.0
      %1853 = vmatprep.subr.mxu0 0.0
      %1854 = vmatpush1.msra.mxu0 0.0
      %1855 = vmatprep.subr.mxu0 0.0
      %1856 = vmatpush1.msra.mxu0 0.0
      %1857 = vmatprep.subr.mxu0 0.0
      %1858 = vmatpush1.msra.mxu0 0.0
      %1859 = vmatprep.subr.mxu0 0.0
      %1860 = vmatpush1.msra.mxu0 0.0
      %1861 = vmatprep.subr.mxu0 0.0
      %1862 = vmatpush1.msra.mxu0 0.0
      %1863 = vmatprep.subr.mxu0 0.0
      %1864 = vmatpush1.msra.mxu0 0.0
      %1865 = vmatprep.subr.mxu0 0.0
      %1866 = vmatpush1.msra.mxu0 0.0
      %1867 = vmatprep.subr.mxu0 0.0
      %1868 = vmatpush1.msra.mxu0 %v1804
      %1869 = vmatprep.subr.mxu0 0.0
      %1870 = vmatpush2.msra.mxu0 0.0
      %1871 = vmatprep.subr.mxu0 0.0
      %1872 = vmatpush2.msra.mxu0 0.0
      %1873 = vmatprep.subr.mxu0 0.0
      %1874 = vmatpush2.msra.mxu0 0.0
      %1875 = vmatprep.subr.mxu0 0.0
      %1876 = vmatpush2.msra.mxu0 0.0
      %1877 = vmatprep.subr.mxu0 0.0
      %1878 = vmatpush2.msra.mxu0 0.0
      %1879 = vmatprep.subr.mxu0 0.0
      %1880 = vmatpush2.msra.mxu0 0.0
      %1881 = vmatprep.subr.mxu0 0.0
      %1882 = vmatpush2.msra.mxu0 0.0
      %1883 = vmatprep.subr.mxu0 0.0
      %1884 = vmatpush2.msra.mxu0 0.0
      %1885 = vmatprep.subr.mxu0 0.0
      %1886 = vmatpush2.msra.mxu0 0.0
      %1887 = vmatprep.subr.mxu0 0.0
      %1888 = vmatpush2.msra.mxu0 0.0
      %1889 = vmatprep.subr.mxu0 0.0
      %1890 = vmatpush2.msra.mxu0 0.0
      %1891 = vmatprep.subr.mxu0 0.0
      %1892 = vmatpush2.msra.mxu0 0.0
      %1893 = vmatprep.subr.mxu0 0.0
      %1894 = vmatpush2.msra.mxu0 0.0
      %1895 = vmatprep.subr.mxu0 0.0
      %1896 = vmatpush2.msra.mxu0 0.0
      %1897 = vmatprep.subr.mxu0 0.0
      %1898 = vmatpush2.msra.mxu0 0.0
      %1899 = vmatprep.subr.mxu0 0.0
      %1900 = vmatpush2.msra.mxu0 0.0
      %1901 = vmatprep.mubr.f32.mxu0 0.0
      %1902 = vmatmul.mubr.f32.gmra.mxu0 %v1814
      %v1903 = vpop.f32.mrf.mxu0
      %v1904 = vadd.f32 0.0, %v1903
      %v1905 = vpop.f32.mrf.mxu0
      %1906 = vmatprep.mubr.f32.mxu0 0.0
      %1907 = vmatmul.mubr.f32.gmra.mxu0 %v1817
      %v1908 = vpop.f32.mrf.mxu0
      %v1909 = vadd.f32 0.0, %v1908
      %v1910 = vpop.f32.mrf.mxu0
      %1911 = vmatprep.mubr.f32.mxu0 0.0
      %1912 = vmatmul.mubr.f32.gmra.mxu0 %v1820
      %v1913 = vpop.f32.mrf.mxu0
      %v1914 = vadd.f32 0.0, %v1913
      %v1915 = vpop.f32.mrf.mxu0
      %1916 = vmatprep.mubr.f32.mxu0 0.0
      %1917 = vmatmul.mubr.f32.gmra.mxu0 %v1823
      %v1918 = vpop.f32.mrf.mxu0
      %v1919 = vadd.f32 0.0, %v1918
      %v1920 = vpop.f32.mrf.mxu0
      %1921 = vmatprep.mubr.f32.mxu0 0.0
      %1922 = vmatmul.mubr.f32.gmra.mxu0 %v1826
      %v1923 = vpop.f32.mrf.mxu0
      %v1924 = vadd.f32 0.0, %v1923
      %v1925 = vpop.f32.mrf.mxu0
      %1926 = vmatprep.mubr.f32.mxu0 0.0
      %1927 = vmatmul.mubr.f32.gmra.mxu0 %v1829
      %v1928 = vpop.f32.mrf.mxu0
      %v1929 = vadd.f32 0.0, %v1928
      %v1930 = vpop.f32.mrf.mxu0
      %1931 = vmatprep.mubr.f32.mxu0 0.0
      %1932 = vmatmul.mubr.f32.gmra.mxu0 %v1832
      %v1933 = vpop.f32.mrf.mxu0
      %v1934 = vadd.f32 0.0, %v1933
      %v1935 = vpop.f32.mrf.mxu0
      %1936 = vmatprep.mubr.f32.mxu0 0.0
      %1937 = vmatmul.mubr.f32.gmra.mxu0 %v1835
      %v1938 = vpop.f32.mrf.mxu0
      %v1939 = vadd.f32 0.0, %v1938
      %v1940 = vpop.f32.mrf.mxu0
      %1941 = vdwg.mxu0
      %v1943 = vsel %vm1758, %v1795, 0
      %v1946 = vsel %vm1758, %v1796, 0
      %v1949 = vsel %vm1758, %v1797, 0
      %v1952 = vsel %vm1758, %v1798, 0
      %v1955 = vsel %vm1758, %v1799, 0
      %v1958 = vsel %vm1758, %v1800, 0
      %v1961 = vsel %vm1758, %v1801, 0
      %v1964 = vsel %vm1758, %v1802, 0
      %1966 = vmatprep.subr.mxu0 0.0
      %1967 = vmatpush1.msra.mxu0 0.0
      %1968 = vmatprep.subr.mxu0 0.0
      %1969 = vmatpush1.msra.mxu0 0.0
      %1970 = vmatprep.subr.mxu0 0.0
      %1971 = vmatpush1.msra.mxu0 0.0
      %1972 = vmatprep.subr.mxu0 0.0
      %1973 = vmatpush1.msra.mxu0 0.0
      %1974 = vmatprep.subr.mxu0 0.0
      %1975 = vmatpush1.msra.mxu0 0.0
      %1976 = vmatprep.subr.mxu0 0.0
      %1977 = vmatpush1.msra.mxu0 0.0
      %1978 = vmatprep.subr.mxu0 0.0
      %1979 = vmatpush1.msra.mxu0 0.0
      %1980 = vmatprep.subr.mxu0 0.0
      %1981 = vmatpush1.msra.mxu0 0.0
      %1982 = vmatprep.subr.mxu0 0.0
      %1983 = vmatpush1.msra.mxu0 0.0
      %1984 = vmatprep.subr.mxu0 0.0
      %1985 = vmatpush1.msra.mxu0 0.0
      %1986 = vmatprep.subr.mxu0 0.0
      %1987 = vmatpush1.msra.mxu0 0.0
      %1988 = vmatprep.subr.mxu0 0.0
      %1989 = vmatpush1.msra.mxu0 0.0
      %1990 = vmatprep.subr.mxu0 0.0
      %1991 = vmatpush1.msra.mxu0 0.0
      %1992 = vmatprep.subr.mxu0 0.0
      %1993 = vmatpush1.msra.mxu0 0.0
      %1994 = vmatprep.subr.mxu0 0.0
      %1995 = vmatpush1.msra.mxu0 0.0
      %1996 = vmatprep.subr.mxu0 0.0
      %1997 = vmatpush1.msra.mxu0 %v1794
      %1998 = vmatprep.subr.mxu0 0.0
      %1999 = vmatpush2.msra.mxu0 0.0
      %2000 = vmatprep.subr.mxu0 0.0
      %2001 = vmatpush2.msra.mxu0 0.0
      %2002 = vmatprep.subr.mxu0 0.0
      %2003 = vmatpush2.msra.mxu0 0.0
      %2004 = vmatprep.subr.mxu0 0.0
      %2005 = vmatpush2.msra.mxu0 0.0
      %2006 = vmatprep.subr.mxu0 0.0
      %2007 = vmatpush2.msra.mxu0 0.0
      %2008 = vmatprep.subr.mxu0 0.0
      %2009 = vmatpush2.msra.mxu0 0.0
      %2010 = vmatprep.subr.mxu0 0.0
      %2011 = vmatpush2.msra.mxu0 0.0
      %2012 = vmatprep.subr.mxu0 0.0
      %2013 = vmatpush2.msra.mxu0 0.0
      %2014 = vmatprep.subr.mxu0 0.0
      %2015 = vmatpush2.msra.mxu0 0.0
      %2016 = vmatprep.subr.mxu0 0.0
      %2017 = vmatpush2.msra.mxu0 0.0
      %2018 = vmatprep.subr.mxu0 0.0
      %2019 = vmatpush2.msra.mxu0 0.0
      %2020 = vmatprep.subr.mxu0 0.0
      %2021 = vmatpush2.msra.mxu0 0.0
      %2022 = vmatprep.subr.mxu0 0.0
      %2023 = vmatpush2.msra.mxu0 0.0
      %2024 = vmatprep.subr.mxu0 0.0
      %2025 = vmatpush2.msra.mxu0 0.0
      %2026 = vmatprep.subr.mxu0 0.0
      %2027 = vmatpush2.msra.mxu0 0.0
      %2028 = vmatprep.subr.mxu0 0.0
      %2029 = vmatpush2.msra.mxu0 0.0
      %2030 = vmatprep.mubr.f32.mxu0 0.0
      %2031 = vmatmul.mubr.f32.gmra.mxu0 %v1943
      %v2032 = vpop.f32.mrf.mxu0
      %v2033 = vadd.f32 %v1904, %v2032
      %v2034 = vpop.f32.mrf.mxu0
      %2035 = vmatprep.mubr.f32.mxu0 0.0
      %2036 = vmatmul.mubr.f32.gmra.mxu0 %v1946
      %v2037 = vpop.f32.mrf.mxu0
      %v2038 = vadd.f32 %v1909, %v2037
      %v2039 = vpop.f32.mrf.mxu0
      %2040 = vmatprep.mubr.f32.mxu0 0.0
      %2041 = vmatmul.mubr.f32.gmra.mxu0 %v1949
      %v2042 = vpop.f32.mrf.mxu0
      %v2043 = vadd.f32 %v1914, %v2042
      %v2044 = vpop.f32.mrf.mxu0
      %2045 = vmatprep.mubr.f32.mxu0 0.0
      %2046 = vmatmul.mubr.f32.gmra.mxu0 %v1952
      %v2047 = vpop.f32.mrf.mxu0
      %v2048 = vadd.f32 %v1919, %v2047
      %v2049 = vpop.f32.mrf.mxu0
      %2050 = vmatprep.mubr.f32.mxu0 0.0
      %2051 = vmatmul.mubr.f32.gmra.mxu0 %v1955
      %v2052 = vpop.f32.mrf.mxu0
      %v2053 = vadd.f32 %v1924, %v2052
      %v2054 = vpop.f32.mrf.mxu0
      %2055 = vmatprep.mubr.f32.mxu0 0.0
      %2056 = vmatmul.mubr.f32.gmra.mxu0 %v1958
      %v2057 = vpop.f32.mrf.mxu0
      %v2058 = vadd.f32 %v1929, %v2057
      %v2059 = vpop.f32.mrf.mxu0
      %2060 = vmatprep.mubr.f32.mxu0 0.0
      %2061 = vmatmul.mubr.f32.gmra.mxu0 %v1961
      %v2062 = vpop.f32.mrf.mxu0
      %v2063 = vadd.f32 %v1934, %v2062
      %v2064 = vpop.f32.mrf.mxu0
      %2065 = vmatprep.mubr.f32.mxu0 0.0
      %2066 = vmatmul.mubr.f32.gmra.mxu0 %v1964
      %v2067 = vpop.f32.mrf.mxu0
      %v2068 = vadd.f32 %v1939, %v2067
      %v2069 = vpop.f32.mrf.mxu0
      %2070 = vdwg.mxu0
      %s2071 = scalar_lea.vmem %s3, 16
      %v2072 = vld [vmem:[%s2071] sm:$0xff]
      %v2073 = vld [vmem:[#allocation2 + $0x2] sm:$0xff]
      %v2074 = vld [vmem:[#allocation2 + $0x12] sm:$0xff]
      %v2075 = vld [vmem:[#allocation2 + $0x22] sm:$0xff]
      %v2076 = vld [vmem:[#allocation2 + $0x32] sm:$0xff]
      %v2077 = vld [vmem:[#allocation2 + $0x42] sm:$0xff]
      %v2078 = vld [vmem:[#allocation2 + $0x52] sm:$0xff]
      %v2079 = vld [vmem:[#allocation2 + $0x62] sm:$0xff]
      %v2080 = vld [vmem:[#allocation2 + $0x72] sm:$0xff]
      %v2082 = vsel %vm1758, %v2073, 0
      %v2085 = vsel %vm1758, %v2074, 0
      %v2088 = vsel %vm1758, %v2075, 0
      %v2091 = vsel %vm1758, %v2076, 0
      %v2094 = vsel %vm1758, %v2077, 0
      %v2097 = vsel %vm1758, %v2078, 0
      %v2100 = vsel %vm1758, %v2079, 0
      %v2103 = vsel %vm1758, %v2080, 0
      %2105 = vmatprep.subr.mxu0 0.0
      %2106 = vmatpush1.msra.mxu0 0.0
      %2107 = vmatprep.subr.mxu0 0.0
      %2108 = vmatpush1.msra.mxu0 0.0
      %2109 = vmatprep.subr.mxu0 0.0
      %2110 = vmatpush1.msra.mxu0 0.0
      %2111 = vmatprep.subr.mxu0 0.0
      %2112 = vmatpush1.msra.mxu0 0.0
      %2113 = vmatprep.subr.mxu0 0.0
      %2114 = vmatpush1.msra.mxu0 0.0
      %2115 = vmatprep.subr.mxu0 0.0
      %2116 = vmatpush1.msra.mxu0 0.0
      %2117 = vmatprep.subr.mxu0 0.0
      %2118 = vmatpush1.msra.mxu0 0.0
      %2119 = vmatprep.subr.mxu0 0.0
      %2120 = vmatpush1.msra.mxu0 0.0
      %2121 = vmatprep.subr.mxu0 0.0
      %2122 = vmatpush1.msra.mxu0 0.0
      %2123 = vmatprep.subr.mxu0 0.0
      %2124 = vmatpush1.msra.mxu0 0.0
      %2125 = vmatprep.subr.mxu0 0.0
      %2126 = vmatpush1.msra.mxu0 0.0
      %2127 = vmatprep.subr.mxu0 0.0
      %2128 = vmatpush1.msra.mxu0 0.0
      %2129 = vmatprep.subr.mxu0 0.0
      %2130 = vmatpush1.msra.mxu0 0.0
      %2131 = vmatprep.subr.mxu0 0.0
      %2132 = vmatpush1.msra.mxu0 0.0
      %2133 = vmatprep.subr.mxu0 0.0
      %2134 = vmatpush1.msra.mxu0 0.0
      %2135 = vmatprep.subr.mxu0 0.0
      %2136 = vmatpush1.msra.mxu0 %v2072
      %2137 = vmatprep.subr.mxu0 0.0
      %2138 = vmatpush2.msra.mxu0 0.0
      %2139 = vmatprep.subr.mxu0 0.0
      %2140 = vmatpush2.msra.mxu0 0.0
      %2141 = vmatprep.subr.mxu0 0.0
      %2142 = vmatpush2.msra.mxu0 0.0
      %2143 = vmatprep.subr.mxu0 0.0
      %2144 = vmatpush2.msra.mxu0 0.0
      %2145 = vmatprep.subr.mxu0 0.0
      %2146 = vmatpush2.msra.mxu0 0.0
      %2147 = vmatprep.subr.mxu0 0.0
      %2148 = vmatpush2.msra.mxu0 0.0
      %2149 = vmatprep.subr.mxu0 0.0
      %2150 = vmatpush2.msra.mxu0 0.0
      %2151 = vmatprep.subr.mxu0 0.0
      %2152 = vmatpush2.msra.mxu0 0.0
      %2153 = vmatprep.subr.mxu0 0.0
      %2154 = vmatpush2.msra.mxu0 0.0
      %2155 = vmatprep.subr.mxu0 0.0
      %2156 = vmatpush2.msra.mxu0 0.0
      %2157 = vmatprep.subr.mxu0 0.0
      %2158 = vmatpush2.msra.mxu0 0.0
      %2159 = vmatprep.subr.mxu0 0.0
      %2160 = vmatpush2.msra.mxu0 0.0
      %2161 = vmatprep.subr.mxu0 0.0
      %2162 = vmatpush2.msra.mxu0 0.0
      %2163 = vmatprep.subr.mxu0 0.0
      %2164 = vmatpush2.msra.mxu0 0.0
      %2165 = vmatprep.subr.mxu0 0.0
      %2166 = vmatpush2.msra.mxu0 0.0
      %2167 = vmatprep.subr.mxu0 0.0
      %2168 = vmatpush2.msra.mxu0 0.0
      %2169 = vmatprep.mubr.f32.mxu0 0.0
      %2170 = vmatmul.mubr.f32.gmra.mxu0 %v2082
      %v2171 = vpop.f32.mrf.mxu0
      %v2172 = vadd.f32 0.0, %v2171
      %v2173 = vpop.f32.mrf.mxu0
      %2174 = vmatprep.mubr.f32.mxu0 0.0
      %2175 = vmatmul.mubr.f32.gmra.mxu0 %v2085
      %v2176 = vpop.f32.mrf.mxu0
      %v2177 = vadd.f32 0.0, %v2176
      %v2178 = vpop.f32.mrf.mxu0
      %2179 = vmatprep.mubr.f32.mxu0 0.0
      %2180 = vmatmul.mubr.f32.gmra.mxu0 %v2088
      %v2181 = vpop.f32.mrf.mxu0
      %v2182 = vadd.f32 0.0, %v2181
      %v2183 = vpop.f32.mrf.mxu0
      %2184 = vmatprep.mubr.f32.mxu0 0.0
      %2185 = vmatmul.mubr.f32.gmra.mxu0 %v2091
      %v2186 = vpop.f32.mrf.mxu0
      %v2187 = vadd.f32 0.0, %v2186
      %v2188 = vpop.f32.mrf.mxu0
      %2189 = vmatprep.mubr.f32.mxu0 0.0
      %2190 = vmatmul.mubr.f32.gmra.mxu0 %v2094
      %v2191 = vpop.f32.mrf.mxu0
      %v2192 = vadd.f32 0.0, %v2191
      %v2193 = vpop.f32.mrf.mxu0
      %2194 = vmatprep.mubr.f32.mxu0 0.0
      %2195 = vmatmul.mubr.f32.gmra.mxu0 %v2097
      %v2196 = vpop.f32.mrf.mxu0
      %v2197 = vadd.f32 0.0, %v2196
      %v2198 = vpop.f32.mrf.mxu0
      %2199 = vmatprep.mubr.f32.mxu0 0.0
      %2200 = vmatmul.mubr.f32.gmra.mxu0 %v2100
      %v2201 = vpop.f32.mrf.mxu0
      %v2202 = vadd.f32 0.0, %v2201
      %v2203 = vpop.f32.mrf.mxu0
      %2204 = vmatprep.mubr.f32.mxu0 0.0
      %2205 = vmatmul.mubr.f32.gmra.mxu0 %v2103
      %v2206 = vpop.f32.mrf.mxu0
      %v2207 = vadd.f32 0.0, %v2206
      %v2208 = vpop.f32.mrf.mxu0
      %2209 = vdwg.mxu0
      %v2210 = vadd.f32 %v2033, %v2172
      %v2211 = vadd.f32 %v2038, %v2177
      %v2212 = vadd.f32 %v2043, %v2182
      %v2213 = vadd.f32 %v2048, %v2187
      %v2214 = vadd.f32 %v2053, %v2192
      %v2215 = vadd.f32 %v2058, %v2197
      %v2216 = vadd.f32 %v2063, %v2202
      %v2217 = vadd.f32 %v2068, %v2207
      %s2218 = scalar_lea.vmem %s3, 24
      %v2219 = vld [vmem:[%s2218] sm:$0xff]
      %v2220 = vld [vmem:[%s1785] sm:$0xff]
      %v2221 = vld [vmem:[%s1785 + $0x10] sm:$0xff]
      %v2222 = vld [vmem:[%s1785 + $0x20] sm:$0xff]
      %v2223 = vld [vmem:[%s1785 + $0x30] sm:$0xff]
      %v2224 = vld [vmem:[%s1785 + $0x40] sm:$0xff]
      %v2225 = vld [vmem:[%s1785 + $0x50] sm:$0xff]
      %v2226 = vld [vmem:[%s1785 + $0x60] sm:$0xff]
      %v2227 = vld [vmem:[%s1785 + $0x70] sm:$0xff]
      %v2229 = vsel %vm1758, %v2220, 0
      %v2232 = vsel %vm1758, %v2221, 0
      %v2235 = vsel %vm1758, %v2222, 0
      %v2238 = vsel %vm1758, %v2223, 0
      %v2241 = vsel %vm1758, %v2224, 0
      %v2244 = vsel %vm1758, %v2225, 0
      %v2247 = vsel %vm1758, %v2226, 0
      %v2250 = vsel %vm1758, %v2227, 0
      %2252 = vmatprep.subr.mxu0 0.0
      %2253 = vmatpush1.msra.mxu0 0.0
      %2254 = vmatprep.subr.mxu0 0.0
      %2255 = vmatpush1.msra.mxu0 0.0
      %2256 = vmatprep.subr.mxu0 0.0
      %2257 = vmatpush1.msra.mxu0 0.0
      %2258 = vmatprep.subr.mxu0 0.0
      %2259 = vmatpush1.msra.mxu0 0.0
      %2260 = vmatprep.subr.mxu0 0.0
      %2261 = vmatpush1.msra.mxu0 0.0
      %2262 = vmatprep.subr.mxu0 0.0
      %2263 = vmatpush1.msra.mxu0 0.0
      %2264 = vmatprep.subr.mxu0 0.0
      %2265 = vmatpush1.msra.mxu0 0.0
      %2266 = vmatprep.subr.mxu0 0.0
      %2267 = vmatpush1.msra.mxu0 0.0
      %2268 = vmatprep.subr.mxu0 0.0
      %2269 = vmatpush1.msra.mxu0 0.0
      %2270 = vmatprep.subr.mxu0 0.0
      %2271 = vmatpush1.msra.mxu0 0.0
      %2272 = vmatprep.subr.mxu0 0.0
      %2273 = vmatpush1.msra.mxu0 0.0
      %2274 = vmatprep.subr.mxu0 0.0
      %2275 = vmatpush1.msra.mxu0 0.0
      %2276 = vmatprep.subr.mxu0 0.0
      %2277 = vmatpush1.msra.mxu0 0.0
      %2278 = vmatprep.subr.mxu0 0.0
      %2279 = vmatpush1.msra.mxu0 0.0
      %2280 = vmatprep.subr.mxu0 0.0
      %2281 = vmatpush1.msra.mxu0 0.0
      %2282 = vmatprep.subr.mxu0 0.0
      %2283 = vmatpush1.msra.mxu0 %v2219
      %2284 = vmatprep.subr.mxu0 0.0
      %2285 = vmatpush2.msra.mxu0 0.0
      %2286 = vmatprep.subr.mxu0 0.0
      %2287 = vmatpush2.msra.mxu0 0.0
      %2288 = vmatprep.subr.mxu0 0.0
      %2289 = vmatpush2.msra.mxu0 0.0
      %2290 = vmatprep.subr.mxu0 0.0
      %2291 = vmatpush2.msra.mxu0 0.0
      %2292 = vmatprep.subr.mxu0 0.0
      %2293 = vmatpush2.msra.mxu0 0.0
      %2294 = vmatprep.subr.mxu0 0.0
      %2295 = vmatpush2.msra.mxu0 0.0
      %2296 = vmatprep.subr.mxu0 0.0
      %2297 = vmatpush2.msra.mxu0 0.0
      %2298 = vmatprep.subr.mxu0 0.0
      %2299 = vmatpush2.msra.mxu0 0.0
      %2300 = vmatprep.subr.mxu0 0.0
      %2301 = vmatpush2.msra.mxu0 0.0
      %2302 = vmatprep.subr.mxu0 0.0
      %2303 = vmatpush2.msra.mxu0 0.0
      %2304 = vmatprep.subr.mxu0 0.0
      %2305 = vmatpush2.msra.mxu0 0.0
      %2306 = vmatprep.subr.mxu0 0.0
      %2307 = vmatpush2.msra.mxu0 0.0
      %2308 = vmatprep.subr.mxu0 0.0
      %2309 = vmatpush2.msra.mxu0 0.0
      %2310 = vmatprep.subr.mxu0 0.0
      %2311 = vmatpush2.msra.mxu0 0.0
      %2312 = vmatprep.subr.mxu0 0.0
      %2313 = vmatpush2.msra.mxu0 0.0
      %2314 = vmatprep.subr.mxu0 0.0
      %2315 = vmatpush2.msra.mxu0 0.0
      %2316 = vmatprep.mubr.f32.mxu0 0.0
      %2317 = vmatmul.mubr.f32.gmra.mxu0 %v2229
      %v2318 = vpop.f32.mrf.mxu0
      %v2319 = vadd.f32 0.0, %v2318
      %v2320 = vpop.f32.mrf.mxu0
      %2321 = vmatprep.mubr.f32.mxu0 0.0
      %2322 = vmatmul.mubr.f32.gmra.mxu0 %v2232
      %v2323 = vpop.f32.mrf.mxu0
      %v2324 = vadd.f32 0.0, %v2323
      %v2325 = vpop.f32.mrf.mxu0
      %2326 = vmatprep.mubr.f32.mxu0 0.0
      %2327 = vmatmul.mubr.f32.gmra.mxu0 %v2235
      %v2328 = vpop.f32.mrf.mxu0
      %v2329 = vadd.f32 0.0, %v2328
      %v2330 = vpop.f32.mrf.mxu0
      %2331 = vmatprep.mubr.f32.mxu0 0.0
      %2332 = vmatmul.mubr.f32.gmra.mxu0 %v2238
      %v2333 = vpop.f32.mrf.mxu0
      %v2334 = vadd.f32 0.0, %v2333
      %v2335 = vpop.f32.mrf.mxu0
      %2336 = vmatprep.mubr.f32.mxu0 0.0
      %2337 = vmatmul.mubr.f32.gmra.mxu0 %v2241
      %v2338 = vpop.f32.mrf.mxu0
      %v2339 = vadd.f32 0.0, %v2338
      %v2340 = vpop.f32.mrf.mxu0
      %2341 = vmatprep.mubr.f32.mxu0 0.0
      %2342 = vmatmul.mubr.f32.gmra.mxu0 %v2244
      %v2343 = vpop.f32.mrf.mxu0
      %v2344 = vadd.f32 0.0, %v2343
      %v2345 = vpop.f32.mrf.mxu0
      %2346 = vmatprep.mubr.f32.mxu0 0.0
      %2347 = vmatmul.mubr.f32.gmra.mxu0 %v2247
      %v2348 = vpop.f32.mrf.mxu0
      %v2349 = vadd.f32 0.0, %v2348
      %v2350 = vpop.f32.mrf.mxu0
      %2351 = vmatprep.mubr.f32.mxu0 0.0
      %2352 = vmatmul.mubr.f32.gmra.mxu0 %v2250
      %v2353 = vpop.f32.mrf.mxu0
      %v2354 = vadd.f32 0.0, %v2353
      %v2355 = vpop.f32.mrf.mxu0
      %2356 = vdwg.mxu0
      %v2357 = vadd.f32 %v2210, %v2319
      %v2358 = vadd.f32 %v2211, %v2324
      %v2359 = vadd.f32 %v2212, %v2329
      %v2360 = vadd.f32 %v2213, %v2334
      %v2361 = vadd.f32 %v2214, %v2339
      %v2362 = vadd.f32 %v2215, %v2344
      %v2363 = vadd.f32 %v2216, %v2349
      %v2364 = vadd.f32 %v2217, %v2354
      %s2365 = scalar_lea.vmem %s3, 32
      %v2366 = vld [vmem:[%s2365] sm:$0xff]
      %v2367 = vld [vmem:[%s1785 + $0x1] sm:$0xff]
      %v2368 = vld [vmem:[%s1785 + $0x11] sm:$0xff]
      %v2369 = vld [vmem:[%s1785 + $0x21] sm:$0xff]
      %v2370 = vld [vmem:[%s1785 + $0x31] sm:$0xff]
      %v2371 = vld [vmem:[%s1785 + $0x41] sm:$0xff]
      %v2372 = vld [vmem:[%s1785 + $0x51] sm:$0xff]
      %v2373 = vld [vmem:[%s1785 + $0x61] sm:$0xff]
      %v2374 = vld [vmem:[%s1785 + $0x71] sm:$0xff]
      %v2376 = vsel %vm1758, %v2367, 0
      %v2379 = vsel %vm1758, %v2368, 0
      %v2382 = vsel %vm1758, %v2369, 0
      %v2385 = vsel %vm1758, %v2370, 0
      %v2388 = vsel %vm1758, %v2371, 0
      %v2391 = vsel %vm1758, %v2372, 0
      %v2394 = vsel %vm1758, %v2373, 0
      %v2397 = vsel %vm1758, %v2374, 0
      %2399 = vmatprep.subr.mxu0 0.0
      %2400 = vmatpush1.msra.mxu0 0.0
      %2401 = vmatprep.subr.mxu0 0.0
      %2402 = vmatpush1.msra.mxu0 0.0
      %2403 = vmatprep.subr.mxu0 0.0
      %2404 = vmatpush1.msra.mxu0 0.0
      %2405 = vmatprep.subr.mxu0 0.0
      %2406 = vmatpush1.msra.mxu0 0.0
      %2407 = vmatprep.subr.mxu0 0.0
      %2408 = vmatpush1.msra.mxu0 0.0
      %2409 = vmatprep.subr.mxu0 0.0
      %2410 = vmatpush1.msra.mxu0 0.0
      %2411 = vmatprep.subr.mxu0 0.0
      %2412 = vmatpush1.msra.mxu0 0.0
      %2413 = vmatprep.subr.mxu0 0.0
      %2414 = vmatpush1.msra.mxu0 0.0
      %2415 = vmatprep.subr.mxu0 0.0
      %2416 = vmatpush1.msra.mxu0 0.0
      %2417 = vmatprep.subr.mxu0 0.0
      %2418 = vmatpush1.msra.mxu0 0.0
      %2419 = vmatprep.subr.mxu0 0.0
      %2420 = vmatpush1.msra.mxu0 0.0
      %2421 = vmatprep.subr.mxu0 0.0
      %2422 = vmatpush1.msra.mxu0 0.0
      %2423 = vmatprep.subr.mxu0 0.0
      %2424 = vmatpush1.msra.mxu0 0.0
      %2425 = vmatprep.subr.mxu0 0.0
      %2426 = vmatpush1.msra.mxu0 0.0
      %2427 = vmatprep.subr.mxu0 0.0
      %2428 = vmatpush1.msra.mxu0 0.0
      %2429 = vmatprep.subr.mxu0 0.0
      %2430 = vmatpush1.msra.mxu0 %v2366
      %2431 = vmatprep.subr.mxu0 0.0
      %2432 = vmatpush2.msra.mxu0 0.0
      %2433 = vmatprep.subr.mxu0 0.0
      %2434 = vmatpush2.msra.mxu0 0.0
      %2435 = vmatprep.subr.mxu0 0.0
      %2436 = vmatpush2.msra.mxu0 0.0
      %2437 = vmatprep.subr.mxu0 0.0
      %2438 = vmatpush2.msra.mxu0 0.0
      %2439 = vmatprep.subr.mxu0 0.0
      %2440 = vmatpush2.msra.mxu0 0.0
      %2441 = vmatprep.subr.mxu0 0.0
      %2442 = vmatpush2.msra.mxu0 0.0
      %2443 = vmatprep.subr.mxu0 0.0
      %2444 = vmatpush2.msra.mxu0 0.0
      %2445 = vmatprep.subr.mxu0 0.0
      %2446 = vmatpush2.msra.mxu0 0.0
      %2447 = vmatprep.subr.mxu0 0.0
      %2448 = vmatpush2.msra.mxu0 0.0
      %2449 = vmatprep.subr.mxu0 0.0
      %2450 = vmatpush2.msra.mxu0 0.0
      %2451 = vmatprep.subr.mxu0 0.0
      %2452 = vmatpush2.msra.mxu0 0.0
      %2453 = vmatprep.subr.mxu0 0.0
      %2454 = vmatpush2.msra.mxu0 0.0
      %2455 = vmatprep.subr.mxu0 0.0
      %2456 = vmatpush2.msra.mxu0 0.0
      %2457 = vmatprep.subr.mxu0 0.0
      %2458 = vmatpush2.msra.mxu0 0.0
      %2459 = vmatprep.subr.mxu0 0.0
      %2460 = vmatpush2.msra.mxu0 0.0
      %2461 = vmatprep.subr.mxu0 0.0
      %2462 = vmatpush2.msra.mxu0 0.0
      %2463 = vmatprep.mubr.f32.mxu0 0.0
      %2464 = vmatmul.mubr.f32.gmra.mxu0 %v2376
      %v2465 = vpop.f32.mrf.mxu0
      %v2466 = vadd.f32 0.0, %v2465
      %v2467 = vpop.f32.mrf.mxu0
      %2468 = vmatprep.mubr.f32.mxu0 0.0
      %2469 = vmatmul.mubr.f32.gmra.mxu0 %v2379
      %v2470 = vpop.f32.mrf.mxu0
      %v2471 = vadd.f32 0.0, %v2470
      %v2472 = vpop.f32.mrf.mxu0
      %2473 = vmatprep.mubr.f32.mxu0 0.0
      %2474 = vmatmul.mubr.f32.gmra.mxu0 %v2382
      %v2475 = vpop.f32.mrf.mxu0
      %v2476 = vadd.f32 0.0, %v2475
      %v2477 = vpop.f32.mrf.mxu0
      %2478 = vmatprep.mubr.f32.mxu0 0.0
      %2479 = vmatmul.mubr.f32.gmra.mxu0 %v2385
      %v2480 = vpop.f32.mrf.mxu0
      %v2481 = vadd.f32 0.0, %v2480
      %v2482 = vpop.f32.mrf.mxu0
      %2483 = vmatprep.mubr.f32.mxu0 0.0
      %2484 = vmatmul.mubr.f32.gmra.mxu0 %v2388
      %v2485 = vpop.f32.mrf.mxu0
      %v2486 = vadd.f32 0.0, %v2485
      %v2487 = vpop.f32.mrf.mxu0
      %2488 = vmatprep.mubr.f32.mxu0 0.0
      %2489 = vmatmul.mubr.f32.gmra.mxu0 %v2391
      %v2490 = vpop.f32.mrf.mxu0
      %v2491 = vadd.f32 0.0, %v2490
      %v2492 = vpop.f32.mrf.mxu0
      %2493 = vmatprep.mubr.f32.mxu0 0.0
      %2494 = vmatmul.mubr.f32.gmra.mxu0 %v2394
      %v2495 = vpop.f32.mrf.mxu0
      %v2496 = vadd.f32 0.0, %v2495
      %v2497 = vpop.f32.mrf.mxu0
      %2498 = vmatprep.mubr.f32.mxu0 0.0
      %2499 = vmatmul.mubr.f32.gmra.mxu0 %v2397
      %v2500 = vpop.f32.mrf.mxu0
      %v2501 = vadd.f32 0.0, %v2500
      %v2502 = vpop.f32.mrf.mxu0
      %2503 = vdwg.mxu0
      %v2504 = vadd.f32 %v2357, %v2466
      %v2505 = vadd.f32 %v2358, %v2471
      %v2506 = vadd.f32 %v2359, %v2476
      %v2507 = vadd.f32 %v2360, %v2481
      %v2508 = vadd.f32 %v2361, %v2486
      %v2509 = vadd.f32 %v2362, %v2491
      %v2510 = vadd.f32 %v2363, %v2496
      %v2511 = vadd.f32 %v2364, %v2501
      %s2512 = scalar_lea.vmem %s3, 40
      %v2513 = vld [vmem:[%s2512] sm:$0xff]
      %v2514 = vld [vmem:[%s1785 + $0x2] sm:$0xff]
      %v2515 = vld [vmem:[%s1785 + $0x12] sm:$0xff]
      %v2516 = vld [vmem:[%s1785 + $0x22] sm:$0xff]
      %v2517 = vld [vmem:[%s1785 + $0x32] sm:$0xff]
      %v2518 = vld [vmem:[%s1785 + $0x42] sm:$0xff]
      %v2519 = vld [vmem:[%s1785 + $0x52] sm:$0xff]
      %v2520 = vld [vmem:[%s1785 + $0x62] sm:$0xff]
      %v2521 = vld [vmem:[%s1785 + $0x72] sm:$0xff]
      %v2523 = vsel %vm1758, %v2514, 0
      %v2526 = vsel %vm1758, %v2515, 0
      %v2529 = vsel %vm1758, %v2516, 0
      %v2532 = vsel %vm1758, %v2517, 0
      %v2535 = vsel %vm1758, %v2518, 0
      %v2538 = vsel %vm1758, %v2519, 0
      %v2541 = vsel %vm1758, %v2520, 0
      %v2544 = vsel %vm1758, %v2521, 0
      %2546 = vmatprep.subr.mxu0 0.0
      %2547 = vmatpush1.msra.mxu0 0.0
      %2548 = vmatprep.subr.mxu0 0.0
      %2549 = vmatpush1.msra.mxu0 0.0
      %2550 = vmatprep.subr.mxu0 0.0
      %2551 = vmatpush1.msra.mxu0 0.0
      %2552 = vmatprep.subr.mxu0 0.0
      %2553 = vmatpush1.msra.mxu0 0.0
      %2554 = vmatprep.subr.mxu0 0.0
      %2555 = vmatpush1.msra.mxu0 0.0
      %2556 = vmatprep.subr.mxu0 0.0
      %2557 = vmatpush1.msra.mxu0 0.0
      %2558 = vmatprep.subr.mxu0 0.0
      %2559 = vmatpush1.msra.mxu0 0.0
      %2560 = vmatprep.subr.mxu0 0.0
      %2561 = vmatpush1.msra.mxu0 0.0
      %2562 = vmatprep.subr.mxu0 0.0
      %2563 = vmatpush1.msra.mxu0 0.0
      %2564 = vmatprep.subr.mxu0 0.0
      %2565 = vmatpush1.msra.mxu0 0.0
      %2566 = vmatprep.subr.mxu0 0.0
      %2567 = vmatpush1.msra.mxu0 0.0
      %2568 = vmatprep.subr.mxu0 0.0
      %2569 = vmatpush1.msra.mxu0 0.0
      %2570 = vmatprep.subr.mxu0 0.0
      %2571 = vmatpush1.msra.mxu0 0.0
      %2572 = vmatprep.subr.mxu0 0.0
      %2573 = vmatpush1.msra.mxu0 0.0
      %2574 = vmatprep.subr.mxu0 0.0
      %2575 = vmatpush1.msra.mxu0 0.0
      %2576 = vmatprep.subr.mxu0 0.0
      %2577 = vmatpush1.msra.mxu0 %v2513
      %2578 = vmatprep.subr.mxu0 0.0
      %2579 = vmatpush2.msra.mxu0 0.0
      %2580 = vmatprep.subr.mxu0 0.0
      %2581 = vmatpush2.msra.mxu0 0.0
      %2582 = vmatprep.subr.mxu0 0.0
      %2583 = vmatpush2.msra.mxu0 0.0
      %2584 = vmatprep.subr.mxu0 0.0
      %2585 = vmatpush2.msra.mxu0 0.0
      %2586 = vmatprep.subr.mxu0 0.0
      %2587 = vmatpush2.msra.mxu0 0.0
      %2588 = vmatprep.subr.mxu0 0.0
      %2589 = vmatpush2.msra.mxu0 0.0
      %2590 = vmatprep.subr.mxu0 0.0
      %2591 = vmatpush2.msra.mxu0 0.0
      %2592 = vmatprep.subr.mxu0 0.0
      %2593 = vmatpush2.msra.mxu0 0.0
      %2594 = vmatprep.subr.mxu0 0.0
      %2595 = vmatpush2.msra.mxu0 0.0
      %2596 = vmatprep.subr.mxu0 0.0
      %2597 = vmatpush2.msra.mxu0 0.0
      %2598 = vmatprep.subr.mxu0 0.0
      %2599 = vmatpush2.msra.mxu0 0.0
      %2600 = vmatprep.subr.mxu0 0.0
      %2601 = vmatpush2.msra.mxu0 0.0
      %2602 = vmatprep.subr.mxu0 0.0
      %2603 = vmatpush2.msra.mxu0 0.0
      %2604 = vmatprep.subr.mxu0 0.0
      %2605 = vmatpush2.msra.mxu0 0.0
      %2606 = vmatprep.subr.mxu0 0.0
      %2607 = vmatpush2.msra.mxu0 0.0
      %2608 = vmatprep.subr.mxu0 0.0
      %2609 = vmatpush2.msra.mxu0 0.0
      %2610 = vmatprep.mubr.f32.mxu0 0.0
      %2611 = vmatmul.mubr.f32.gmra.mxu0 %v2523
      %v2612 = vpop.f32.mrf.mxu0
      %v2613 = vadd.f32 0.0, %v2612
      %v2614 = vpop.f32.mrf.mxu0
      %2615 = vmatprep.mubr.f32.mxu0 0.0
      %2616 = vmatmul.mubr.f32.gmra.mxu0 %v2526
      %v2617 = vpop.f32.mrf.mxu0
      %v2618 = vadd.f32 0.0, %v2617
      %v2619 = vpop.f32.mrf.mxu0
      %2620 = vmatprep.mubr.f32.mxu0 0.0
      %2621 = vmatmul.mubr.f32.gmra.mxu0 %v2529
      %v2622 = vpop.f32.mrf.mxu0
      %v2623 = vadd.f32 0.0, %v2622
      %v2624 = vpop.f32.mrf.mxu0
      %2625 = vmatprep.mubr.f32.mxu0 0.0
      %2626 = vmatmul.mubr.f32.gmra.mxu0 %v2532
      %v2627 = vpop.f32.mrf.mxu0
      %v2628 = vadd.f32 0.0, %v2627
      %v2629 = vpop.f32.mrf.mxu0
      %2630 = vmatprep.mubr.f32.mxu0 0.0
      %2631 = vmatmul.mubr.f32.gmra.mxu0 %v2535
      %v2632 = vpop.f32.mrf.mxu0
      %v2633 = vadd.f32 0.0, %v2632
      %v2634 = vpop.f32.mrf.mxu0
      %2635 = vmatprep.mubr.f32.mxu0 0.0
      %2636 = vmatmul.mubr.f32.gmra.mxu0 %v2538
      %v2637 = vpop.f32.mrf.mxu0
      %v2638 = vadd.f32 0.0, %v2637
      %v2639 = vpop.f32.mrf.mxu0
      %2640 = vmatprep.mubr.f32.mxu0 0.0
      %2641 = vmatmul.mubr.f32.gmra.mxu0 %v2541
      %v2642 = vpop.f32.mrf.mxu0
      %v2643 = vadd.f32 0.0, %v2642
      %v2644 = vpop.f32.mrf.mxu0
      %2645 = vmatprep.mubr.f32.mxu0 0.0
      %2646 = vmatmul.mubr.f32.gmra.mxu0 %v2544
      %v2647 = vpop.f32.mrf.mxu0
      %v2648 = vadd.f32 0.0, %v2647
      %v2649 = vpop.f32.mrf.mxu0
      %2650 = vdwg.mxu0
      %v2651 = vadd.f32 %v2504, %v2613
      %v2652 = vadd.f32 %v2505, %v2618
      %v2653 = vadd.f32 %v2506, %v2623
      %v2654 = vadd.f32 %v2507, %v2628
      %v2655 = vadd.f32 %v2508, %v2633
      %v2656 = vadd.f32 %v2509, %v2638
      %v2657 = vadd.f32 %v2510, %v2643
      %v2658 = vadd.f32 %v2511, %v2648
      %s2659 = scalar_lea.vmem %s3, 48
      %v2660 = vld [vmem:[%s2659] sm:$0xff]
      %s2661 = scalar_lea.vmem [#allocation2], 32
      %v2662 = vld [vmem:[%s2661] sm:$0xff]
      %v2663 = vld [vmem:[%s2661 + $0x10] sm:$0xff]
      %v2664 = vld [vmem:[%s2661 + $0x20] sm:$0xff]
      %v2665 = vld [vmem:[%s2661 + $0x30] sm:$0xff]
      %v2666 = vld [vmem:[%s2661 + $0x40] sm:$0xff]
      %v2667 = vld [vmem:[%s2661 + $0x50] sm:$0xff]
      %v2668 = vld [vmem:[%s2661 + $0x60] sm:$0xff]
      %v2669 = vld [vmem:[%s2661 + $0x70] sm:$0xff]
      %v2671 = vsel %vm1758, %v2662, 0
      %v2674 = vsel %vm1758, %v2663, 0
      %v2677 = vsel %vm1758, %v2664, 0
      %v2680 = vsel %vm1758, %v2665, 0
      %v2683 = vsel %vm1758, %v2666, 0
      %v2686 = vsel %vm1758, %v2667, 0
      %v2689 = vsel %vm1758, %v2668, 0
      %v2692 = vsel %vm1758, %v2669, 0
      %2694 = vmatprep.subr.mxu0 0.0
      %2695 = vmatpush1.msra.mxu0 0.0
      %2696 = vmatprep.subr.mxu0 0.0
      %2697 = vmatpush1.msra.mxu0 0.0
      %2698 = vmatprep.subr.mxu0 0.0
      %2699 = vmatpush1.msra.mxu0 0.0
      %2700 = vmatprep.subr.mxu0 0.0
      %2701 = vmatpush1.msra.mxu0 0.0
      %2702 = vmatprep.subr.mxu0 0.0
      %2703 = vmatpush1.msra.mxu0 0.0
      %2704 = vmatprep.subr.mxu0 0.0
      %2705 = vmatpush1.msra.mxu0 0.0
      %2706 = vmatprep.subr.mxu0 0.0
      %2707 = vmatpush1.msra.mxu0 0.0
      %2708 = vmatprep.subr.mxu0 0.0
      %2709 = vmatpush1.msra.mxu0 0.0
      %2710 = vmatprep.subr.mxu0 0.0
      %2711 = vmatpush1.msra.mxu0 0.0
      %2712 = vmatprep.subr.mxu0 0.0
      %2713 = vmatpush1.msra.mxu0 0.0
      %2714 = vmatprep.subr.mxu0 0.0
      %2715 = vmatpush1.msra.mxu0 0.0
      %2716 = vmatprep.subr.mxu0 0.0
      %2717 = vmatpush1.msra.mxu0 0.0
      %2718 = vmatprep.subr.mxu0 0.0
      %2719 = vmatpush1.msra.mxu0 0.0
      %2720 = vmatprep.subr.mxu0 0.0
      %2721 = vmatpush1.msra.mxu0 0.0
      %2722 = vmatprep.subr.mxu0 0.0
      %2723 = vmatpush1.msra.mxu0 0.0
      %2724 = vmatprep.subr.mxu0 0.0
      %2725 = vmatpush1.msra.mxu0 %v2660
      %2726 = vmatprep.subr.mxu0 0.0
      %2727 = vmatpush2.msra.mxu0 0.0
      %2728 = vmatprep.subr.mxu0 0.0
      %2729 = vmatpush2.msra.mxu0 0.0
      %2730 = vmatprep.subr.mxu0 0.0
      %2731 = vmatpush2.msra.mxu0 0.0
      %2732 = vmatprep.subr.mxu0 0.0
      %2733 = vmatpush2.msra.mxu0 0.0
      %2734 = vmatprep.subr.mxu0 0.0
      %2735 = vmatpush2.msra.mxu0 0.0
      %2736 = vmatprep.subr.mxu0 0.0
      %2737 = vmatpush2.msra.mxu0 0.0
      %2738 = vmatprep.subr.mxu0 0.0
      %2739 = vmatpush2.msra.mxu0 0.0
      %2740 = vmatprep.subr.mxu0 0.0
      %2741 = vmatpush2.msra.mxu0 0.0
      %2742 = vmatprep.subr.mxu0 0.0
      %2743 = vmatpush2.msra.mxu0 0.0
      %2744 = vmatprep.subr.mxu0 0.0
      %2745 = vmatpush2.msra.mxu0 0.0
      %2746 = vmatprep.subr.mxu0 0.0
      %2747 = vmatpush2.msra.mxu0 0.0
      %2748 = vmatprep.subr.mxu0 0.0
      %2749 = vmatpush2.msra.mxu0 0.0
      %2750 = vmatprep.subr.mxu0 0.0
      %2751 = vmatpush2.msra.mxu0 0.0
      %2752 = vmatprep.subr.mxu0 0.0
      %2753 = vmatpush2.msra.mxu0 0.0
      %2754 = vmatprep.subr.mxu0 0.0
      %2755 = vmatpush2.msra.mxu0 0.0
      %2756 = vmatprep.subr.mxu0 0.0
      %2757 = vmatpush2.msra.mxu0 0.0
      %2758 = vmatprep.mubr.f32.mxu0 0.0
      %2759 = vmatmul.mubr.f32.gmra.mxu0 %v2671
      %v2760 = vpop.f32.mrf.mxu0
      %v2761 = vadd.f32 0.0, %v2760
      %v2762 = vpop.f32.mrf.mxu0
      %2763 = vmatprep.mubr.f32.mxu0 0.0
      %2764 = vmatmul.mubr.f32.gmra.mxu0 %v2674
      %v2765 = vpop.f32.mrf.mxu0
      %v2766 = vadd.f32 0.0, %v2765
      %v2767 = vpop.f32.mrf.mxu0
      %2768 = vmatprep.mubr.f32.mxu0 0.0
      %2769 = vmatmul.mubr.f32.gmra.mxu0 %v2677
      %v2770 = vpop.f32.mrf.mxu0
      %v2771 = vadd.f32 0.0, %v2770
      %v2772 = vpop.f32.mrf.mxu0
      %2773 = vmatprep.mubr.f32.mxu0 0.0
      %2774 = vmatmul.mubr.f32.gmra.mxu0 %v2680
      %v2775 = vpop.f32.mrf.mxu0
      %v2776 = vadd.f32 0.0, %v2775
      %v2777 = vpop.f32.mrf.mxu0
      %2778 = vmatprep.mubr.f32.mxu0 0.0
      %2779 = vmatmul.mubr.f32.gmra.mxu0 %v2683
      %v2780 = vpop.f32.mrf.mxu0
      %v2781 = vadd.f32 0.0, %v2780
      %v2782 = vpop.f32.mrf.mxu0
      %2783 = vmatprep.mubr.f32.mxu0 0.0
      %2784 = vmatmul.mubr.f32.gmra.mxu0 %v2686
      %v2785 = vpop.f32.mrf.mxu0
      %v2786 = vadd.f32 0.0, %v2785
      %v2787 = vpop.f32.mrf.mxu0
      %2788 = vmatprep.mubr.f32.mxu0 0.0
      %2789 = vmatmul.mubr.f32.gmra.mxu0 %v2689
      %v2790 = vpop.f32.mrf.mxu0
      %v2791 = vadd.f32 0.0, %v2790
      %v2792 = vpop.f32.mrf.mxu0
      %2793 = vmatprep.mubr.f32.mxu0 0.0
      %2794 = vmatmul.mubr.f32.gmra.mxu0 %v2692
      %v2795 = vpop.f32.mrf.mxu0
      %v2796 = vadd.f32 0.0, %v2795
      %v2797 = vpop.f32.mrf.mxu0
      %2798 = vdwg.mxu0
      %v2799 = vadd.f32 %v2651, %v2761
      %v2800 = vadd.f32 %v2652, %v2766
      %v2801 = vadd.f32 %v2653, %v2771
      %v2802 = vadd.f32 %v2654, %v2776
      %v2803 = vadd.f32 %v2655, %v2781
      %v2804 = vadd.f32 %v2656, %v2786
      %v2805 = vadd.f32 %v2657, %v2791
      %v2806 = vadd.f32 %v2658, %v2796
      %s2807 = scalar_lea.vmem %s3, 56
      %v2808 = vld [vmem:[%s2807] sm:$0xff]
      %v2809 = vld [vmem:[%s2661 + $0x1] sm:$0xff]
      %v2810 = vld [vmem:[%s2661 + $0x11] sm:$0xff]
      %v2811 = vld [vmem:[%s2661 + $0x21] sm:$0xff]
      %v2812 = vld [vmem:[%s2661 + $0x31] sm:$0xff]
      %v2813 = vld [vmem:[%s2661 + $0x41] sm:$0xff]
      %v2814 = vld [vmem:[%s2661 + $0x51] sm:$0xff]
      %v2815 = vld [vmem:[%s2661 + $0x61] sm:$0xff]
      %v2816 = vld [vmem:[%s2661 + $0x71] sm:$0xff]
      %v2818 = vsel %vm1758, %v2809, 0
      %v2821 = vsel %vm1758, %v2810, 0
      %v2824 = vsel %vm1758, %v2811, 0
      %v2827 = vsel %vm1758, %v2812, 0
      %v2830 = vsel %vm1758, %v2813, 0
      %v2833 = vsel %vm1758, %v2814, 0
      %v2836 = vsel %vm1758, %v2815, 0
      %v2839 = vsel %vm1758, %v2816, 0
      %2841 = vmatprep.subr.mxu0 0.0
      %2842 = vmatpush1.msra.mxu0 0.0
      %2843 = vmatprep.subr.mxu0 0.0
      %2844 = vmatpush1.msra.mxu0 0.0
      %2845 = vmatprep.subr.mxu0 0.0
      %2846 = vmatpush1.msra.mxu0 0.0
      %2847 = vmatprep.subr.mxu0 0.0
      %2848 = vmatpush1.msra.mxu0 0.0
      %2849 = vmatprep.subr.mxu0 0.0
      %2850 = vmatpush1.msra.mxu0 0.0
      %2851 = vmatprep.subr.mxu0 0.0
      %2852 = vmatpush1.msra.mxu0 0.0
      %2853 = vmatprep.subr.mxu0 0.0
      %2854 = vmatpush1.msra.mxu0 0.0
      %2855 = vmatprep.subr.mxu0 0.0
      %2856 = vmatpush1.msra.mxu0 0.0
      %2857 = vmatprep.subr.mxu0 0.0
      %2858 = vmatpush1.msra.mxu0 0.0
      %2859 = vmatprep.subr.mxu0 0.0
      %2860 = vmatpush1.msra.mxu0 0.0
      %2861 = vmatprep.subr.mxu0 0.0
      %2862 = vmatpush1.msra.mxu0 0.0
      %2863 = vmatprep.subr.mxu0 0.0
      %2864 = vmatpush1.msra.mxu0 0.0
      %2865 = vmatprep.subr.mxu0 0.0
      %2866 = vmatpush1.msra.mxu0 0.0
      %2867 = vmatprep.subr.mxu0 0.0
      %2868 = vmatpush1.msra.mxu0 0.0
      %2869 = vmatprep.subr.mxu0 0.0
      %2870 = vmatpush1.msra.mxu0 0.0
      %2871 = vmatprep.subr.mxu0 0.0
      %2872 = vmatpush1.msra.mxu0 %v2808
      %2873 = vmatprep.subr.mxu0 0.0
      %2874 = vmatpush2.msra.mxu0 0.0
      %2875 = vmatprep.subr.mxu0 0.0
      %2876 = vmatpush2.msra.mxu0 0.0
      %2877 = vmatprep.subr.mxu0 0.0
      %2878 = vmatpush2.msra.mxu0 0.0
      %2879 = vmatprep.subr.mxu0 0.0
      %2880 = vmatpush2.msra.mxu0 0.0
      %2881 = vmatprep.subr.mxu0 0.0
      %2882 = vmatpush2.msra.mxu0 0.0
      %2883 = vmatprep.subr.mxu0 0.0
      %2884 = vmatpush2.msra.mxu0 0.0
      %2885 = vmatprep.subr.mxu0 0.0
      %2886 = vmatpush2.msra.mxu0 0.0
      %2887 = vmatprep.subr.mxu0 0.0
      %2888 = vmatpush2.msra.mxu0 0.0
      %2889 = vmatprep.subr.mxu0 0.0
      %2890 = vmatpush2.msra.mxu0 0.0
      %2891 = vmatprep.subr.mxu0 0.0
      %2892 = vmatpush2.msra.mxu0 0.0
      %2893 = vmatprep.subr.mxu0 0.0
      %2894 = vmatpush2.msra.mxu0 0.0
      %2895 = vmatprep.subr.mxu0 0.0
      %2896 = vmatpush2.msra.mxu0 0.0
      %2897 = vmatprep.subr.mxu0 0.0
      %2898 = vmatpush2.msra.mxu0 0.0
      %2899 = vmatprep.subr.mxu0 0.0
      %2900 = vmatpush2.msra.mxu0 0.0
      %2901 = vmatprep.subr.mxu0 0.0
      %2902 = vmatpush2.msra.mxu0 0.0
      %2903 = vmatprep.subr.mxu0 0.0
      %2904 = vmatpush2.msra.mxu0 0.0
      %2905 = vmatprep.mubr.f32.mxu0 0.0
      %2906 = vmatmul.mubr.f32.gmra.mxu0 %v2818
      %v2907 = vpop.f32.mrf.mxu0
      %v2908 = vadd.f32 0.0, %v2907
      %v2909 = vpop.f32.mrf.mxu0
      %2910 = vmatprep.mubr.f32.mxu0 0.0
      %2911 = vmatmul.mubr.f32.gmra.mxu0 %v2821
      %v2912 = vpop.f32.mrf.mxu0
      %v2913 = vadd.f32 0.0, %v2912
      %v2914 = vpop.f32.mrf.mxu0
      %2915 = vmatprep.mubr.f32.mxu0 0.0
      %2916 = vmatmul.mubr.f32.gmra.mxu0 %v2824
      %v2917 = vpop.f32.mrf.mxu0
      %v2918 = vadd.f32 0.0, %v2917
      %v2919 = vpop.f32.mrf.mxu0
      %2920 = vmatprep.mubr.f32.mxu0 0.0
      %2921 = vmatmul.mubr.f32.gmra.mxu0 %v2827
      %v2922 = vpop.f32.mrf.mxu0
      %v2923 = vadd.f32 0.0, %v2922
      %v2924 = vpop.f32.mrf.mxu0
      %2925 = vmatprep.mubr.f32.mxu0 0.0
      %2926 = vmatmul.mubr.f32.gmra.mxu0 %v2830
      %v2927 = vpop.f32.mrf.mxu0
      %v2928 = vadd.f32 0.0, %v2927
      %v2929 = vpop.f32.mrf.mxu0
      %2930 = vmatprep.mubr.f32.mxu0 0.0
      %2931 = vmatmul.mubr.f32.gmra.mxu0 %v2833
      %v2932 = vpop.f32.mrf.mxu0
      %v2933 = vadd.f32 0.0, %v2932
      %v2934 = vpop.f32.mrf.mxu0
      %2935 = vmatprep.mubr.f32.mxu0 0.0
      %2936 = vmatmul.mubr.f32.gmra.mxu0 %v2836
      %v2937 = vpop.f32.mrf.mxu0
      %v2938 = vadd.f32 0.0, %v2937
      %v2939 = vpop.f32.mrf.mxu0
      %2940 = vmatprep.mubr.f32.mxu0 0.0
      %2941 = vmatmul.mubr.f32.gmra.mxu0 %v2839
      %v2942 = vpop.f32.mrf.mxu0
      %v2943 = vadd.f32 0.0, %v2942
      %v2944 = vpop.f32.mrf.mxu0
      %2945 = vdwg.mxu0
      %v2946 = vadd.f32 %v2799, %v2908
      %v2947 = vadd.f32 %v2800, %v2913
      %v2948 = vadd.f32 %v2801, %v2918
      %v2949 = vadd.f32 %v2802, %v2923
      %v2950 = vadd.f32 %v2803, %v2928
      %v2951 = vadd.f32 %v2804, %v2933
      %v2952 = vadd.f32 %v2805, %v2938
      %v2953 = vadd.f32 %v2806, %v2943
      %s2954 = scalar_lea.vmem %s3, 64
      %v2955 = vld [vmem:[%s2954] sm:$0xff]
      %v2956 = vld [vmem:[%s2661 + $0x2] sm:$0xff]
      %v2957 = vld [vmem:[%s2661 + $0x12] sm:$0xff]
      %v2958 = vld [vmem:[%s2661 + $0x22] sm:$0xff]
      %v2959 = vld [vmem:[%s2661 + $0x32] sm:$0xff]
      %v2960 = vld [vmem:[%s2661 + $0x42] sm:$0xff]
      %v2961 = vld [vmem:[%s2661 + $0x52] sm:$0xff]
      %v2962 = vld [vmem:[%s2661 + $0x62] sm:$0xff]
      %v2963 = vld [vmem:[%s2661 + $0x72] sm:$0xff]
      %v2965 = vsel %vm1758, %v2956, 0
      %v2968 = vsel %vm1758, %v2957, 0
      %v2971 = vsel %vm1758, %v2958, 0
      %v2974 = vsel %vm1758, %v2959, 0
      %v2977 = vsel %vm1758, %v2960, 0
      %v2980 = vsel %vm1758, %v2961, 0
      %v2983 = vsel %vm1758, %v2962, 0
      %v2986 = vsel %vm1758, %v2963, 0
      %2988 = vmatprep.subr.mxu0 0.0
      %2989 = vmatpush1.msra.mxu0 0.0
      %2990 = vmatprep.subr.mxu0 0.0
      %2991 = vmatpush1.msra.mxu0 0.0
      %2992 = vmatprep.subr.mxu0 0.0
      %2993 = vmatpush1.msra.mxu0 0.0
      %2994 = vmatprep.subr.mxu0 0.0
      %2995 = vmatpush1.msra.mxu0 0.0
      %2996 = vmatprep.subr.mxu0 0.0
      %2997 = vmatpush1.msra.mxu0 0.0
      %2998 = vmatprep.subr.mxu0 0.0
      %2999 = vmatpush1.msra.mxu0 0.0
      %3000 = vmatprep.subr.mxu0 0.0
      %3001 = vmatpush1.msra.mxu0 0.0
      %3002 = vmatprep.subr.mxu0 0.0
      %3003 = vmatpush1.msra.mxu0 0.0
      %3004 = vmatprep.subr.mxu0 0.0
      %3005 = vmatpush1.msra.mxu0 0.0
      %3006 = vmatprep.subr.mxu0 0.0
      %3007 = vmatpush1.msra.mxu0 0.0
      %3008 = vmatprep.subr.mxu0 0.0
      %3009 = vmatpush1.msra.mxu0 0.0
      %3010 = vmatprep.subr.mxu0 0.0
      %3011 = vmatpush1.msra.mxu0 0.0
      %3012 = vmatprep.subr.mxu0 0.0
      %3013 = vmatpush1.msra.mxu0 0.0
      %3014 = vmatprep.subr.mxu0 0.0
      %3015 = vmatpush1.msra.mxu0 0.0
      %3016 = vmatprep.subr.mxu0 0.0
      %3017 = vmatpush1.msra.mxu0 0.0
      %3018 = vmatprep.subr.mxu0 0.0
      %3019 = vmatpush1.msra.mxu0 %v2955
      %3020 = vmatprep.subr.mxu0 0.0
      %3021 = vmatpush2.msra.mxu0 0.0
      %3022 = vmatprep.subr.mxu0 0.0
      %3023 = vmatpush2.msra.mxu0 0.0
      %3024 = vmatprep.subr.mxu0 0.0
      %3025 = vmatpush2.msra.mxu0 0.0
      %3026 = vmatprep.subr.mxu0 0.0
      %3027 = vmatpush2.msra.mxu0 0.0
      %3028 = vmatprep.subr.mxu0 0.0
      %3029 = vmatpush2.msra.mxu0 0.0
      %3030 = vmatprep.subr.mxu0 0.0
      %3031 = vmatpush2.msra.mxu0 0.0
      %3032 = vmatprep.subr.mxu0 0.0
      %3033 = vmatpush2.msra.mxu0 0.0
      %3034 = vmatprep.subr.mxu0 0.0
      %3035 = vmatpush2.msra.mxu0 0.0
      %3036 = vmatprep.subr.mxu0 0.0
      %3037 = vmatpush2.msra.mxu0 0.0
      %3038 = vmatprep.subr.mxu0 0.0
      %3039 = vmatpush2.msra.mxu0 0.0
      %3040 = vmatprep.subr.mxu0 0.0
      %3041 = vmatpush2.msra.mxu0 0.0
      %3042 = vmatprep.subr.mxu0 0.0
      %3043 = vmatpush2.msra.mxu0 0.0
      %3044 = vmatprep.subr.mxu0 0.0
      %3045 = vmatpush2.msra.mxu0 0.0
      %3046 = vmatprep.subr.mxu0 0.0
      %3047 = vmatpush2.msra.mxu0 0.0
      %3048 = vmatprep.subr.mxu0 0.0
      %3049 = vmatpush2.msra.mxu0 0.0
      %3050 = vmatprep.subr.mxu0 0.0
      %3051 = vmatpush2.msra.mxu0 0.0
      %3052 = vmatprep.mubr.f32.mxu0 0.0
      %3053 = vmatmul.mubr.f32.gmra.mxu0 %v2965
      %v3054 = vpop.f32.mrf.mxu0
      %v3055 = vadd.f32 0.0, %v3054
      %v3056 = vpop.f32.mrf.mxu0
      %3057 = vmatprep.mubr.f32.mxu0 0.0
      %3058 = vmatmul.mubr.f32.gmra.mxu0 %v2968
      %v3059 = vpop.f32.mrf.mxu0
      %v3060 = vadd.f32 0.0, %v3059
      %v3061 = vpop.f32.mrf.mxu0
      %3062 = vmatprep.mubr.f32.mxu0 0.0
      %3063 = vmatmul.mubr.f32.gmra.mxu0 %v2971
      %v3064 = vpop.f32.mrf.mxu0
      %v3065 = vadd.f32 0.0, %v3064
      %v3066 = vpop.f32.mrf.mxu0
      %3067 = vmatprep.mubr.f32.mxu0 0.0
      %3068 = vmatmul.mubr.f32.gmra.mxu0 %v2974
      %v3069 = vpop.f32.mrf.mxu0
      %v3070 = vadd.f32 0.0, %v3069
      %v3071 = vpop.f32.mrf.mxu0
      %3072 = vmatprep.mubr.f32.mxu0 0.0
      %3073 = vmatmul.mubr.f32.gmra.mxu0 %v2977
      %v3074 = vpop.f32.mrf.mxu0
      %v3075 = vadd.f32 0.0, %v3074
      %v3076 = vpop.f32.mrf.mxu0
      %3077 = vmatprep.mubr.f32.mxu0 0.0
      %3078 = vmatmul.mubr.f32.gmra.mxu0 %v2980
      %v3079 = vpop.f32.mrf.mxu0
      %v3080 = vadd.f32 0.0, %v3079
      %v3081 = vpop.f32.mrf.mxu0
      %3082 = vmatprep.mubr.f32.mxu0 0.0
      %3083 = vmatmul.mubr.f32.gmra.mxu0 %v2983
      %v3084 = vpop.f32.mrf.mxu0
      %v3085 = vadd.f32 0.0, %v3084
      %v3086 = vpop.f32.mrf.mxu0
      %3087 = vmatprep.mubr.f32.mxu0 0.0
      %3088 = vmatmul.mubr.f32.gmra.mxu0 %v2986
      %v3089 = vpop.f32.mrf.mxu0
      %v3090 = vadd.f32 0.0, %v3089
      %v3091 = vpop.f32.mrf.mxu0
      %3092 = vdwg.mxu0
      %v3093 = vadd.f32 %v2946, %v3055
      %v3094 = vadd.f32 %v2947, %v3060
      %v3095 = vadd.f32 %v2948, %v3065
      %v3096 = vadd.f32 %v2949, %v3070
      %v3097 = vadd.f32 %v2950, %v3075
      %v3098 = vadd.f32 %v2951, %v3080
      %v3099 = vadd.f32 %v2952, %v3085
      %v3100 = vadd.f32 %v2953, %v3090
      %v3101 = vld [vmem:[%s4] sm:$0x1]
      %v3103 = vlaneseq
      %v3104 = vshrl.u32 %v3103, 7
      %v3105 = vsub.s32 0, %v3104
      %v3106 = vrot.slane %v3101, %v3105
      %v3108 = vadd.f32 %v3093, %v3106
      %v3109 = vadd.f32 %v3094, %v3106
      %v3110 = vadd.f32 %v3095, %v3106
      %v3111 = vadd.f32 %v3096, %v3106
      %v3112 = vadd.f32 %v3097, %v3106
      %v3113 = vadd.f32 %v3098, %v3106
      %v3114 = vadd.f32 %v3099, %v3106
      %v3115 = vadd.f32 %v3100, %v3106
      %v3116 = vmax.f32 %v3108, 0.0
      %v3117 = vmax.f32 %v3109, 0.0
      %v3118 = vmax.f32 %v3110, 0.0
      %v3119 = vmax.f32 %v3111, 0.0
      %v3120 = vmax.f32 %v3112, 0.0
      %v3121 = vmax.f32 %v3113, 0.0
      %v3122 = vmax.f32 %v3114, 0.0
      %v3123 = vmax.f32 %v3115, 0.0
      %v3124 = vadd.f32 %v3116, %v1720
      %v3125 = vadd.f32 %v3117, %v1725
      %v3126 = vadd.f32 %v3118, %v1730
      %v3127 = vadd.f32 %v3119, %v1735
      %v3128 = vadd.f32 %v3120, %v1740
      %v3129 = vadd.f32 %v3121, %v1745
      %v3130 = vadd.f32 %v3122, %v1750
      %v3131 = vadd.f32 %v3123, %v1755
      %3132 = vst.msk [vmem:[%s278] sm:$0xff] %vm1758, %v3124
      %3133 = vst.msk [vmem:[%s278 + $0x8] sm:$0xff] %vm1758, %v3125
      %3134 = vst.msk [vmem:[%s278 + $0x10] sm:$0xff] %vm1758, %v3126
      %3135 = vst.msk [vmem:[%s278 + $0x18] sm:$0xff] %vm1758, %v3127
      %3136 = vst.msk [vmem:[%s278 + $0x20] sm:$0xff] %vm1758, %v3128
      %3137 = vst.msk [vmem:[%s278 + $0x28] sm:$0xff] %vm1758, %v3129
      %3138 = vst.msk [vmem:[%s278 + $0x30] sm:$0xff] %vm1758, %v3130
      %3139 = vst.msk [vmem:[%s278 + $0x38] sm:$0xff] %vm1758, %v3131
      %p3140 = scmp.lt.s32.totalorder %s18, 1
      %s3141 = scalar_select %p3140, %s18, 1
      %s3142 = smul.addr %s3141, 8
      %s3143 = smul.addr %s3142, 8
      %s3144 = scalar_lea.vmem %s7, %s3143
      // Predicated region
      $region49: #{tpu_custom_call.1} parent=47 // pred_check
        %p3145 = pneg %p188
      $region50: #{tpu_custom_call.1} parent=47 // pred_check_branch
        %3147 = sbr.rel (%p3145) target = $region52
      $region51: #{tpu_custom_call.1} parent=47 // pred_region
        _
      $region52: #{tpu_custom_call.1} parent=47 // pred_fallthru
        _
    $region48: #{tpu_custom_call.1} parent=5 // pred_fallthru
      _
    %p3148 = scmp.le.s32.totalorder 2, %s13
    // Predicated region
    $region53: #{tpu_custom_call.1} parent=5 // pred_check
      %p3149 = pneg %p3148
    $region54: #{tpu_custom_call.1} parent=5 // pred_check_branch
      %3151 = sbr.rel (%p3149) target = $region56
    $region55: #{tpu_custom_call.1} parent=5 // pred_region
      %s3152 = ssub.s32 %s13, 2
      // Predicated region
      $region57: #{tpu_custom_call.1} parent=55 // pred_check
        %p3153 = pneg %p194
      $region58: #{tpu_custom_call.1} parent=55 // pred_check_branch
        %3155 = sbr.rel (%p3153) target = $region60
      $region59: #{tpu_custom_call.1} parent=55 // pred_region
        %p3156 = scmp.lt.s32.totalorder %s19, 1
        %s3157 = scalar_select %p3156, %s19, 1
        %s3158 = smul.addr %s3157, 8
        %s3159 = smul.addr %s3158, 8
        %s3160 = scalar_lea.vmem %s7, %s3159
      $region60: #{tpu_custom_call.1} parent=55 // pred_fallthru
        _
    $region56: #{tpu_custom_call.1} parent=5 // pred_fallthru
      _
  $region6: #{tpu_custom_call.1} parent=0 // loop_footer
    %s17 = sadd.s32 1, %s13
  $region7: #{tpu_custom_call.1} parent=0 // loop_footer_branch
    %12 = sbr.rel target = $region3
  $region8: #{tpu_custom_call.1} parent=0 // loop_exit
    _

</llo_original>
